<compile_context>
chip_gen: v7x
topology: tpu7x:2x2x1
jax: 0.10.0
libtpu: 0.0.40
codegen_flags: <defaults>
</compile_context>

<pallas_src>
import math

import numpy as np
import jax
import jax.numpy as jnp
from jax.experimental import pallas as pl
from jax.experimental.pallas import tpu as pltpu

# ----------------------------- static config -----------------------------
B, T = 2, 8                 # batch, trajectory length
HIDDEN = 32                 # n_embd
POV_DIM = 16                # pov feature dim
ACT_DIM = 4                 # action dim
N_LAYER = 2
N_HEAD = 4
HEAD_DIM = HIDDEN // N_HEAD
N_INNER = 4 * HIDDEN
MAX_EP_LEN = 100
N_POSITIONS = 64
S = 3 * T                   # tokens per trajectory (R, P, A per timestep)
BS = B * S                  # batch folded into the sequence
BT = B * T
NKV = N_HEAD * BS           # head-expanded key axis
LN_EPS = 1e-5
NEG_INF = -1e9
OUT_W = 128                 # lane-dense packed output width

# feature columns of the activation slab: [one-hot type(3) | rtg(1) | pov | act | temb]
F = 3 + 1 + POV_DIM + ACT_DIM + HIDDEN          # 56

# ------------------- packed parameter slab row layout (static) -------------------
O_WCAT = 0                                      # (F, H)   fused embedding weight
O_WPE = O_WCAT + F                              # (BS, H)  grouped + batch-tiled GPT2 wpe
O_HMASK = O_WPE + BS                            # (NKV, H) per-head block-diag selector
O_LAYER = O_HMASK + NKV                         # per-layer blocks
LW_QKV, LW_FC, LW_PROJ, LW_FC2 = 0, HIDDEN, 2 * HIDDEN, 3 * HIDDEN
LV = 3 * HIDDEN + N_INNER                       # vector rows inside a layer block
LBLK = LV + 8                                   # rows per layer block (232)
O_WA = O_LAYER + N_LAYER * LBLK                 # (H, 128) identity + predict_return, in out lanes
O_WB = O_WA + HIDDEN                            # (H, 128) predict_action, in out lanes
O_MISC = O_WB + HIDDEN                          # eln_g, eln_b, lnf_g, lnf_b, b_a, b_b
PK_ROWS = O_MISC + 8                            # 832

# ------------------- trace-time constants (numpy) -------------------
def _static_bias():
    # grouped position p = j*T + t  <->  original interleaved position o = 3t + j
    o = np.empty((S,), np.int64)
    for j in range(3):
        for t in range(T):
            o[j * T + t] = 3 * t + j
    o_full = np.tile(o, B)
    b_full = np.repeat(np.arange(B), S)
    allowed = (b_full[:, None] == b_full[None, :]) & (o_full[None, :] <= o_full[:, None])
    return np.where(allowed, 0.0, NEG_INF).astype(np.float32)       # (BS, BS)


_STATIC_BIAS = _static_bias()

_HEAD_MASK = np.zeros((NKV, HIDDEN), np.float32)
for _h in range(N_HEAD):
    _HEAD_MASK[_h * BS:(_h + 1) * BS, _h * HEAD_DIM:(_h + 1) * HEAD_DIM] = 1.0


# ----------------------------- in-kernel helpers -----------------------------
def _ln(x, g, b):
    mu = jnp.mean(x, axis=-1, keepdims=True)
    var = jnp.mean((x - mu) ** 2, axis=-1, keepdims=True)
    return (x - mu) * jax.lax.rsqrt(var + LN_EPS) * g + b


def _gelu_new(x):
    return 0.5 * x * (1.0 + jnp.tanh(math.sqrt(2.0 / math.pi) * (x + 0.044715 * x ** 3)))


# ----------------------------- single fused kernel -----------------------------
def _dt_kernel(x_ref, bias_ref, pk_ref, out_ref):
    f32 = jnp.float32
    scale = 1.0 / math.sqrt(HEAD_DIM)

    # static slices from the packed parameter slab
    w_cat = pk_ref[O_WCAT:O_WCAT + F, 0:HIDDEN]
    wpe = pk_ref[O_WPE:O_WPE + BS, 0:HIDDEN]
    hmask = pk_ref[O_HMASK:O_HMASK + NKV, 0:HIDDEN]
    eln_g = pk_ref[O_MISC + 0:O_MISC + 1, 0:HIDDEN]
    eln_b = pk_ref[O_MISC + 1:O_MISC + 2, 0:HIDDEN]
    lnf_g = pk_ref[O_MISC + 2:O_MISC + 3, 0:HIDDEN]
    lnf_b = pk_ref[O_MISC + 3:O_MISC + 4, 0:HIDDEN]

    # fused token embedding: one MXU push = emb + per-type bias + time embedding (identity block)
    stacked = jnp.dot(x_ref[...], w_cat, preferred_element_type=f32)        # (BS, H)
    h = _ln(stacked, eln_g, eln_b) + wpe

    bias = bias_ref[...]                                                    # (BS, NKV)

    for l in range(N_LAYER):
        base = O_LAYER + l * LBLK
        w_qkv = pk_ref[base + LW_QKV:base + LW_QKV + HIDDEN, 0:3 * HIDDEN]
        w_fc = pk_ref[base + LW_FC:base + LW_FC + HIDDEN, 0:N_INNER]
        w_prj = pk_ref[base + LW_PROJ:base + LW_PROJ + HIDDEN, 0:HIDDEN]
        w_fc2 = pk_ref[base + LW_FC2:base + LW_FC2 + N_INNER, 0:HIDDEN]
        b_qkv = pk_ref[base + LV + 0:base + LV + 1, 0:3 * HIDDEN]
        b_fc = pk_ref[base + LV + 1:base + LV + 2, 0:N_INNER]
        b_prj = pk_ref[base + LV + 2:base + LV + 3, 0:HIDDEN]
        b_fc2 = pk_ref[base + LV + 3:base + LV + 4, 0:HIDDEN]
        ln1_g = pk_ref[base + LV + 4:base + LV + 5, 0:HIDDEN]
        ln1_b = pk_ref[base + LV + 5:base + LV + 6, 0:HIDDEN]
        ln2_g = pk_ref[base + LV + 6:base + LV + 7, 0:HIDDEN]
        ln2_b = pk_ref[base + LV + 7:base + LV + 8, 0:HIDDEN]

        # ---- attention: all heads in one lane-dense slab ----
        a = _ln(h, ln1_g, ln1_b)
        qkv = jnp.dot(a, w_qkv, preferred_element_type=f32) + b_qkv         # (BS, 3H)
        q = qkv[:, 0:HIDDEN]
        k = qkv[:, HIDDEN:2 * HIDDEN]
        v = qkv[:, 2 * HIDDEN:3 * HIDDEN]
        k_bd = jnp.concatenate([k] * N_HEAD, axis=0) * hmask                # (NKV, H) block-diag K
        v_bd = jnp.concatenate([v] * N_HEAD, axis=0) * hmask                # (NKV, H) block-diag V

        s = jnp.einsum('qd,kd->qk', q, k_bd,
                       preferred_element_type=f32) * scale + bias           # (BS, NKV)
        e = jnp.exp(s - jnp.max(s, axis=-1, keepdims=True))
        denom = jnp.dot(e, hmask, preferred_element_type=f32)               # per-head sums, head-broadcast
        ctx = jnp.dot(e, v_bd, preferred_element_type=f32) * pl.reciprocal(denom, approx=True)
        h = h + jnp.dot(ctx, w_prj, preferred_element_type=f32) + b_prj

        # ---- MLP ----
        m2 = _ln(h, ln2_g, ln2_b)
        fc = jnp.dot(m2, w_fc, preferred_element_type=f32) + b_fc
        h = h + jnp.dot(_gelu_new(fc), w_fc2, preferred_element_type=f32) + b_fc2

    x = _ln(h, lnf_g, lnf_b)                                                # (BS, H)

    # ---- prediction heads fused into one lane-dense (BT, 128) slab; single full store ----
    x_a = jnp.concatenate([x[b * S + 2 * T:b * S + 3 * T] for b in range(B)], axis=0)  # A tokens
    x_p = jnp.concatenate([x[b * S + T:b * S + 2 * T] for b in range(B)], axis=0)      # P tokens
    w_a = pk_ref[O_WA:O_WA + HIDDEN, :]
    w_b = pk_ref[O_WB:O_WB + HIDDEN, :]
    b_a = pk_ref[O_MISC + 4:O_MISC + 5, :]
    b_b = pk_ref[O_MISC + 5:O_MISC + 6, :]
    out_ref[...] = (jnp.dot(x_a, w_a, preferred_element_type=f32) + b_a
                    + jnp.tanh(jnp.dot(x_p, w_b, preferred_element_type=f32) + b_b))


# ----------------------------- wrapper -----------------------------
_VMEM = pl.BlockSpec(memory_space=pltpu.MemorySpace.VMEM)


def _pad128(a):
    return jnp.pad(a, ((0, 0), (0, 128 - a.shape[1])))


def _build_pk(p):
    f32 = jnp.float32
    w_cat = jnp.concatenate([p['b_ret'], p['b_pov'], p['b_act'], p['w_ret'],
                             p['w_pov'], p['w_act'], jnp.eye(HIDDEN, dtype=f32)], axis=0)  # (F, H)
    wpe_g = p['wpe'][:S].reshape(T, 3, HIDDEN).transpose(1, 0, 2).reshape(S, HIDDEN)
    wpe_g = jnp.tile(wpe_g, (B, 1))                                                        # (BS, H)
    pieces = [_pad128(w_cat), _pad128(wpe_g), _pad128(jnp.asarray(_HEAD_MASK))]
    for l in range(N_LAYER):
        pieces += [
            _pad128(p['w_qkv'][l]), _pad128(p['w_fc'][l]),
            _pad128(p['w_proj'][l]), _pad128(p['w_fc2'][l]),
            _pad128(p['b_qkv'][l:l + 1]), _pad128(p['b_fc'][l:l + 1]),
            _pad128(p['b_proj'][l:l + 1]), _pad128(p['b_fc2'][l:l + 1]),
            _pad128(p['ln1_g'][l:l + 1]), _pad128(p['ln1_b'][l:l + 1]),
            _pad128(p['ln2_g'][l:l + 1]), _pad128(p['ln2_b'][l:l + 1]),
        ]
    zc = lambda n: jnp.zeros((HIDDEN, n), f32)
    w_a = jnp.concatenate([jnp.eye(HIDDEN, dtype=f32), zc(ACT_DIM), p['w_pret'],
                           zc(OUT_W - HIDDEN - ACT_DIM - 1)], axis=1)                      # (H, 128)
    w_b = jnp.concatenate([zc(HIDDEN), p['w_pact'], zc(OUT_W - HIDDEN - ACT_DIM)], axis=1)  # (H, 128)
    b_a = jnp.concatenate([jnp.zeros((1, HIDDEN + ACT_DIM), f32), p['b_pret'],
                           jnp.zeros((1, OUT_W - HIDDEN - ACT_DIM - 1), f32)], axis=1)
    b_b = jnp.concatenate([jnp.zeros((1, HIDDEN), f32), p['b_pact'],
                           jnp.zeros((1, OUT_W - HIDDEN - ACT_DIM), f32)], axis=1)
    pieces += [w_a, w_b,
               _pad128(p['eln_g']), _pad128(p['eln_b']),
               _pad128(p['lnf_g']), _pad128(p['lnf_b']),
               b_a, b_b, jnp.zeros((2, 128), f32)]
    pk = jnp.concatenate(pieces, axis=0)
    assert pk.shape == (PK_ROWS, 128)
    return pk


@jax.jit
def forward(params, pov, actions, returns_to_go, timesteps, attention_mask):
    f32 = jnp.float32
    p = params

    # glue kept in XLA: nn.Embedding gather + layout plumbing of inputs / params.
    temb = p['embed_timestep'][timesteps]                                   # (B, T, H)
    z1 = jnp.zeros((B, T, 1), f32)
    zP = jnp.zeros((B, T, POV_DIM), f32)
    zA = jnp.zeros((B, T, ACT_DIM), f32)

    def tag(j):
        v = np.zeros((3,), np.float32)
        v[j] = 1.0
        return jnp.broadcast_to(jnp.asarray(v), (B, T, 3))

    # grouped order: row = b*S + j*T + t,  j in {0:R, 1:P, 2:A}
    r_rows = jnp.concatenate([tag(0), returns_to_go.astype(f32), zP, zA, temb], axis=-1)
    p_rows = jnp.concatenate([tag(1), z1, pov.astype(f32), zA, temb], axis=-1)
    a_rows = jnp.concatenate([tag(2), z1, zP, actions.astype(f32), temb], axis=-1)
    x_aug = jnp.stack([r_rows, p_rows, a_rows], axis=1).reshape(BS, F)

    # attention bias: static causal/block-diagonal (trace-time numpy) + key-padding fold,
    # tiled along lanes once for the head-expanded key axis.
    kmask = jnp.tile(attention_mask.astype(f32), (1, 3)).reshape(BS)
    bias = jnp.asarray(_STATIC_BIAS) + (kmask[None, :] - 1.0) * (-NEG_INF)
    bias_big = jnp.tile(bias, (1, N_HEAD))                                  # (BS, NKV)

    pk = _build_pk(p)

    out = pl.pallas_call(
        _dt_kernel,
        out_shape=jax.ShapeDtypeStruct((BT, OUT_W), f32),
        in_specs=[_VMEM, _VMEM, _VMEM],
        out_specs=_VMEM,
    )(x_aug, bias_big, pk)

    pov_preds = out[:, 0:HIDDEN].reshape(B, T, HIDDEN)
    action_preds = out[:, HIDDEN:HIDDEN + ACT_DIM].reshape(B, T, ACT_DIM)
    return_preds = out[:, HIDDEN + ACT_DIM:HIDDEN + ACT_DIM + 1].reshape(B, T, 1)
    state_preds = None                                                      # state_dim is None here
    return state_preds, pov_preds, action_preds, return_preds


# ------------------- pure-JAX reference (original interleaved semantics) -------------------
def ref_forward(p, pov, actions, returns_to_go, timesteps, attention_mask):
    temb = p['embed_timestep'][timesteps]
    pov_e = pov @ p['w_pov'] + p['b_pov'] + temb
    act_e = actions @ p['w_act'] + p['b_act'] + temb
    ret_e = returns_to_go * p['w_ret'][0] + p['b_ret'] + temb
    stacked = jnp.stack((ret_e, pov_e, act_e), axis=1).transpose(0, 2, 1, 3).reshape(B, S, HIDDEN)
    sm = jnp.stack((attention_mask,) * 3, axis=1).transpose(0, 2, 1).reshape(B, S)
    ids = jnp.arange(S)
    causal = ids[None, :] <= ids[:, None]
    bias = jnp.where(causal, 0.0, NEG_INF)[None] + (sm[:, None, :] - 1.0) * (-NEG_INF)

    h = _ln(stacked, p['eln_g'], p['eln_b']) + p['wpe'][:S][None]
    for l in range(N_LAYER):
        a = _ln(h, p['ln1_g'][l], p['ln1_b'][l])
        qkv = a @ p['w_qkv'][l] + p['b_qkv'][l]
        q, k, v = qkv[..., :HIDDEN], qkv[..., HIDDEN:2 * HIDDEN], qkv[..., 2 * HIDDEN:]
        qh = q.reshape(B, S, N_HEAD, HEAD_DIM).transpose(0, 2, 1, 3)
        kh = k.reshape(B, S, N_HEAD, HEAD_DIM).transpose(0, 2, 1, 3)
        vh = v.reshape(B, S, N_HEAD, HEAD_DIM).transpose(0, 2, 1, 3)
        sc = jnp.einsum('bnqd,bnkd->bnqk', qh, kh) / math.sqrt(HEAD_DIM) + bias[:, None]
        attn = jax.nn.softmax(sc, axis=-1)
        ctx = jnp.einsum('bnqk,bnkd->bnqd', attn, vh).transpose(0, 2, 1, 3).reshape(B, S, HIDDEN)
        h = h + ctx @ p['w_proj'][l] + p['b_proj'][l]
        m2 = _ln(h, p['ln2_g'][l], p['ln2_b'][l])
        fc = m2 @ p['w_fc'][l] + p['b_fc'][l]
        g_ = 0.5 * fc * (1.0 + jnp.tanh(math.sqrt(2.0 / math.pi) * (fc + 0.044715 * fc ** 3)))
        h = h + g_ @ p['w_fc2'][l] + p['b_fc2'][l]
    x = _ln(h, p['lnf_g'], p['lnf_b'])
    x = x.reshape(B, T, 3, HIDDEN).transpose(0, 2, 1, 3)
    return_preds = x[:, 2] @ p['w_pret'] + p['b_pret']
    action_preds = jnp.tanh(x[:, 1] @ p['w_pact'] + p['b_pact'])
    return None, x[:, 2], action_preds, return_preds


# ----------------------------- params -----------------------------
def init_params(key):
    ks = list(jax.random.split(key, 24))

    def nrm(k, shape, scale=0.02):
        return scale * jax.random.normal(k, shape, jnp.float32)

    p = {
        'w_pov': nrm(ks[0], (POV_DIM, HIDDEN)), 'b_pov': nrm(ks[1], (1, HIDDEN)),
        'w_act': nrm(ks[2], (ACT_DIM, HIDDEN)), 'b_act': nrm(ks[3], (1, HIDDEN)),
        'w_ret': nrm(ks[4], (1, HIDDEN)), 'b_ret': nrm(ks[5], (1, HIDDEN)),
        'embed_timestep': nrm(ks[6], (MAX_EP_LEN, HIDDEN)),
        'wpe': nrm(ks[7], (N_POSITIONS, HIDDEN)),
        'eln_g': jnp.ones((1, HIDDEN), jnp.float32), 'eln_b': jnp.zeros((1, HIDDEN), jnp.float32),
        'ln1_g': jnp.ones((N_LAYER, HIDDEN), jnp.float32),
        'ln1_b': jnp.zeros((N_LAYER, HIDDEN), jnp.float32),
        'w_qkv': nrm(ks[8], (N_LAYER, HIDDEN, 3 * HIDDEN)),
        'b_qkv': nrm(ks[9], (N_LAYER, 3 * HIDDEN)),
        'w_proj': nrm(ks[10], (N_LAYER, HIDDEN, HIDDEN)),
        'b_proj': nrm(ks[11], (N_LAYER, HIDDEN)),
        'ln2_g': jnp.ones((N_LAYER, HIDDEN), jnp.float32),
        'ln2_b': jnp.zeros((N_LAYER, HIDDEN), jnp.float32),
        'w_fc': nrm(ks[12], (N_LAYER, HIDDEN, N_INNER)),
        'b_fc': nrm(ks[13], (N_LAYER, N_INNER)),
        'w_fc2': nrm(ks[14], (N_LAYER, N_INNER, HIDDEN)),
        'b_fc2': nrm(ks[15], (N_LAYER, HIDDEN)),
        'lnf_g': jnp.ones((1, HIDDEN), jnp.float32), 'lnf_b': jnp.zeros((1, HIDDEN), jnp.float32),
        'w_pret': nrm(ks[16], (HIDDEN, 1)), 'b_pret': nrm(ks[17], (1, 1)),
        'w_pact': nrm(ks[18], (HIDDEN, ACT_DIM)), 'b_pact': nrm(ks[19], (1, ACT_DIM)),
    }
    return p


# ----------------------------- main -----------------------------
if __name__ == "__main__":
    key = jax.random.PRNGKey(0)
    k_param, k_pov, k_act, k_rtg, k_t = jax.random.split(key, 5)
    params = init_params(k_param)

    pov = jax.random.normal(k_pov, (B, T, POV_DIM), jnp.float32)
    actions = jax.random.normal(k_act, (B, T, ACT_DIM), jnp.float32)
    returns_to_go = jax.random.normal(k_rtg, (B, T, 1), jnp.float32)
    timesteps = jax.random.randint(k_t, (B, T), 0, MAX_EP_LEN).astype(jnp.int32)
    attention_mask = jnp.ones((B, T), jnp.float32)

    state_preds, pov_preds, action_preds, return_preds = forward(
        params, pov, actions, returns_to_go, timesteps, attention_mask)
    jax.block_until_ready((pov_preds, action_preds, return_preds))

    # verify against a pure-JAX reference of the original module semantics
    _, r_pov, r_act, r_ret = ref_forward(
        params, pov, actions, returns_to_go, timesteps, attention_mask)
    for name, a, b in (("pov_preds", pov_preds, r_pov),
                       ("action_preds", action_preds, r_act),
                       ("return_preds", return_preds, r_ret)):
        err = float(jnp.max(jnp.abs(a - b)))
        assert err < 1e-3, f"{name} mismatch: max abs err {err}"

    assert state_preds is None
    assert pov_preds.shape == (B, T, HIDDEN)
    assert action_preds.shape == (B, T, ACT_DIM)
    assert return_preds.shape == (B, T, 1)
    print("KERNEL_OK")
</pallas_src>

<mosaic_0001>
module attributes {stable_mosaic.version = 11 : i64} {
  func.func @_dt_kernel(%arg0: memref<48x56xf32, #tpu.memory_space<vmem>>, %arg1: memref<48x192xf32, #tpu.memory_space<vmem>>, %arg2: memref<832x128xf32, #tpu.memory_space<vmem>>, %arg3: memref<16x128xf32, #tpu.memory_space<vmem>>) attributes {dimension_semantics = [], scalar_prefetch = 0 : i64, scratch_operands = 0 : i64, tpu.core_type = #tpu.core_type<tc>} {
    %c0 = arith.constant 0 : index
    %c0_0 = arith.constant 0 : index
    %0 = vector.load %arg2[%c0, %c0_0] : memref<832x128xf32, #tpu.memory_space<vmem>>, vector<56x32xf32>
    %c56 = arith.constant 56 : index
    %c0_1 = arith.constant 0 : index
    %1 = vector.load %arg2[%c56, %c0_1] : memref<832x128xf32, #tpu.memory_space<vmem>>, vector<48x32xf32>
    %c104 = arith.constant 104 : index
    %c0_2 = arith.constant 0 : index
    %2 = vector.load %arg2[%c104, %c0_2] : memref<832x128xf32, #tpu.memory_space<vmem>>, vector<192x32xf32>
    %c824 = arith.constant 824 : index
    %c0_3 = arith.constant 0 : index
    %3 = vector.load %arg2[%c824, %c0_3] : memref<832x128xf32, #tpu.memory_space<vmem>>, vector<1x32xf32>
    %c825 = arith.constant 825 : index
    %c0_4 = arith.constant 0 : index
    %4 = vector.load %arg2[%c825, %c0_4] : memref<832x128xf32, #tpu.memory_space<vmem>>, vector<1x32xf32>
    %c826 = arith.constant 826 : index
    %c0_5 = arith.constant 0 : index
    %5 = vector.load %arg2[%c826, %c0_5] : memref<832x128xf32, #tpu.memory_space<vmem>>, vector<1x32xf32>
    %c827 = arith.constant 827 : index
    %c0_6 = arith.constant 0 : index
    %6 = vector.load %arg2[%c827, %c0_6] : memref<832x128xf32, #tpu.memory_space<vmem>>, vector<1x32xf32>
    %c0_7 = arith.constant 0 : index
    %c0_8 = arith.constant 0 : index
    %7 = vector.load %arg0[%c0_7, %c0_8] : memref<48x56xf32, #tpu.memory_space<vmem>>, vector<48x56xf32>
    %cst = arith.constant dense<0.000000e+00> : vector<48x32xf32>
    %8 = tpu.matmul %7, %0, %cst {dimension_numbers = #tpu.dot_dimension_numbers<[1], [0], [0], [1], [0, 0, 1, 1], [], []>} : vector<48x56xf32>, vector<56x32xf32>, vector<48x32xf32> -> vector<48x32xf32>
    %cst_9 = arith.constant dense<0.000000e+00> : vector<48xf32>
    %9 = vector.multi_reduction <add>, %8, %cst_9 [1] : vector<48x32xf32> to vector<48xf32>
    %10 = vector.shape_cast %9 : vector<48xf32> to vector<48x1xf32>
    %cst_10 = arith.constant 3.200000e+01 : f32
    %11 = vector.broadcast %cst_10 : f32 to vector<48x1xf32>
    %12 = arith.divf %10, %11 : vector<48x1xf32>
    %13 = vector.broadcast %12 : vector<48x1xf32> to vector<48x32xf32>
    %14 = arith.subf %8, %13 : vector<48x32xf32>
    %15 = arith.mulf %14, %14 : vector<48x32xf32>
    %cst_11 = arith.constant dense<0.000000e+00> : vector<48xf32>
    %16 = vector.multi_reduction <add>, %15, %cst_11 [1] : vector<48x32xf32> to vector<48xf32>
    %17 = vector.shape_cast %16 : vector<48xf32> to vector<48x1xf32>
    %cst_12 = arith.constant 3.200000e+01 : f32
    %18 = vector.broadcast %cst_12 : f32 to vector<48x1xf32>
    %19 = arith.divf %17, %18 : vector<48x1xf32>
    %20 = vector.broadcast %12 : vector<48x1xf32> to vector<48x32xf32>
    %21 = arith.subf %8, %20 : vector<48x32xf32>
    %cst_13 = arith.constant 9.99999974E-6 : f32
    %22 = vector.broadcast %cst_13 : f32 to vector<48x1xf32>
    %23 = arith.addf %19, %22 : vector<48x1xf32>
    %24 = math.rsqrt %23 : vector<48x1xf32>
    %25 = vector.broadcast %24 : vector<48x1xf32> to vector<48x32xf32>
    %26 = arith.mulf %21, %25 : vector<48x32xf32>
    %27 = vector.broadcast %3 : vector<1x32xf32> to vector<48x32xf32>
    %28 = arith.mulf %26, %27 : vector<48x32xf32>
    %29 = vector.broadcast %4 : vector<1x32xf32> to vector<48x32xf32>
    %30 = arith.addf %28, %29 : vector<48x32xf32>
    %31 = arith.addf %30, %1 : vector<48x32xf32>
    %c0_14 = arith.constant 0 : index
    %c0_15 = arith.constant 0 : index
    %32 = vector.load %arg1[%c0_14, %c0_15] : memref<48x192xf32, #tpu.memory_space<vmem>>, vector<48x192xf32>
    %c296 = arith.constant 296 : index
    %c0_16 = arith.constant 0 : index
    %33 = vector.load %arg2[%c296, %c0_16] : memref<832x128xf32, #tpu.memory_space<vmem>>, vector<32x96xf32>
    %c328 = arith.constant 328 : index
    %c0_17 = arith.constant 0 : index
    %34 = vector.load %arg2[%c328, %c0_17] : memref<832x128xf32, #tpu.memory_space<vmem>>, vector<32x128xf32>
    %c360 = arith.constant 360 : index
    %c0_18 = arith.constant 0 : index
    %35 = vector.load %arg2[%c360, %c0_18] : memref<832x128xf32, #tpu.memory_space<vmem>>, vector<32x32xf32>
    %c392 = arith.constant 392 : index
    %c0_19 = arith.constant 0 : index
    %36 = vector.load %arg2[%c392, %c0_19] : memref<832x128xf32, #tpu.memory_space<vmem>>, vector<128x32xf32>
    %c520 = arith.constant 520 : index
    %c0_20 = arith.constant 0 : index
    %37 = vector.load %arg2[%c520, %c0_20] : memref<832x128xf32, #tpu.memory_space<vmem>>, vector<1x96xf32>
    %c521 = arith.constant 521 : index
    %c0_21 = arith.constant 0 : index
    %38 = vector.load %arg2[%c521, %c0_21] : memref<832x128xf32, #tpu.memory_space<vmem>>, vector<1x128xf32>
    %c522 = arith.constant 522 : index
    %c0_22 = arith.constant 0 : index
    %39 = vector.load %arg2[%c522, %c0_22] : memref<832x128xf32, #tpu.memory_space<vmem>>, vector<1x32xf32>
    %c523 = arith.constant 523 : index
    %c0_23 = arith.constant 0 : index
    %40 = vector.load %arg2[%c523, %c0_23] : memref<832x128xf32, #tpu.memory_space<vmem>>, vector<1x32xf32>
    %c524 = arith.constant 524 : index
    %c0_24 = arith.constant 0 : index
    %41 = vector.load %arg2[%c524, %c0_24] : memref<832x128xf32, #tpu.memory_space<vmem>>, vector<1x32xf32>
    %c525 = arith.constant 525 : index
    %c0_25 = arith.constant 0 : index
    %42 = vector.load %arg2[%c525, %c0_25] : memref<832x128xf32, #tpu.memory_space<vmem>>, vector<1x32xf32>
    %c526 = arith.constant 526 : index
    %c0_26 = arith.constant 0 : index
    %43 = vector.load %arg2[%c526, %c0_26] : memref<832x128xf32, #tpu.memory_space<vmem>>, vector<1x32xf32>
    %c527 = arith.constant 527 : index
    %c0_27 = arith.constant 0 : index
    %44 = vector.load %arg2[%c527, %c0_27] : memref<832x128xf32, #tpu.memory_space<vmem>>, vector<1x32xf32>
    %cst_28 = arith.constant dense<0.000000e+00> : vector<48xf32>
    %45 = vector.multi_reduction <add>, %31, %cst_28 [1] : vector<48x32xf32> to vector<48xf32>
    %46 = vector.shape_cast %45 : vector<48xf32> to vector<48x1xf32>
    %cst_29 = arith.constant 3.200000e+01 : f32
    %47 = vector.broadcast %cst_29 : f32 to vector<48x1xf32>
    %48 = arith.divf %46, %47 : vector<48x1xf32>
    %49 = vector.broadcast %48 : vector<48x1xf32> to vector<48x32xf32>
    %50 = arith.subf %31, %49 : vector<48x32xf32>
    %51 = arith.mulf %50, %50 : vector<48x32xf32>
    %cst_30 = arith.constant dense<0.000000e+00> : vector<48xf32>
    %52 = vector.multi_reduction <add>, %51, %cst_30 [1] : vector<48x32xf32> to vector<48xf32>
    %53 = vector.shape_cast %52 : vector<48xf32> to vector<48x1xf32>
    %cst_31 = arith.constant 3.200000e+01 : f32
    %54 = vector.broadcast %cst_31 : f32 to vector<48x1xf32>
    %55 = arith.divf %53, %54 : vector<48x1xf32>
    %56 = vector.broadcast %48 : vector<48x1xf32> to vector<48x32xf32>
    %57 = arith.subf %31, %56 : vector<48x32xf32>
    %cst_32 = arith.constant 9.99999974E-6 : f32
    %58 = vector.broadcast %cst_32 : f32 to vector<48x1xf32>
    %59 = arith.addf %55, %58 : vector<48x1xf32>
    %60 = math.rsqrt %59 : vector<48x1xf32>
    %61 = vector.broadcast %60 : vector<48x1xf32> to vector<48x32xf32>
    %62 = arith.mulf %57, %61 : vector<48x32xf32>
    %63 = vector.broadcast %41 : vector<1x32xf32> to vector<48x32xf32>
    %64 = arith.mulf %62, %63 : vector<48x32xf32>
    %65 = vector.broadcast %42 : vector<1x32xf32> to vector<48x32xf32>
    %66 = arith.addf %64, %65 : vector<48x32xf32>
    %cst_33 = arith.constant dense<0.000000e+00> : vector<48x96xf32>
    %67 = tpu.matmul %66, %33, %cst_33 {dimension_numbers = #tpu.dot_dimension_numbers<[1], [0], [0], [1], [0, 0, 1, 1], [], []>} : vector<48x32xf32>, vector<32x96xf32>, vector<48x96xf32> -> vector<48x96xf32>
    %68 = vector.broadcast %37 : vector<1x96xf32> to vector<48x96xf32>
    %69 = arith.addf %67, %68 : vector<48x96xf32>
    %70 = vector.extract_strided_slice %69 {offsets = [0, 0], sizes = [48, 32], strides = [1, 1]} : vector<48x96xf32> to vector<48x32xf32>
    %71 = vector.extract_strided_slice %69 {offsets = [0, 32], sizes = [48, 32], strides = [1, 1]} : vector<48x96xf32> to vector<48x32xf32>
    %72 = vector.extract_strided_slice %69 {offsets = [0, 64], sizes = [48, 32], strides = [1, 1]} : vector<48x96xf32> to vector<48x32xf32>
    %73 = tpu.concatenate %71, %71, %71, %71 in 0 : vector<48x32xf32>, vector<48x32xf32>, vector<48x32xf32>, vector<48x32xf32> -> vector<192x32xf32>
    %74 = arith.mulf %73, %2 : vector<192x32xf32>
    %75 = tpu.concatenate %72, %72, %72, %72 in 0 : vector<48x32xf32>, vector<48x32xf32>, vector<48x32xf32>, vector<48x32xf32> -> vector<192x32xf32>
    %76 = arith.mulf %75, %2 : vector<192x32xf32>
    "tpu.trace_start"() <{level = 10 : i32, message = "qd,kd->qk"}> : () -> ()
    %cst_34 = arith.constant dense<0.000000e+00> : vector<48x192xf32>
    %77 = tpu.matmul %70, %74, %cst_34 {dimension_numbers = #tpu.dot_dimension_numbers<[1], [1], [0], [0], [0, 0, 1, 0], [], []>} : vector<48x32xf32>, vector<192x32xf32>, vector<48x192xf32> -> vector<48x192xf32>
    "tpu.trace_stop"() : () -> ()
    %cst_35 = arith.constant 0.353553385 : f32
    %78 = vector.broadcast %cst_35 : f32 to vector<48x192xf32>
    %79 = arith.mulf %77, %78 : vector<48x192xf32>
    %80 = arith.addf %79, %32 : vector<48x192xf32>
    %cst_36 = arith.constant dense<0xFF800000> : vector<48xf32>
    %81 = vector.multi_reduction <maximumf>, %80, %cst_36 [1] : vector<48x192xf32> to vector<48xf32>
    %82 = vector.shape_cast %81 : vector<48xf32> to vector<48x1xf32>
    %83 = vector.broadcast %82 : vector<48x1xf32> to vector<48x192xf32>
    %84 = arith.subf %80, %83 : vector<48x192xf32>
    %85 = math.exp %84 : vector<48x192xf32>
    %cst_37 = arith.constant dense<0.000000e+00> : vector<48x32xf32>
    %86 = tpu.matmul %85, %2, %cst_37 {dimension_numbers = #tpu.dot_dimension_numbers<[1], [0], [0], [1], [0, 0, 1, 1], [], []>} : vector<48x192xf32>, vector<192x32xf32>, vector<48x32xf32> -> vector<48x32xf32>
    %cst_38 = arith.constant dense<0.000000e+00> : vector<48x32xf32>
    %87 = tpu.matmul %85, %76, %cst_38 {dimension_numbers = #tpu.dot_dimension_numbers<[1], [0], [0], [1], [0, 0, 1, 1], [], []>} : vector<48x192xf32>, vector<192x32xf32>, vector<48x32xf32> -> vector<48x32xf32>
    %88 = tpu.reciprocal %86 {approx = true} : vector<48x32xf32> -> vector<48x32xf32>
    %89 = arith.mulf %87, %88 : vector<48x32xf32>
    %cst_39 = arith.constant dense<0.000000e+00> : vector<48x32xf32>
    %90 = tpu.matmul %89, %35, %cst_39 {dimension_numbers = #tpu.dot_dimension_numbers<[1], [0], [0], [1], [0, 0, 1, 1], [], []>} : vector<48x32xf32>, vector<32x32xf32>, vector<48x32xf32> -> vector<48x32xf32>
    %91 = arith.addf %31, %90 : vector<48x32xf32>
    %92 = vector.broadcast %39 : vector<1x32xf32> to vector<48x32xf32>
    %93 = arith.addf %91, %92 : vector<48x32xf32>
    %cst_40 = arith.constant dense<0.000000e+00> : vector<48xf32>
    %94 = vector.multi_reduction <add>, %93, %cst_40 [1] : vector<48x32xf32> to vector<48xf32>
    %95 = vector.shape_cast %94 : vector<48xf32> to vector<48x1xf32>
    %cst_41 = arith.constant 3.200000e+01 : f32
    %96 = vector.broadcast %cst_41 : f32 to vector<48x1xf32>
    %97 = arith.divf %95, %96 : vector<48x1xf32>
    %98 = vector.broadcast %97 : vector<48x1xf32> to vector<48x32xf32>
    %99 = arith.subf %93, %98 : vector<48x32xf32>
    %100 = arith.mulf %99, %99 : vector<48x32xf32>
    %cst_42 = arith.constant dense<0.000000e+00> : vector<48xf32>
    %101 = vector.multi_reduction <add>, %100, %cst_42 [1] : vector<48x32xf32> to vector<48xf32>
    %102 = vector.shape_cast %101 : vector<48xf32> to vector<48x1xf32>
    %cst_43 = arith.constant 3.200000e+01 : f32
    %103 = vector.broadcast %cst_43 : f32 to vector<48x1xf32>
    %104 = arith.divf %102, %103 : vector<48x1xf32>
    %105 = vector.broadcast %97 : vector<48x1xf32> to vector<48x32xf32>
    %106 = arith.subf %93, %105 : vector<48x32xf32>
    %cst_44 = arith.constant 9.99999974E-6 : f32
    %107 = vector.broadcast %cst_44 : f32 to vector<48x1xf32>
    %108 = arith.addf %104, %107 : vector<48x1xf32>
    %109 = math.rsqrt %108 : vector<48x1xf32>
    %110 = vector.broadcast %109 : vector<48x1xf32> to vector<48x32xf32>
    %111 = arith.mulf %106, %110 : vector<48x32xf32>
    %112 = vector.broadcast %43 : vector<1x32xf32> to vector<48x32xf32>
    %113 = arith.mulf %111, %112 : vector<48x32xf32>
    %114 = vector.broadcast %44 : vector<1x32xf32> to vector<48x32xf32>
    %115 = arith.addf %113, %114 : vector<48x32xf32>
    %cst_45 = arith.constant dense<0.000000e+00> : vector<48x128xf32>
    %116 = tpu.matmul %115, %34, %cst_45 {dimension_numbers = #tpu.dot_dimension_numbers<[1], [0], [0], [1], [0, 0, 1, 1], [], []>} : vector<48x32xf32>, vector<32x128xf32>, vector<48x128xf32> -> vector<48x128xf32>
    %117 = vector.broadcast %38 : vector<1x128xf32> to vector<48x128xf32>
    %118 = arith.addf %116, %117 : vector<48x128xf32>
    %cst_46 = arith.constant 5.000000e-01 : f32
    %119 = vector.broadcast %cst_46 : f32 to vector<48x128xf32>
    %120 = arith.mulf %119, %118 : vector<48x128xf32>
    %121 = arith.mulf %118, %118 : vector<48x128xf32>
    %122 = arith.mulf %118, %121 : vector<48x128xf32>
    %cst_47 = arith.constant 4.471500e-02 : f32
    %123 = vector.broadcast %cst_47 : f32 to vector<48x128xf32>
    %124 = arith.mulf %123, %122 : vector<48x128xf32>
    %125 = arith.addf %118, %124 : vector<48x128xf32>
    %cst_48 = arith.constant 0.797884583 : f32
    %126 = vector.broadcast %cst_48 : f32 to vector<48x128xf32>
    %127 = arith.mulf %126, %125 : vector<48x128xf32>
    %128 = math.tanh %127 : vector<48x128xf32>
    %cst_49 = arith.constant 1.000000e+00 : f32
    %129 = vector.broadcast %cst_49 : f32 to vector<48x128xf32>
    %130 = arith.addf %129, %128 : vector<48x128xf32>
    %131 = arith.mulf %120, %130 : vector<48x128xf32>
    %cst_50 = arith.constant dense<0.000000e+00> : vector<48x32xf32>
    %132 = tpu.matmul %131, %36, %cst_50 {dimension_numbers = #tpu.dot_dimension_numbers<[1], [0], [0], [1], [0, 0, 1, 1], [], []>} : vector<48x128xf32>, vector<128x32xf32>, vector<48x32xf32> -> vector<48x32xf32>
    %133 = arith.addf %93, %132 : vector<48x32xf32>
    %134 = vector.broadcast %40 : vector<1x32xf32> to vector<48x32xf32>
    %135 = arith.addf %133, %134 : vector<48x32xf32>
    %c528 = arith.constant 528 : index
    %c0_51 = arith.constant 0 : index
    %136 = vector.load %arg2[%c528, %c0_51] : memref<832x128xf32, #tpu.memory_space<vmem>>, vector<32x96xf32>
    %c560 = arith.constant 560 : index
    %c0_52 = arith.constant 0 : index
    %137 = vector.load %arg2[%c560, %c0_52] : memref<832x128xf32, #tpu.memory_space<vmem>>, vector<32x128xf32>
    %c592 = arith.constant 592 : index
    %c0_53 = arith.constant 0 : index
    %138 = vector.load %arg2[%c592, %c0_53] : memref<832x128xf32, #tpu.memory_space<vmem>>, vector<32x32xf32>
    %c624 = arith.constant 624 : index
    %c0_54 = arith.constant 0 : index
    %139 = vector.load %arg2[%c624, %c0_54] : memref<832x128xf32, #tpu.memory_space<vmem>>, vector<128x32xf32>
    %c752 = arith.constant 752 : index
    %c0_55 = arith.constant 0 : index
    %140 = vector.load %arg2[%c752, %c0_55] : memref<832x128xf32, #tpu.memory_space<vmem>>, vector<1x96xf32>
    %c753 = arith.constant 753 : index
    %c0_56 = arith.constant 0 : index
    %141 = vector.load %arg2[%c753, %c0_56] : memref<832x128xf32, #tpu.memory_space<vmem>>, vector<1x128xf32>
    %c754 = arith.constant 754 : index
    %c0_57 = arith.constant 0 : index
    %142 = vector.load %arg2[%c754, %c0_57] : memref<832x128xf32, #tpu.memory_space<vmem>>, vector<1x32xf32>
    %c755 = arith.constant 755 : index
    %c0_58 = arith.constant 0 : index
    %143 = vector.load %arg2[%c755, %c0_58] : memref<832x128xf32, #tpu.memory_space<vmem>>, vector<1x32xf32>
    %c756 = arith.constant 756 : index
    %c0_59 = arith.constant 0 : index
    %144 = vector.load %arg2[%c756, %c0_59] : memref<832x128xf32, #tpu.memory_space<vmem>>, vector<1x32xf32>
    %c757 = arith.constant 757 : index
    %c0_60 = arith.constant 0 : index
    %145 = vector.load %arg2[%c757, %c0_60] : memref<832x128xf32, #tpu.memory_space<vmem>>, vector<1x32xf32>
    %c758 = arith.constant 758 : index
    %c0_61 = arith.constant 0 : index
    %146 = vector.load %arg2[%c758, %c0_61] : memref<832x128xf32, #tpu.memory_space<vmem>>, vector<1x32xf32>
    %c759 = arith.constant 759 : index
    %c0_62 = arith.constant 0 : index
    %147 = vector.load %arg2[%c759, %c0_62] : memref<832x128xf32, #tpu.memory_space<vmem>>, vector<1x32xf32>
    %cst_63 = arith.constant dense<0.000000e+00> : vector<48xf32>
    %148 = vector.multi_reduction <add>, %135, %cst_63 [1] : vector<48x32xf32> to vector<48xf32>
    %149 = vector.shape_cast %148 : vector<48xf32> to vector<48x1xf32>
    %cst_64 = arith.constant 3.200000e+01 : f32
    %150 = vector.broadcast %cst_64 : f32 to vector<48x1xf32>
    %151 = arith.divf %149, %150 : vector<48x1xf32>
    %152 = vector.broadcast %151 : vector<48x1xf32> to vector<48x32xf32>
    %153 = arith.subf %135, %152 : vector<48x32xf32>
    %154 = arith.mulf %153, %153 : vector<48x32xf32>
    %cst_65 = arith.constant dense<0.000000e+00> : vector<48xf32>
    %155 = vector.multi_reduction <add>, %154, %cst_65 [1] : vector<48x32xf32> to vector<48xf32>
    %156 = vector.shape_cast %155 : vector<48xf32> to vector<48x1xf32>
    %cst_66 = arith.constant 3.200000e+01 : f32
    %157 = vector.broadcast %cst_66 : f32 to vector<48x1xf32>
    %158 = arith.divf %156, %157 : vector<48x1xf32>
    %159 = vector.broadcast %151 : vector<48x1xf32> to vector<48x32xf32>
    %160 = arith.subf %135, %159 : vector<48x32xf32>
    %cst_67 = arith.constant 9.99999974E-6 : f32
    %161 = vector.broadcast %cst_67 : f32 to vector<48x1xf32>
    %162 = arith.addf %158, %161 : vector<48x1xf32>
    %163 = math.rsqrt %162 : vector<48x1xf32>
    %164 = vector.broadcast %163 : vector<48x1xf32> to vector<48x32xf32>
    %165 = arith.mulf %160, %164 : vector<48x32xf32>
    %166 = vector.broadcast %144 : vector<1x32xf32> to vector<48x32xf32>
    %167 = arith.mulf %165, %166 : vector<48x32xf32>
    %168 = vector.broadcast %145 : vector<1x32xf32> to vector<48x32xf32>
    %169 = arith.addf %167, %168 : vector<48x32xf32>
    %cst_68 = arith.constant dense<0.000000e+00> : vector<48x96xf32>
    %170 = tpu.matmul %169, %136, %cst_68 {dimension_numbers = #tpu.dot_dimension_numbers<[1], [0], [0], [1], [0, 0, 1, 1], [], []>} : vector<48x32xf32>, vector<32x96xf32>, vector<48x96xf32> -> vector<48x96xf32>
    %171 = vector.broadcast %140 : vector<1x96xf32> to vector<48x96xf32>
    %172 = arith.addf %170, %171 : vector<48x96xf32>
    %173 = vector.extract_strided_slice %172 {offsets = [0, 0], sizes = [48, 32], strides = [1, 1]} : vector<48x96xf32> to vector<48x32xf32>
    %174 = vector.extract_strided_slice %172 {offsets = [0, 32], sizes = [48, 32], strides = [1, 1]} : vector<48x96xf32> to vector<48x32xf32>
    %175 = vector.extract_strided_slice %172 {offsets = [0, 64], sizes = [48, 32], strides = [1, 1]} : vector<48x96xf32> to vector<48x32xf32>
    %176 = tpu.concatenate %174, %174, %174, %174 in 0 : vector<48x32xf32>, vector<48x32xf32>, vector<48x32xf32>, vector<48x32xf32> -> vector<192x32xf32>
    %177 = arith.mulf %176, %2 : vector<192x32xf32>
    %178 = tpu.concatenate %175, %175, %175, %175 in 0 : vector<48x32xf32>, vector<48x32xf32>, vector<48x32xf32>, vector<48x32xf32> -> vector<192x32xf32>
    %179 = arith.mulf %178, %2 : vector<192x32xf32>
    "tpu.trace_start"() <{level = 10 : i32, message = "qd,kd->qk"}> : () -> ()
    %cst_69 = arith.constant dense<0.000000e+00> : vector<48x192xf32>
    %180 = tpu.matmul %173, %177, %cst_69 {dimension_numbers = #tpu.dot_dimension_numbers<[1], [1], [0], [0], [0, 0, 1, 0], [], []>} : vector<48x32xf32>, vector<192x32xf32>, vector<48x192xf32> -> vector<48x192xf32>
    "tpu.trace_stop"() : () -> ()
    %cst_70 = arith.constant 0.353553385 : f32
    %181 = vector.broadcast %cst_70 : f32 to vector<48x192xf32>
    %182 = arith.mulf %180, %181 : vector<48x192xf32>
    %183 = arith.addf %182, %32 : vector<48x192xf32>
    %cst_71 = arith.constant dense<0xFF800000> : vector<48xf32>
    %184 = vector.multi_reduction <maximumf>, %183, %cst_71 [1] : vector<48x192xf32> to vector<48xf32>
    %185 = vector.shape_cast %184 : vector<48xf32> to vector<48x1xf32>
    %186 = vector.broadcast %185 : vector<48x1xf32> to vector<48x192xf32>
    %187 = arith.subf %183, %186 : vector<48x192xf32>
    %188 = math.exp %187 : vector<48x192xf32>
    %cst_72 = arith.constant dense<0.000000e+00> : vector<48x32xf32>
    %189 = tpu.matmul %188, %2, %cst_72 {dimension_numbers = #tpu.dot_dimension_numbers<[1], [0], [0], [1], [0, 0, 1, 1], [], []>} : vector<48x192xf32>, vector<192x32xf32>, vector<48x32xf32> -> vector<48x32xf32>
    %cst_73 = arith.constant dense<0.000000e+00> : vector<48x32xf32>
    %190 = tpu.matmul %188, %179, %cst_73 {dimension_numbers = #tpu.dot_dimension_numbers<[1], [0], [0], [1], [0, 0, 1, 1], [], []>} : vector<48x192xf32>, vector<192x32xf32>, vector<48x32xf32> -> vector<48x32xf32>
    %191 = tpu.reciprocal %189 {approx = true} : vector<48x32xf32> -> vector<48x32xf32>
    %192 = arith.mulf %190, %191 : vector<48x32xf32>
    %cst_74 = arith.constant dense<0.000000e+00> : vector<48x32xf32>
    %193 = tpu.matmul %192, %138, %cst_74 {dimension_numbers = #tpu.dot_dimension_numbers<[1], [0], [0], [1], [0, 0, 1, 1], [], []>} : vector<48x32xf32>, vector<32x32xf32>, vector<48x32xf32> -> vector<48x32xf32>
    %194 = arith.addf %135, %193 : vector<48x32xf32>
    %195 = vector.broadcast %142 : vector<1x32xf32> to vector<48x32xf32>
    %196 = arith.addf %194, %195 : vector<48x32xf32>
    %cst_75 = arith.constant dense<0.000000e+00> : vector<48xf32>
    %197 = vector.multi_reduction <add>, %196, %cst_75 [1] : vector<48x32xf32> to vector<48xf32>
    %198 = vector.shape_cast %197 : vector<48xf32> to vector<48x1xf32>
    %cst_76 = arith.constant 3.200000e+01 : f32
    %199 = vector.broadcast %cst_76 : f32 to vector<48x1xf32>
    %200 = arith.divf %198, %199 : vector<48x1xf32>
    %201 = vector.broadcast %200 : vector<48x1xf32> to vector<48x32xf32>
    %202 = arith.subf %196, %201 : vector<48x32xf32>
    %203 = arith.mulf %202, %202 : vector<48x32xf32>
    %cst_77 = arith.constant dense<0.000000e+00> : vector<48xf32>
    %204 = vector.multi_reduction <add>, %203, %cst_77 [1] : vector<48x32xf32> to vector<48xf32>
    %205 = vector.shape_cast %204 : vector<48xf32> to vector<48x1xf32>
    %cst_78 = arith.constant 3.200000e+01 : f32
    %206 = vector.broadcast %cst_78 : f32 to vector<48x1xf32>
    %207 = arith.divf %205, %206 : vector<48x1xf32>
    %208 = vector.broadcast %200 : vector<48x1xf32> to vector<48x32xf32>
    %209 = arith.subf %196, %208 : vector<48x32xf32>
    %cst_79 = arith.constant 9.99999974E-6 : f32
    %210 = vector.broadcast %cst_79 : f32 to vector<48x1xf32>
    %211 = arith.addf %207, %210 : vector<48x1xf32>
    %212 = math.rsqrt %211 : vector<48x1xf32>
    %213 = vector.broadcast %212 : vector<48x1xf32> to vector<48x32xf32>
    %214 = arith.mulf %209, %213 : vector<48x32xf32>
    %215 = vector.broadcast %146 : vector<1x32xf32> to vector<48x32xf32>
    %216 = arith.mulf %214, %215 : vector<48x32xf32>
    %217 = vector.broadcast %147 : vector<1x32xf32> to vector<48x32xf32>
    %218 = arith.addf %216, %217 : vector<48x32xf32>
    %cst_80 = arith.constant dense<0.000000e+00> : vector<48x128xf32>
    %219 = tpu.matmul %218, %137, %cst_80 {dimension_numbers = #tpu.dot_dimension_numbers<[1], [0], [0], [1], [0, 0, 1, 1], [], []>} : vector<48x32xf32>, vector<32x128xf32>, vector<48x128xf32> -> vector<48x128xf32>
    %220 = vector.broadcast %141 : vector<1x128xf32> to vector<48x128xf32>
    %221 = arith.addf %219, %220 : vector<48x128xf32>
    %cst_81 = arith.constant 5.000000e-01 : f32
    %222 = vector.broadcast %cst_81 : f32 to vector<48x128xf32>
    %223 = arith.mulf %222, %221 : vector<48x128xf32>
    %224 = arith.mulf %221, %221 : vector<48x128xf32>
    %225 = arith.mulf %221, %224 : vector<48x128xf32>
    %cst_82 = arith.constant 4.471500e-02 : f32
    %226 = vector.broadcast %cst_82 : f32 to vector<48x128xf32>
    %227 = arith.mulf %226, %225 : vector<48x128xf32>
    %228 = arith.addf %221, %227 : vector<48x128xf32>
    %cst_83 = arith.constant 0.797884583 : f32
    %229 = vector.broadcast %cst_83 : f32 to vector<48x128xf32>
    %230 = arith.mulf %229, %228 : vector<48x128xf32>
    %231 = math.tanh %230 : vector<48x128xf32>
    %cst_84 = arith.constant 1.000000e+00 : f32
    %232 = vector.broadcast %cst_84 : f32 to vector<48x128xf32>
    %233 = arith.addf %232, %231 : vector<48x128xf32>
    %234 = arith.mulf %223, %233 : vector<48x128xf32>
    %cst_85 = arith.constant dense<0.000000e+00> : vector<48x32xf32>
    %235 = tpu.matmul %234, %139, %cst_85 {dimension_numbers = #tpu.dot_dimension_numbers<[1], [0], [0], [1], [0, 0, 1, 1], [], []>} : vector<48x128xf32>, vector<128x32xf32>, vector<48x32xf32> -> vector<48x32xf32>
    %236 = arith.addf %196, %235 : vector<48x32xf32>
    %237 = vector.broadcast %143 : vector<1x32xf32> to vector<48x32xf32>
    %238 = arith.addf %236, %237 : vector<48x32xf32>
    %cst_86 = arith.constant dense<0.000000e+00> : vector<48xf32>
    %239 = vector.multi_reduction <add>, %238, %cst_86 [1] : vector<48x32xf32> to vector<48xf32>
    %240 = vector.shape_cast %239 : vector<48xf32> to vector<48x1xf32>
    %cst_87 = arith.constant 3.200000e+01 : f32
    %241 = vector.broadcast %cst_87 : f32 to vector<48x1xf32>
    %242 = arith.divf %240, %241 : vector<48x1xf32>
    %243 = vector.broadcast %242 : vector<48x1xf32> to vector<48x32xf32>
    %244 = arith.subf %238, %243 : vector<48x32xf32>
    %245 = arith.mulf %244, %244 : vector<48x32xf32>
    %cst_88 = arith.constant dense<0.000000e+00> : vector<48xf32>
    %246 = vector.multi_reduction <add>, %245, %cst_88 [1] : vector<48x32xf32> to vector<48xf32>
    %247 = vector.shape_cast %246 : vector<48xf32> to vector<48x1xf32>
    %cst_89 = arith.constant 3.200000e+01 : f32
    %248 = vector.broadcast %cst_89 : f32 to vector<48x1xf32>
    %249 = arith.divf %247, %248 : vector<48x1xf32>
    %250 = vector.broadcast %242 : vector<48x1xf32> to vector<48x32xf32>
    %251 = arith.subf %238, %250 : vector<48x32xf32>
    %cst_90 = arith.constant 9.99999974E-6 : f32
    %252 = vector.broadcast %cst_90 : f32 to vector<48x1xf32>
    %253 = arith.addf %249, %252 : vector<48x1xf32>
    %254 = math.rsqrt %253 : vector<48x1xf32>
    %255 = vector.broadcast %254 : vector<48x1xf32> to vector<48x32xf32>
    %256 = arith.mulf %251, %255 : vector<48x32xf32>
    %257 = vector.broadcast %5 : vector<1x32xf32> to vector<48x32xf32>
    %258 = arith.mulf %256, %257 : vector<48x32xf32>
    %259 = vector.broadcast %6 : vector<1x32xf32> to vector<48x32xf32>
    %260 = arith.addf %258, %259 : vector<48x32xf32>
    %261 = vector.extract_strided_slice %260 {offsets = [16, 0], sizes = [8, 32], strides = [1, 1]} : vector<48x32xf32> to vector<8x32xf32>
    %262 = vector.extract_strided_slice %260 {offsets = [40, 0], sizes = [8, 32], strides = [1, 1]} : vector<48x32xf32> to vector<8x32xf32>
    %263 = tpu.concatenate %261, %262 in 0 : vector<8x32xf32>, vector<8x32xf32> -> vector<16x32xf32>
    %264 = vector.extract_strided_slice %260 {offsets = [8, 0], sizes = [8, 32], strides = [1, 1]} : vector<48x32xf32> to vector<8x32xf32>
    %265 = vector.extract_strided_slice %260 {offsets = [32, 0], sizes = [8, 32], strides = [1, 1]} : vector<48x32xf32> to vector<8x32xf32>
    %266 = tpu.concatenate %264, %265 in 0 : vector<8x32xf32>, vector<8x32xf32> -> vector<16x32xf32>
    %c760 = arith.constant 760 : index
    %c0_91 = arith.constant 0 : index
    %267 = vector.load %arg2[%c760, %c0_91] : memref<832x128xf32, #tpu.memory_space<vmem>>, vector<32x128xf32>
    %c792 = arith.constant 792 : index
    %c0_92 = arith.constant 0 : index
    %268 = vector.load %arg2[%c792, %c0_92] : memref<832x128xf32, #tpu.memory_space<vmem>>, vector<32x128xf32>
    %c828 = arith.constant 828 : index
    %c0_93 = arith.constant 0 : index
    %269 = vector.load %arg2[%c828, %c0_93] : memref<832x128xf32, #tpu.memory_space<vmem>>, vector<1x128xf32>
    %c829 = arith.constant 829 : index
    %c0_94 = arith.constant 0 : index
    %270 = vector.load %arg2[%c829, %c0_94] : memref<832x128xf32, #tpu.memory_space<vmem>>, vector<1x128xf32>
    %cst_95 = arith.constant dense<0.000000e+00> : vector<16x128xf32>
    %271 = tpu.matmul %263, %267, %cst_95 {dimension_numbers = #tpu.dot_dimension_numbers<[1], [0], [0], [1], [0, 0, 1, 1], [], []>} : vector<16x32xf32>, vector<32x128xf32>, vector<16x128xf32> -> vector<16x128xf32>
    %272 = vector.broadcast %269 : vector<1x128xf32> to vector<16x128xf32>
    %273 = arith.addf %271, %272 : vector<16x128xf32>
    %cst_96 = arith.constant dense<0.000000e+00> : vector<16x128xf32>
    %274 = tpu.matmul %266, %268, %cst_96 {dimension_numbers = #tpu.dot_dimension_numbers<[1], [0], [0], [1], [0, 0, 1, 1], [], []>} : vector<16x32xf32>, vector<32x128xf32>, vector<16x128xf32> -> vector<16x128xf32>
    %275 = vector.broadcast %270 : vector<1x128xf32> to vector<16x128xf32>
    %276 = arith.addf %274, %275 : vector<16x128xf32>
    %277 = math.tanh %276 : vector<16x128xf32>
    %278 = arith.addf %273, %277 : vector<16x128xf32>
    %c0_97 = arith.constant 0 : index
    %c0_98 = arith.constant 0 : index
    %279 = vector.load %arg3[%c0_97, %c0_98] : memref<16x128xf32, #tpu.memory_space<vmem>>, vector<16x128xf32>
    tpu.vector_store %arg3[%c0_97, %c0_98], %278 {strides = array<i32>} : memref<16x128xf32, #tpu.memory_space<vmem>>, vector<16x128xf32>,
    return
  }
}

</mosaic_0001>

<llo_original>
// kernel: tile.23
$region0: #{tile.23}
  %s0 = inlined_call_operand.vmem [shape: f32[48,4,48], index: 0, kind: input, shape index: {}]
  %s1 = inlined_call_operand.vmem [shape: f32[48,192], index: 1, kind: output, shape index: {}]
  $region1: #{tile.23} parent=0
    #allocation0 [shape = 'u8[196608]{0}', space=vmem, size = 0x30000, scoped, tag = 'scoped mem for input reshape']
    %s3 = sshllo.u32 0, 4
    %s4 = smul.addr 4, 47
    %s5 = scalar_lea.vmem %s0, %s4
    %v6 = vld [vmem:[%s5] sm:%s3]
    %s7 = scalar_lea.vmem [#allocation0], 376
    %8 = vst [vmem:[%s7] sm:%s3] %v6
    %s9 = smul.addr 4, 46
    %s10 = scalar_lea.vmem %s0, %s9
    %v11 = vld [vmem:[%s10] sm:%s3]
    %s12 = scalar_lea.vmem [#allocation0], 368
    %13 = vst [vmem:[%s12] sm:%s3] %v11
    %s14 = smul.addr 4, 45
    %s15 = scalar_lea.vmem %s0, %s14
    %v16 = vld [vmem:[%s15] sm:%s3]
    %s17 = scalar_lea.vmem [#allocation0], 360
    %18 = vst [vmem:[%s17] sm:%s3] %v16
    %s19 = smul.addr 4, 44
    %s20 = scalar_lea.vmem %s0, %s19
    %v21 = vld [vmem:[%s20] sm:%s3]
    %s22 = scalar_lea.vmem [#allocation0], 352
    %23 = vst [vmem:[%s22] sm:%s3] %v21
    %s24 = smul.addr 4, 43
    %s25 = scalar_lea.vmem %s0, %s24
    %v26 = vld [vmem:[%s25] sm:%s3]
    %s27 = scalar_lea.vmem [#allocation0], 344
    %28 = vst [vmem:[%s27] sm:%s3] %v26
    %s29 = smul.addr 4, 42
    %s30 = scalar_lea.vmem %s0, %s29
    %v31 = vld [vmem:[%s30] sm:%s3]
    %s32 = scalar_lea.vmem [#allocation0], 336
    %33 = vst [vmem:[%s32] sm:%s3] %v31
    %s34 = smul.addr 4, 41
    %s35 = scalar_lea.vmem %s0, %s34
    %v36 = vld [vmem:[%s35] sm:%s3]
    %s37 = scalar_lea.vmem [#allocation0], 328
    %38 = vst [vmem:[%s37] sm:%s3] %v36
    %s39 = smul.addr 4, 40
    %s40 = scalar_lea.vmem %s0, %s39
    %v41 = vld [vmem:[%s40] sm:%s3]
    %s42 = scalar_lea.vmem [#allocation0], 320
    %43 = vst [vmem:[%s42] sm:%s3] %v41
    %s44 = smul.addr 4, 39
    %s45 = scalar_lea.vmem %s0, %s44
    %v46 = vld [vmem:[%s45] sm:%s3]
    %s47 = scalar_lea.vmem [#allocation0], 312
    %48 = vst [vmem:[%s47] sm:%s3] %v46
    %s49 = smul.addr 4, 38
    %s50 = scalar_lea.vmem %s0, %s49
    %v51 = vld [vmem:[%s50] sm:%s3]
    %s52 = scalar_lea.vmem [#allocation0], 304
    %53 = vst [vmem:[%s52] sm:%s3] %v51
    %s54 = smul.addr 4, 37
    %s55 = scalar_lea.vmem %s0, %s54
    %v56 = vld [vmem:[%s55] sm:%s3]
    %s57 = scalar_lea.vmem [#allocation0], 296
    %58 = vst [vmem:[%s57] sm:%s3] %v56
    %s59 = smul.addr 4, 36
    %s60 = scalar_lea.vmem %s0, %s59
    %v61 = vld [vmem:[%s60] sm:%s3]
    %s62 = scalar_lea.vmem [#allocation0], 288
    %63 = vst [vmem:[%s62] sm:%s3] %v61
    %s64 = smul.addr 4, 35
    %s65 = scalar_lea.vmem %s0, %s64
    %v66 = vld [vmem:[%s65] sm:%s3]
    %s67 = scalar_lea.vmem [#allocation0], 280
    %68 = vst [vmem:[%s67] sm:%s3] %v66
    %s69 = smul.addr 4, 34
    %s70 = scalar_lea.vmem %s0, %s69
    %v71 = vld [vmem:[%s70] sm:%s3]
    %s72 = scalar_lea.vmem [#allocation0], 272
    %73 = vst [vmem:[%s72] sm:%s3] %v71
    %s74 = smul.addr 4, 33
    %s75 = scalar_lea.vmem %s0, %s74
    %v76 = vld [vmem:[%s75] sm:%s3]
    %s77 = scalar_lea.vmem [#allocation0], 264
    %78 = vst [vmem:[%s77] sm:%s3] %v76
    %s79 = smul.addr 4, 32
    %s80 = scalar_lea.vmem %s0, %s79
    %v81 = vld [vmem:[%s80] sm:%s3]
    %s82 = scalar_lea.vmem [#allocation0], 256
    %83 = vst [vmem:[%s82] sm:%s3] %v81
    %s84 = smul.addr 4, 31
    %s85 = scalar_lea.vmem %s0, %s84
    %v86 = vld [vmem:[%s85] sm:%s3]
    %s87 = scalar_lea.vmem [#allocation0], 248
    %88 = vst [vmem:[%s87] sm:%s3] %v86
    %s89 = smul.addr 4, 30
    %s90 = scalar_lea.vmem %s0, %s89
    %v91 = vld [vmem:[%s90] sm:%s3]
    %s92 = scalar_lea.vmem [#allocation0], 240
    %93 = vst [vmem:[%s92] sm:%s3] %v91
    %s94 = smul.addr 4, 29
    %s95 = scalar_lea.vmem %s0, %s94
    %v96 = vld [vmem:[%s95] sm:%s3]
    %s97 = scalar_lea.vmem [#allocation0], 232
    %98 = vst [vmem:[%s97] sm:%s3] %v96
    %s99 = smul.addr 4, 28
    %s100 = scalar_lea.vmem %s0, %s99
    %v101 = vld [vmem:[%s100] sm:%s3]
    %s102 = scalar_lea.vmem [#allocation0], 224
    %103 = vst [vmem:[%s102] sm:%s3] %v101
    %s104 = smul.addr 4, 27
    %s105 = scalar_lea.vmem %s0, %s104
    %v106 = vld [vmem:[%s105] sm:%s3]
    %s107 = scalar_lea.vmem [#allocation0], 216
    %108 = vst [vmem:[%s107] sm:%s3] %v106
    %s109 = smul.addr 4, 26
    %s110 = scalar_lea.vmem %s0, %s109
    %v111 = vld [vmem:[%s110] sm:%s3]
    %s112 = scalar_lea.vmem [#allocation0], 208
    %113 = vst [vmem:[%s112] sm:%s3] %v111
    %s114 = smul.addr 4, 25
    %s115 = scalar_lea.vmem %s0, %s114
    %v116 = vld [vmem:[%s115] sm:%s3]
    %s117 = scalar_lea.vmem [#allocation0], 200
    %118 = vst [vmem:[%s117] sm:%s3] %v116
    %s119 = smul.addr 4, 24
    %s120 = scalar_lea.vmem %s0, %s119
    %v121 = vld [vmem:[%s120] sm:%s3]
    %s122 = scalar_lea.vmem [#allocation0], 192
    %123 = vst [vmem:[%s122] sm:%s3] %v121
    %s124 = smul.addr 4, 23
    %s125 = scalar_lea.vmem %s0, %s124
    %v126 = vld [vmem:[%s125] sm:%s3]
    %s127 = scalar_lea.vmem [#allocation0], 184
    %128 = vst [vmem:[%s127] sm:%s3] %v126
    %s129 = smul.addr 4, 22
    %s130 = scalar_lea.vmem %s0, %s129
    %v131 = vld [vmem:[%s130] sm:%s3]
    %s132 = scalar_lea.vmem [#allocation0], 176
    %133 = vst [vmem:[%s132] sm:%s3] %v131
    %s134 = smul.addr 4, 21
    %s135 = scalar_lea.vmem %s0, %s134
    %v136 = vld [vmem:[%s135] sm:%s3]
    %s137 = scalar_lea.vmem [#allocation0], 168
    %138 = vst [vmem:[%s137] sm:%s3] %v136
    %s139 = smul.addr 4, 20
    %s140 = scalar_lea.vmem %s0, %s139
    %v141 = vld [vmem:[%s140] sm:%s3]
    %s142 = scalar_lea.vmem [#allocation0], 160
    %143 = vst [vmem:[%s142] sm:%s3] %v141
    %s144 = smul.addr 4, 19
    %s145 = scalar_lea.vmem %s0, %s144
    %v146 = vld [vmem:[%s145] sm:%s3]
    %s147 = scalar_lea.vmem [#allocation0], 152
    %148 = vst [vmem:[%s147] sm:%s3] %v146
    %s149 = smul.addr 4, 18
    %s150 = scalar_lea.vmem %s0, %s149
    %v151 = vld [vmem:[%s150] sm:%s3]
    %s152 = scalar_lea.vmem [#allocation0], 144
    %153 = vst [vmem:[%s152] sm:%s3] %v151
    %s154 = smul.addr 4, 17
    %s155 = scalar_lea.vmem %s0, %s154
    %v156 = vld [vmem:[%s155] sm:%s3]
    %s157 = scalar_lea.vmem [#allocation0], 136
    %158 = vst [vmem:[%s157] sm:%s3] %v156
    %s159 = smul.addr 4, 16
    %s160 = scalar_lea.vmem %s0, %s159
    %v161 = vld [vmem:[%s160] sm:%s3]
    %s162 = scalar_lea.vmem [#allocation0], 128
    %163 = vst [vmem:[%s162] sm:%s3] %v161
    %s164 = smul.addr 4, 15
    %s165 = scalar_lea.vmem %s0, %s164
    %v166 = vld [vmem:[%s165] sm:%s3]
    %s167 = scalar_lea.vmem [#allocation0], 120
    %168 = vst [vmem:[%s167] sm:%s3] %v166
    %s169 = smul.addr 4, 14
    %s170 = scalar_lea.vmem %s0, %s169
    %v171 = vld [vmem:[%s170] sm:%s3]
    %s172 = scalar_lea.vmem [#allocation0], 112
    %173 = vst [vmem:[%s172] sm:%s3] %v171
    %s174 = smul.addr 4, 13
    %s175 = scalar_lea.vmem %s0, %s174
    %v176 = vld [vmem:[%s175] sm:%s3]
    %s177 = scalar_lea.vmem [#allocation0], 104
    %178 = vst [vmem:[%s177] sm:%s3] %v176
    %s179 = smul.addr 4, 12
    %s180 = scalar_lea.vmem %s0, %s179
    %v181 = vld [vmem:[%s180] sm:%s3]
    %s182 = scalar_lea.vmem [#allocation0], 96
    %183 = vst [vmem:[%s182] sm:%s3] %v181
    %s184 = smul.addr 4, 11
    %s185 = scalar_lea.vmem %s0, %s184
    %v186 = vld [vmem:[%s185] sm:%s3]
    %s187 = scalar_lea.vmem [#allocation0], 88
    %188 = vst [vmem:[%s187] sm:%s3] %v186
    %s189 = smul.addr 4, 10
    %s190 = scalar_lea.vmem %s0, %s189
    %v191 = vld [vmem:[%s190] sm:%s3]
    %s192 = scalar_lea.vmem [#allocation0], 80
    %193 = vst [vmem:[%s192] sm:%s3] %v191
    %s194 = smul.addr 4, 9
    %s195 = scalar_lea.vmem %s0, %s194
    %v196 = vld [vmem:[%s195] sm:%s3]
    %s197 = scalar_lea.vmem [#allocation0], 72
    %198 = vst [vmem:[%s197] sm:%s3] %v196
    %s199 = smul.addr 4, 8
    %s200 = scalar_lea.vmem %s0, %s199
    %v201 = vld [vmem:[%s200] sm:%s3]
    %s202 = scalar_lea.vmem [#allocation0], 64
    %203 = vst [vmem:[%s202] sm:%s3] %v201
    %s204 = smul.addr 4, 7
    %s205 = scalar_lea.vmem %s0, %s204
    %v206 = vld [vmem:[%s205] sm:%s3]
    %s207 = scalar_lea.vmem [#allocation0], 56
    %208 = vst [vmem:[%s207] sm:%s3] %v206
    %s209 = smul.addr 4, 6
    %s210 = scalar_lea.vmem %s0, %s209
    %v211 = vld [vmem:[%s210] sm:%s3]
    %s212 = scalar_lea.vmem [#allocation0], 48
    %213 = vst [vmem:[%s212] sm:%s3] %v211
    %s214 = smul.addr 4, 5
    %s215 = scalar_lea.vmem %s0, %s214
    %v216 = vld [vmem:[%s215] sm:%s3]
    %s217 = scalar_lea.vmem [#allocation0], 40
    %218 = vst [vmem:[%s217] sm:%s3] %v216
    %s219 = smul.addr 4, 4
    %s220 = scalar_lea.vmem %s0, %s219
    %v221 = vld [vmem:[%s220] sm:%s3]
    %s222 = scalar_lea.vmem [#allocation0], 32
    %223 = vst [vmem:[%s222] sm:%s3] %v221
    %s224 = smul.addr 4, 3
    %s225 = scalar_lea.vmem %s0, %s224
    %v226 = vld [vmem:[%s225] sm:%s3]
    %s227 = scalar_lea.vmem [#allocation0], 24
    %228 = vst [vmem:[%s227] sm:%s3] %v226
    %s229 = smul.addr 4, 2
    %s230 = scalar_lea.vmem %s0, %s229
    %v231 = vld [vmem:[%s230] sm:%s3]
    %s232 = scalar_lea.vmem [#allocation0], 16
    %233 = vst [vmem:[%s232] sm:%s3] %v231
    %s234 = scalar_lea.vmem %s0, 4
    %v235 = vld [vmem:[%s234] sm:%s3]
    %s236 = scalar_lea.vmem [#allocation0], 8
    %237 = vst [vmem:[%s236] sm:%s3] %v235
    %v238 = vld [vmem:[%s0] sm:%s3]
    %239 = vst [vmem:[#allocation0] sm:%s3] %v238
    %v240 = vld [vmem:[#allocation0] ss:$8 sm:$0xf]
    %v241 = vld [vmem:[#allocation0] ss:$8 sm:$0xf0]
    %vm242 = vcmask 1047556
    %v243 = vsel %vm242, %v241, %v240
    %vm244 = vcmask 392192
    %245 = vst.msk [vmem:[%s1] sm:$0xff] %vm244, %v243
    %s246 = scalar_lea.vmem [#allocation0], 64
    %v247 = vld [vmem:[%s246] ss:$8 sm:$0xf]
    %s248 = scalar_lea.vmem [#allocation0], 64
    %v249 = vld [vmem:[%s248] ss:$8 sm:$0xf0]
    %vm250 = vcmask 1047556
    %v251 = vsel %vm250, %v249, %v247
    %vm252 = vcmask 392192
    %s253 = scalar_lea.vmem %s1, 16
    %254 = vst.msk [vmem:[%s253] sm:$0xff] %vm252, %v251
    %s255 = scalar_lea.vmem [#allocation0], 128
    %v256 = vld [vmem:[%s255] ss:$8 sm:$0xf]
    %s257 = scalar_lea.vmem [#allocation0], 128
    %v258 = vld [vmem:[%s257] ss:$8 sm:$0xf0]
    %vm259 = vcmask 1047556
    %v260 = vsel %vm259, %v258, %v256
    %vm261 = vcmask 392192
    %s262 = scalar_lea.vmem %s1, 32
    %263 = vst.msk [vmem:[%s262] sm:$0xff] %vm261, %v260
    %s264 = scalar_lea.vmem [#allocation0], 192
    %v265 = vld [vmem:[%s264] ss:$8 sm:$0xf]
    %s266 = scalar_lea.vmem [#allocation0], 192
    %v267 = vld [vmem:[%s266] ss:$8 sm:$0xf0]
    %vm268 = vcmask 1047556
    %v269 = vsel %vm268, %v267, %v265
    %vm270 = vcmask 392192
    %s271 = scalar_lea.vmem %s1, 48
    %272 = vst.msk [vmem:[%s271] sm:$0xff] %vm270, %v269
    %s273 = scalar_lea.vmem [#allocation0], 256
    %v274 = vld [vmem:[%s273] ss:$8 sm:$0xf]
    %s275 = scalar_lea.vmem [#allocation0], 256
    %v276 = vld [vmem:[%s275] ss:$8 sm:$0xf0]
    %vm277 = vcmask 1047556
    %v278 = vsel %vm277, %v276, %v274
    %vm279 = vcmask 392192
    %s280 = scalar_lea.vmem %s1, 64
    %281 = vst.msk [vmem:[%s280] sm:$0xff] %vm279, %v278
    %s282 = scalar_lea.vmem [#allocation0], 320
    %v283 = vld [vmem:[%s282] ss:$8 sm:$0xf]
    %s284 = scalar_lea.vmem [#allocation0], 320
    %v285 = vld [vmem:[%s284] ss:$8 sm:$0xf0]
    %vm286 = vcmask 1047556
    %v287 = vsel %vm286, %v285, %v283
    %vm288 = vcmask 392192
    %s289 = scalar_lea.vmem %s1, 80
    %290 = vst.msk [vmem:[%s289] sm:$0xff] %vm288, %v287
    %s291 = scalar_lea.vmem [#allocation0], 2
    %v292 = vld [vmem:[%s291] ss:$8 sm:$0xf]
    %s293 = scalar_lea.vmem [#allocation0], 2
    %v294 = vld [vmem:[%s293] ss:$8 sm:$0xf0]
    %vm295 = vcmask 1047556
    %v296 = vsel %vm295, %v294, %v292
    %s297 = scalar_lea.vmem [#allocation0], 2
    %v298 = vld [vmem:[%s297] ss:$8 sm:$0xf]
    %s299 = scalar_lea.vmem [#allocation0], 2
    %v300 = vld [vmem:[%s299] ss:$8 sm:$0xf0]
    %vm301 = vcmask 1047556
    %v302 = vsel %vm301, %v300, %v298
    %vm303 = vcmask 261120
    %v304 = vsel %vm303, %v302, %v296
    %305 = vrot.lane.b32.xlu0 %v304, 96
    %v306 = vpop.permute.xlu0 %305
    %vm307 = vcmask 130048
    %s308 = scalar_lea.vmem %s1, 8
    %309 = vst.msk [vmem:[%s308] sm:$0xff] %vm307, %v306
    %vm310 = vcmask 1048320
    %311 = vst.msk [vmem:[%s1] sm:$0xff] %vm310, %v306
    %s312 = scalar_lea.vmem [#allocation0], 130
    %v313 = vld [vmem:[%s312] ss:$8 sm:$0xf]
    %s314 = scalar_lea.vmem [#allocation0], 130
    %v315 = vld [vmem:[%s314] ss:$8 sm:$0xf0]
    %vm316 = vcmask 1047556
    %v317 = vsel %vm316, %v315, %v313
    %s318 = scalar_lea.vmem [#allocation0], 130
    %v319 = vld [vmem:[%s318] ss:$8 sm:$0xf]
    %s320 = scalar_lea.vmem [#allocation0], 130
    %v321 = vld [vmem:[%s320] ss:$8 sm:$0xf0]
    %vm322 = vcmask 1047556
    %v323 = vsel %vm322, %v321, %v319
    %vm324 = vcmask 261120
    %v325 = vsel %vm324, %v323, %v317
    %326 = vrot.lane.b32.xlu0 %v325, 96
    %v327 = vpop.permute.xlu0 %326
    %vm328 = vcmask 130048
    %s329 = scalar_lea.vmem %s1, 40
    %330 = vst.msk [vmem:[%s329] sm:$0xff] %vm328, %v327
    %vm331 = vcmask 1048320
    %s332 = scalar_lea.vmem %s1, 32
    %333 = vst.msk [vmem:[%s332] sm:$0xff] %vm331, %v327
    %s334 = scalar_lea.vmem [#allocation0], 258
    %v335 = vld [vmem:[%s334] ss:$8 sm:$0xf]
    %s336 = scalar_lea.vmem [#allocation0], 258
    %v337 = vld [vmem:[%s336] ss:$8 sm:$0xf0]
    %vm338 = vcmask 1047556
    %v339 = vsel %vm338, %v337, %v335
    %s340 = scalar_lea.vmem [#allocation0], 258
    %v341 = vld [vmem:[%s340] ss:$8 sm:$0xf]
    %s342 = scalar_lea.vmem [#allocation0], 258
    %v343 = vld [vmem:[%s342] ss:$8 sm:$0xf0]
    %vm344 = vcmask 1047556
    %v345 = vsel %vm344, %v343, %v341
    %vm346 = vcmask 261120
    %v347 = vsel %vm346, %v345, %v339
    %348 = vrot.lane.b32.xlu0 %v347, 96
    %v349 = vpop.permute.xlu0 %348
    %vm350 = vcmask 130048
    %s351 = scalar_lea.vmem %s1, 72
    %352 = vst.msk [vmem:[%s351] sm:$0xff] %vm350, %v349
    %vm353 = vcmask 1048320
    %s354 = scalar_lea.vmem %s1, 64
    %355 = vst.msk [vmem:[%s354] sm:$0xff] %vm353, %v349
    %s356 = scalar_lea.vmem [#allocation0], 66
    %v357 = vld [vmem:[%s356] ss:$8 sm:$0xf]
    %s358 = scalar_lea.vmem [#allocation0], 66
    %v359 = vld [vmem:[%s358] ss:$8 sm:$0xf0]
    %vm360 = vcmask 1047556
    %v361 = vsel %vm360, %v359, %v357
    %s362 = scalar_lea.vmem [#allocation0], 66
    %v363 = vld [vmem:[%s362] ss:$8 sm:$0xf]
    %s364 = scalar_lea.vmem [#allocation0], 66
    %v365 = vld [vmem:[%s364] ss:$8 sm:$0xf0]
    %vm366 = vcmask 1047556
    %v367 = vsel %vm366, %v365, %v363
    %vm368 = vcmask 261120
    %v369 = vsel %vm368, %v367, %v361
    %370 = vrot.lane.b32.xlu0 %v369, 96
    %v371 = vpop.permute.xlu0 %370
    %vm372 = vcmask 130048
    %s373 = scalar_lea.vmem %s1, 24
    %374 = vst.msk [vmem:[%s373] sm:$0xff] %vm372, %v371
    %vm375 = vcmask 1048320
    %s376 = scalar_lea.vmem %s1, 16
    %377 = vst.msk [vmem:[%s376] sm:$0xff] %vm375, %v371
    %s378 = scalar_lea.vmem [#allocation0], 194
    %v379 = vld [vmem:[%s378] ss:$8 sm:$0xf]
    %s380 = scalar_lea.vmem [#allocation0], 194
    %v381 = vld [vmem:[%s380] ss:$8 sm:$0xf0]
    %vm382 = vcmask 1047556
    %v383 = vsel %vm382, %v381, %v379
    %s384 = scalar_lea.vmem [#allocation0], 194
    %v385 = vld [vmem:[%s384] ss:$8 sm:$0xf]
    %s386 = scalar_lea.vmem [#allocation0], 194
    %v387 = vld [vmem:[%s386] ss:$8 sm:$0xf0]
    %vm388 = vcmask 1047556
    %v389 = vsel %vm388, %v387, %v385
    %vm390 = vcmask 261120
    %v391 = vsel %vm390, %v389, %v383
    %392 = vrot.lane.b32.xlu0 %v391, 96
    %v393 = vpop.permute.xlu0 %392
    %vm394 = vcmask 130048
    %s395 = scalar_lea.vmem %s1, 56
    %396 = vst.msk [vmem:[%s395] sm:$0xff] %vm394, %v393
    %vm397 = vcmask 1048320
    %s398 = scalar_lea.vmem %s1, 48
    %399 = vst.msk [vmem:[%s398] sm:$0xff] %vm397, %v393
    %s400 = scalar_lea.vmem [#allocation0], 322
    %v401 = vld [vmem:[%s400] ss:$8 sm:$0xf]
    %s402 = scalar_lea.vmem [#allocation0], 322
    %v403 = vld [vmem:[%s402] ss:$8 sm:$0xf0]
    %vm404 = vcmask 1047556
    %v405 = vsel %vm404, %v403, %v401
    %s406 = scalar_lea.vmem [#allocation0], 322
    %v407 = vld [vmem:[%s406] ss:$8 sm:$0xf]
    %s408 = scalar_lea.vmem [#allocation0], 322
    %v409 = vld [vmem:[%s408] ss:$8 sm:$0xf0]
    %vm410 = vcmask 1047556
    %v411 = vsel %vm410, %v409, %v407
    %vm412 = vcmask 261120
    %v413 = vsel %vm412, %v411, %v405
    %414 = vrot.lane.b32.xlu0 %v413, 96
    %v415 = vpop.permute.xlu0 %414
    %vm416 = vcmask 130048
    %s417 = scalar_lea.vmem %s1, 88
    %418 = vst.msk [vmem:[%s417] sm:$0xff] %vm416, %v415
    %vm419 = vcmask 1048320
    %s420 = scalar_lea.vmem %s1, 80
    %421 = vst.msk [vmem:[%s420] sm:$0xff] %vm419, %v415
    %s422 = scalar_lea.vmem [#allocation0], 1
    %v423 = vld [vmem:[%s422] ss:$8 sm:$0xf]
    %s424 = scalar_lea.vmem [#allocation0], 1
    %v425 = vld [vmem:[%s424] ss:$8 sm:$0xf0]
    %vm426 = vcmask 1047556
    %v427 = vsel %vm426, %v425, %v423
    %428 = vrot.lane.b32.xlu0 %v427, 48
    %v429 = vpop.permute.xlu0 %428
    %vm430 = vcmask 785792
    %431 = vst.msk [vmem:[%s1] sm:$0xff] %vm430, %v429
    %s432 = scalar_lea.vmem [#allocation0], 129
    %v433 = vld [vmem:[%s432] ss:$8 sm:$0xf]
    %s434 = scalar_lea.vmem [#allocation0], 129
    %v435 = vld [vmem:[%s434] ss:$8 sm:$0xf0]
    %vm436 = vcmask 1047556
    %v437 = vsel %vm436, %v435, %v433
    %438 = vrot.lane.b32.xlu0 %v437, 48
    %v439 = vpop.permute.xlu0 %438
    %vm440 = vcmask 785792
    %s441 = scalar_lea.vmem %s1, 32
    %442 = vst.msk [vmem:[%s441] sm:$0xff] %vm440, %v439
    %s443 = scalar_lea.vmem [#allocation0], 257
    %v444 = vld [vmem:[%s443] ss:$8 sm:$0xf]
    %s445 = scalar_lea.vmem [#allocation0], 257
    %v446 = vld [vmem:[%s445] ss:$8 sm:$0xf0]
    %vm447 = vcmask 1047556
    %v448 = vsel %vm447, %v446, %v444
    %449 = vrot.lane.b32.xlu0 %v448, 48
    %v450 = vpop.permute.xlu0 %449
    %vm451 = vcmask 785792
    %s452 = scalar_lea.vmem %s1, 64
    %453 = vst.msk [vmem:[%s452] sm:$0xff] %vm451, %v450
    %s454 = scalar_lea.vmem [#allocation0], 65
    %v455 = vld [vmem:[%s454] ss:$8 sm:$0xf]
    %s456 = scalar_lea.vmem [#allocation0], 65
    %v457 = vld [vmem:[%s456] ss:$8 sm:$0xf0]
    %vm458 = vcmask 1047556
    %v459 = vsel %vm458, %v457, %v455
    %460 = vrot.lane.b32.xlu0 %v459, 48
    %v461 = vpop.permute.xlu0 %460
    %vm462 = vcmask 785792
    %s463 = scalar_lea.vmem %s1, 16
    %464 = vst.msk [vmem:[%s463] sm:$0xff] %vm462, %v461
    %s465 = scalar_lea.vmem [#allocation0], 193
    %v466 = vld [vmem:[%s465] ss:$8 sm:$0xf]
    %s467 = scalar_lea.vmem [#allocation0], 193
    %v468 = vld [vmem:[%s467] ss:$8 sm:$0xf0]
    %vm469 = vcmask 1047556
    %v470 = vsel %vm469, %v468, %v466
    %471 = vrot.lane.b32.xlu0 %v470, 48
    %v472 = vpop.permute.xlu0 %471
    %vm473 = vcmask 785792
    %s474 = scalar_lea.vmem %s1, 48
    %475 = vst.msk [vmem:[%s474] sm:$0xff] %vm473, %v472
    %s476 = scalar_lea.vmem [#allocation0], 321
    %v477 = vld [vmem:[%s476] ss:$8 sm:$0xf]
    %s478 = scalar_lea.vmem [#allocation0], 321
    %v479 = vld [vmem:[%s478] ss:$8 sm:$0xf0]
    %vm480 = vcmask 1047556
    %v481 = vsel %vm480, %v479, %v477
    %482 = vrot.lane.b32.xlu0 %v481, 48
    %v483 = vpop.permute.xlu0 %482
    %vm484 = vcmask 785792
    %s485 = scalar_lea.vmem %s1, 80
    %486 = vst.msk [vmem:[%s485] sm:$0xff] %vm484, %v483
    %s487 = scalar_lea.vmem [#allocation0], 3
    %v488 = vld [vmem:[%s487] ss:$8 sm:$0xf]
    %s489 = scalar_lea.vmem [#allocation0], 3
    %v490 = vld [vmem:[%s489] ss:$8 sm:$0xf0]
    %vm491 = vcmask 1047556
    %v492 = vsel %vm491, %v490, %v488
    %493 = vrot.lane.b32.xlu0 %v492, 16
    %v494 = vpop.permute.xlu0 %493
    %vm495 = vcmask 523392
    %s496 = scalar_lea.vmem %s1, 8
    %497 = vst.msk [vmem:[%s496] sm:$0xff] %vm495, %v494
    %s498 = scalar_lea.vmem [#allocation0], 131
    %v499 = vld [vmem:[%s498] ss:$8 sm:$0xf]
    %s500 = scalar_lea.vmem [#allocation0], 131
    %v501 = vld [vmem:[%s500] ss:$8 sm:$0xf0]
    %vm502 = vcmask 1047556
    %v503 = vsel %vm502, %v501, %v499
    %504 = vrot.lane.b32.xlu0 %v503, 16
    %v505 = vpop.permute.xlu0 %504
    %vm506 = vcmask 523392
    %s507 = scalar_lea.vmem %s1, 40
    %508 = vst.msk [vmem:[%s507] sm:$0xff] %vm506, %v505
    %s509 = scalar_lea.vmem [#allocation0], 259
    %v510 = vld [vmem:[%s509] ss:$8 sm:$0xf]
    %s511 = scalar_lea.vmem [#allocation0], 259
    %v512 = vld [vmem:[%s511] ss:$8 sm:$0xf0]
    %vm513 = vcmask 1047556
    %v514 = vsel %vm513, %v512, %v510
    %515 = vrot.lane.b32.xlu0 %v514, 16
    %v516 = vpop.permute.xlu0 %515
    %vm517 = vcmask 523392
    %s518 = scalar_lea.vmem %s1, 72
    %519 = vst.msk [vmem:[%s518] sm:$0xff] %vm517, %v516
    %s520 = scalar_lea.vmem [#allocation0], 67
    %v521 = vld [vmem:[%s520] ss:$8 sm:$0xf]
    %s522 = scalar_lea.vmem [#allocation0], 67
    %v523 = vld [vmem:[%s522] ss:$8 sm:$0xf0]
    %vm524 = vcmask 1047556
    %v525 = vsel %vm524, %v523, %v521
    %526 = vrot.lane.b32.xlu0 %v525, 16
    %v527 = vpop.permute.xlu0 %526
    %vm528 = vcmask 523392
    %s529 = scalar_lea.vmem %s1, 24
    %530 = vst.msk [vmem:[%s529] sm:$0xff] %vm528, %v527
    %s531 = scalar_lea.vmem [#allocation0], 195
    %v532 = vld [vmem:[%s531] ss:$8 sm:$0xf]
    %s533 = scalar_lea.vmem [#allocation0], 195
    %v534 = vld [vmem:[%s533] ss:$8 sm:$0xf0]
    %vm535 = vcmask 1047556
    %v536 = vsel %vm535, %v534, %v532
    %537 = vrot.lane.b32.xlu0 %v536, 16
    %v538 = vpop.permute.xlu0 %537
    %vm539 = vcmask 523392
    %s540 = scalar_lea.vmem %s1, 56
    %541 = vst.msk [vmem:[%s540] sm:$0xff] %vm539, %v538
    %s542 = scalar_lea.vmem [#allocation0], 323
    %v543 = vld [vmem:[%s542] ss:$8 sm:$0xf]
    %s544 = scalar_lea.vmem [#allocation0], 323
    %v545 = vld [vmem:[%s544] ss:$8 sm:$0xf0]
    %vm546 = vcmask 1047556
    %v547 = vsel %vm546, %v545, %v543
    %548 = vrot.lane.b32.xlu0 %v547, 16
    %v549 = vpop.permute.xlu0 %548
    %vm550 = vcmask 523392
    %s551 = scalar_lea.vmem %s1, 88
    %552 = vst.msk [vmem:[%s551] sm:$0xff] %vm550, %v549

// kernel: forward.1
$region0: #{forward.1}
  #allocation0 [shape = 'u32[]', space=smem, size = 0x4, offset = 0x4, fixed_abs, tag = 'smem constant byte address 0x4 - core index']
  #allocation1 [shape = 'u32[144,128]{1,0:T(1,128)}', space=vmem, size = 0x12000, scoped, tag = 'internal scratch']
  %s0 = inlined_call_operand.vmem [shape: f32[48,56], index: 0, kind: input, shape index: {}]
  %s1 = inlined_call_operand.vmem [shape: f32[48,192], index: 1, kind: input, shape index: {}]
  %s2 = inlined_call_operand.vmem [shape: f32[832,128], index: 2, kind: input, shape index: {}]
  %s3 = inlined_call_operand.vmem [shape: f32[16,128], index: 3, kind: output, shape index: {}]
  %s4 = sld [smem:[#allocation0]]
  $region22: #{forward.1} parent=0
    _
  %s6 = ssub.s32 1, %s4
  %s7 = scalar_select 0, %s6, %s4
  // Predicated region
  $region2: #{forward.1} parent=0 // pred_check
    _
  $region3: #{forward.1} parent=0 // pred_check_branch
    %9 = sbr.rel (0) target = $region5
  $region4: #{forward.1} parent=0 // pred_region
    _
  $region5: #{forward.1} parent=0 // pred_fallthru
    _
  // Predicated region
  $region6: #{forward.1} parent=0 // pred_check
    _
  $region7: #{forward.1} parent=0 // pred_check_branch
    %11 = sbr.rel (0) target = $region9
  $region8: #{forward.1} parent=0 // pred_region
    _
  $region9: #{forward.1} parent=0 // pred_fallthru
    _
  // Predicated region
  $region10: #{forward.1} parent=0 // pred_check
    _
  $region11: #{forward.1} parent=0 // pred_check_branch
    %13 = sbr.rel (0) target = $region13
  $region12: #{forward.1} parent=0 // pred_region
    _
  $region13: #{forward.1} parent=0 // pred_fallthru
    _
  %v14 = vld [vmem:[%s2] sm:$0xff]
  %v15 = vld [vmem:[%s2 + $0x8] sm:$0xff]
  %v16 = vld [vmem:[%s2 + $0x10] sm:$0xff]
  %v17 = vld [vmem:[%s2 + $0x18] sm:$0xff]
  %v18 = vld [vmem:[%s2 + $0x20] sm:$0xff]
  %v19 = vld [vmem:[%s2 + $0x28] sm:$0xff]
  %v20 = vld [vmem:[%s2 + $0x30] sm:$0xff]
  %v21 = vld [vmem:[%s2 + $0x38] sm:$0xff]
  %v22 = vld [vmem:[%s2 + $0x40] sm:$0xff]
  %v23 = vld [vmem:[%s2 + $0x48] sm:$0xff]
  %v24 = vld [vmem:[%s2 + $0x50] sm:$0xff]
  %v25 = vld [vmem:[%s2 + $0x58] sm:$0xff]
  %v26 = vld [vmem:[%s2 + $0x60] sm:$0xff]
  %v27 = vld [vmem:[%s2 + $0x68] sm:$0xff]
  %v28 = vld [vmem:[%s2 + $0x70] sm:$0xff]
  %v29 = vld [vmem:[%s2 + $0x78] sm:$0xff]
  %v30 = vld [vmem:[%s2 + $0x80] sm:$0xff]
  %v31 = vld [vmem:[%s2 + $0x88] sm:$0xff]
  %v32 = vld [vmem:[%s2 + $0x90] sm:$0xff]
  %v33 = vld [vmem:[%s2 + $0x98] sm:$0xff]
  %v34 = vld [vmem:[%s2 + $0xa0] sm:$0xff]
  %v35 = vld [vmem:[%s2 + $0xa8] sm:$0xff]
  %v36 = vld [vmem:[%s2 + $0xb0] sm:$0xff]
  %v37 = vld [vmem:[%s2 + $0xb8] sm:$0xff]
  %v38 = vld [vmem:[%s2 + $0xc0] sm:$0xff]
  %v39 = vld [vmem:[%s2 + $0xc8] sm:$0xff]
  %v40 = vld [vmem:[%s2 + $0xd0] sm:$0xff]
  %v41 = vld [vmem:[%s2 + $0xd8] sm:$0xff]
  %v42 = vld [vmem:[%s2 + $0xe0] sm:$0xff]
  %v43 = vld [vmem:[%s2 + $0xe8] sm:$0xff]
  %v44 = vld [vmem:[%s2 + $0xf0] sm:$0xff]
  %v45 = vld [vmem:[%s2 + $0xf8] sm:$0xff]
  %v46 = vld [vmem:[%s2 + $0x100] sm:$0xff]
  %v47 = vld [vmem:[%s2 + $0x108] sm:$0xff]
  %v48 = vld [vmem:[%s2 + $0x110] sm:$0xff]
  %v49 = vld [vmem:[%s2 + $0x118] sm:$0xff]
  %v50 = vld [vmem:[%s2 + $0x120] sm:$0xff]
  %v51 = vld [vmem:[%s2 + $0x338] sm:$0x1]
  %v52 = vld [vmem:[%s2 + $0x339] sm:$0x1]
  %v53 = vld [vmem:[%s2 + $0x33a] sm:$0x1]
  %v54 = vld [vmem:[%s2 + $0x33b] sm:$0x1]
  %v55 = vld [vmem:[%s0] sm:$0xff]
  %v56 = vld [vmem:[%s0 + $0x8] sm:$0xff]
  %v57 = vld [vmem:[%s0 + $0x10] sm:$0xff]
  %v58 = vld [vmem:[%s0 + $0x18] sm:$0xff]
  %v59 = vld [vmem:[%s0 + $0x20] sm:$0xff]
  %v60 = vld [vmem:[%s0 + $0x28] sm:$0xff]
  %vm61 = vcmask 457728
  %v63 = vsel %vm61, %v55, 0
  %v66 = vsel %vm61, %v56, 0
  %v69 = vsel %vm61, %v57, 0
  %v72 = vsel %vm61, %v58, 0
  %v75 = vsel %vm61, %v59, 0
  %v78 = vsel %vm61, %v60, 0
  %80 = vmatprep.subr.mxu0 0.0
  %81 = vmatpush1.msra.mxu0 %v14
  %82 = vmatprep.subr.mxu0 0.0
  %83 = vmatpush1.msra.mxu0 %v15
  %84 = vmatprep.subr.mxu0 0.0
  %85 = vmatpush1.msra.mxu0 %v16
  %86 = vmatprep.subr.mxu0 0.0
  %87 = vmatpush1.msra.mxu0 %v17
  %88 = vmatprep.subr.mxu0 0.0
  %89 = vmatpush1.msra.mxu0 %v18
  %90 = vmatprep.subr.mxu0 0.0
  %91 = vmatpush1.msra.mxu0 %v19
  %92 = vmatprep.subr.mxu0 0.0
  %93 = vmatpush1.msra.mxu0 %v20
  %94 = vmatprep.subr.mxu0 0.0
  %95 = vmatpush1.msra.mxu0 0.0
  %96 = vmatprep.subr.mxu0 0.0
  %97 = vmatpush1.msra.mxu0 0.0
  %98 = vmatprep.subr.mxu0 0.0
  %99 = vmatpush1.msra.mxu0 0.0
  %100 = vmatprep.subr.mxu0 0.0
  %101 = vmatpush1.msra.mxu0 0.0
  %102 = vmatprep.subr.mxu0 0.0
  %103 = vmatpush1.msra.mxu0 0.0
  %104 = vmatprep.subr.mxu0 0.0
  %105 = vmatpush1.msra.mxu0 0.0
  %106 = vmatprep.subr.mxu0 0.0
  %107 = vmatpush1.msra.mxu0 0.0
  %108 = vmatprep.subr.mxu0 0.0
  %109 = vmatpush1.msra.mxu0 0.0
  %110 = vmatprep.subr.mxu0 0.0
  %111 = vmatpush1.msra.mxu0 0.0
  %112 = vmatprep.subr.mxu0 0.0
  %113 = vmatpush1.msra.mxu0 0.0
  %114 = vmatprep.subr.mxu0 0.0
  %115 = vmatpush1.msra.mxu0 0.0
  %116 = vmatprep.subr.mxu0 0.0
  %117 = vmatpush1.msra.mxu0 0.0
  %118 = vmatprep.subr.mxu0 0.0
  %119 = vmatpush1.msra.mxu0 0.0
  %120 = vmatprep.subr.mxu0 0.0
  %121 = vmatpush1.msra.mxu0 0.0
  %122 = vmatprep.subr.mxu0 0.0
  %123 = vmatpush1.msra.mxu0 0.0
  %124 = vmatprep.subr.mxu0 0.0
  %125 = vmatpush1.msra.mxu0 0.0
  %126 = vmatprep.subr.mxu0 0.0
  %127 = vmatpush1.msra.mxu0 0.0
  %128 = vmatprep.subr.mxu0 0.0
  %129 = vmatpush1.msra.mxu0 0.0
  %130 = vmatprep.subr.mxu0 0.0
  %131 = vmatpush1.msra.mxu0 0.0
  %132 = vmatprep.subr.mxu0 0.0
  %133 = vmatpush1.msra.mxu0 0.0
  %134 = vmatprep.subr.mxu0 0.0
  %135 = vmatpush1.msra.mxu0 0.0
  %136 = vmatprep.subr.mxu0 0.0
  %137 = vmatpush1.msra.mxu0 0.0
  %138 = vmatprep.subr.mxu0 0.0
  %139 = vmatpush1.msra.mxu0 0.0
  %140 = vmatprep.subr.mxu0 0.0
  %141 = vmatpush1.msra.mxu0 0.0
  %142 = vmatprep.subr.mxu0 0.0
  %143 = vmatpush1.msra.mxu0 0.0
  %144 = vmatprep.mubr.f32.mxu0 0.0
  %145 = vmatmul.mubr.f32.gmra.mrb[0].mxu0 %v63
  %v146 = vpop.f32.mrb[0].mxu0
  %v147 = vadd.f32 0.0, %v146
  %v148 = vpop.f32.mrb[0].mxu0
  %149 = vmatprep.mubr.f32.mxu0 0.0
  %150 = vmatmul.mubr.f32.gmra.mrb[0].mxu0 %v66
  %v151 = vpop.f32.mrb[0].mxu0
  %v152 = vadd.f32 0.0, %v151
  %v153 = vpop.f32.mrb[0].mxu0
  %154 = vmatprep.mubr.f32.mxu0 0.0
  %155 = vmatmul.mubr.f32.gmra.mrb[0].mxu0 %v69
  %v156 = vpop.f32.mrb[0].mxu0
  %v157 = vadd.f32 0.0, %v156
  %v158 = vpop.f32.mrb[0].mxu0
  %159 = vmatprep.mubr.f32.mxu0 0.0
  %160 = vmatmul.mubr.f32.gmra.mrb[0].mxu0 %v72
  %v161 = vpop.f32.mrb[0].mxu0
  %v162 = vadd.f32 0.0, %v161
  %v163 = vpop.f32.mrb[0].mxu0
  %164 = vmatprep.mubr.f32.mxu0 0.0
  %165 = vmatmul.mubr.f32.gmra.mrb[0].mxu0 %v75
  %v166 = vpop.f32.mrb[0].mxu0
  %v167 = vadd.f32 0.0, %v166
  %v168 = vpop.f32.mrb[0].mxu0
  %169 = vmatprep.mubr.f32.mxu0 0.0
  %170 = vmatmul.mubr.f32.gmra.mrb[0].mxu0 %v78
  %v171 = vpop.f32.mrb[0].mxu0
  %v172 = vadd.f32 0.0, %v171
  %v173 = vpop.f32.mrb[0].mxu0
  %174 = vdwg.mxu0
  %vm175 = vcmask 261120
  %v176 = vsel %vm175, %v147, 0.0
  %177 = vadd.xlane.f32.xlu0 %v176
  %v178 = vpop.xlane.xlu0 %177
  %v179 = vsel %vm175, %v152, 0.0
  %180 = vadd.xlane.f32.xlu0 %v179
  %v181 = vpop.xlane.xlu0 %180
  %v182 = vsel %vm175, %v157, 0.0
  %183 = vadd.xlane.f32.xlu0 %v182
  %v184 = vpop.xlane.xlu0 %183
  %v185 = vsel %vm175, %v162, 0.0
  %186 = vadd.xlane.f32.xlu0 %v185
  %v187 = vpop.xlane.xlu0 %186
  %v188 = vsel %vm175, %v167, 0.0
  %189 = vadd.xlane.f32.xlu0 %v188
  %v190 = vpop.xlane.xlu0 %189
  %v191 = vsel %vm175, %v172, 0.0
  %192 = vadd.xlane.f32.xlu0 %v191
  %v193 = vpop.xlane.xlu0 %192
  %v194 = vrcp.pop 32.0
  %v195 = vmul.f32 %v178, %v194
  %v196 = vmul.f32 %v181, %v194
  %v197 = vmul.f32 %v184, %v194
  %v198 = vmul.f32 %v187, %v194
  %v199 = vmul.f32 %v190, %v194
  %v200 = vmul.f32 %v193, %v194
  %v201 = vsub.f32 %v147, %v195
  %v202 = vsub.f32 %v152, %v196
  %v203 = vsub.f32 %v157, %v197
  %v204 = vsub.f32 %v162, %v198
  %v205 = vsub.f32 %v167, %v199
  %v206 = vsub.f32 %v172, %v200
  %v207 = vmul.f32 %v201, %v201
  %v208 = vmul.f32 %v202, %v202
  %v209 = vmul.f32 %v203, %v203
  %v210 = vmul.f32 %v204, %v204
  %v211 = vmul.f32 %v205, %v205
  %v212 = vmul.f32 %v206, %v206
  %v213 = vsel %vm175, %v207, 0.0
  %214 = vadd.xlane.f32.xlu0 %v213
  %v215 = vpop.xlane.xlu0 %214
  %v216 = vsel %vm175, %v208, 0.0
  %217 = vadd.xlane.f32.xlu0 %v216
  %v218 = vpop.xlane.xlu0 %217
  %v219 = vsel %vm175, %v209, 0.0
  %220 = vadd.xlane.f32.xlu0 %v219
  %v221 = vpop.xlane.xlu0 %220
  %v222 = vsel %vm175, %v210, 0.0
  %223 = vadd.xlane.f32.xlu0 %v222
  %v224 = vpop.xlane.xlu0 %223
  %v225 = vsel %vm175, %v211, 0.0
  %226 = vadd.xlane.f32.xlu0 %v225
  %v227 = vpop.xlane.xlu0 %226
  %v228 = vsel %vm175, %v212, 0.0
  %229 = vadd.xlane.f32.xlu0 %v228
  %v230 = vpop.xlane.xlu0 %229
  %v231 = vmul.f32 %v215, %v194
  %v232 = vmul.f32 %v218, %v194
  %v233 = vmul.f32 %v221, %v194
  %v234 = vmul.f32 %v224, %v194
  %v235 = vmul.f32 %v227, %v194
  %v236 = vmul.f32 %v230, %v194
  %v237 = vadd.f32 %v231, 1e-05
  %v238 = vadd.f32 %v232, 1e-05
  %v239 = vadd.f32 %v233, 1e-05
  %v240 = vadd.f32 %v234, 1e-05
  %v241 = vadd.f32 %v235, 1e-05
  %v242 = vadd.f32 %v236, 1e-05
  %v243 = vrsqrt.pop %v237
  %v244 = vrsqrt.pop %v238
  %v245 = vrsqrt.pop %v239
  %v246 = vrsqrt.pop %v240
  %v247 = vrsqrt.pop %v241
  %v248 = vrsqrt.pop %v242
  %v249 = vmul.f32 %v201, %v243
  %v250 = vmul.f32 %v202, %v244
  %v251 = vmul.f32 %v203, %v245
  %v252 = vmul.f32 %v204, %v246
  %v253 = vmul.f32 %v205, %v247
  %v254 = vmul.f32 %v206, %v248
  %v255 = vlaneseq
  %v256 = vshrl.u32 %v255, 7
  %v257 = vsub.s32 0, %v256
  %v258 = vrot.slane %v51, %v257
  %v259 = vmul.f32 %v249, %v258
  %v260 = vmul.f32 %v250, %v258
  %v261 = vmul.f32 %v251, %v258
  %v262 = vmul.f32 %v252, %v258
  %v263 = vmul.f32 %v253, %v258
  %v264 = vmul.f32 %v254, %v258
  %v265 = vlaneseq
  %v266 = vshrl.u32 %v265, 7
  %v267 = vsub.s32 0, %v266
  %v268 = vrot.slane %v52, %v267
  %v269 = vadd.f32 %v259, %v268
  %v270 = vadd.f32 %v260, %v268
  %v271 = vadd.f32 %v261, %v268
  %v272 = vadd.f32 %v262, %v268
  %v273 = vadd.f32 %v263, %v268
  %v274 = vadd.f32 %v264, %v268
  %v275 = vadd.f32 %v269, %v21
  %v276 = vadd.f32 %v270, %v22
  %v277 = vadd.f32 %v271, %v23
  %v278 = vadd.f32 %v272, %v24
  %v279 = vadd.f32 %v273, %v25
  %v280 = vadd.f32 %v274, %v26
  %v281 = vld [vmem:[%s1] sm:$0xff]
  %v282 = vld [vmem:[%s1 + $0x8] sm:$0xff]
  %v283 = vld [vmem:[%s1 + $0x10] sm:$0xff]
  %v284 = vld [vmem:[%s1 + $0x18] sm:$0xff]
  %v285 = vld [vmem:[%s1 + $0x20] sm:$0xff]
  %v286 = vld [vmem:[%s1 + $0x28] sm:$0xff]
  %v287 = vld [vmem:[%s1 + $0x30] sm:$0xff]
  %v288 = vld [vmem:[%s1 + $0x38] sm:$0xff]
  %v289 = vld [vmem:[%s1 + $0x40] sm:$0xff]
  %v290 = vld [vmem:[%s1 + $0x48] sm:$0xff]
  %v291 = vld [vmem:[%s1 + $0x50] sm:$0xff]
  %v292 = vld [vmem:[%s1 + $0x58] sm:$0xff]
  %v293 = vld [vmem:[%s2 + $0x128] sm:$0xff]
  %v294 = vld [vmem:[%s2 + $0x130] sm:$0xff]
  %v295 = vld [vmem:[%s2 + $0x138] sm:$0xff]
  %v296 = vld [vmem:[%s2 + $0x140] sm:$0xff]
  %v297 = vld [vmem:[%s2 + $0x148] sm:$0xff]
  %v298 = vld [vmem:[%s2 + $0x150] sm:$0xff]
  %v299 = vld [vmem:[%s2 + $0x158] sm:$0xff]
  %v300 = vld [vmem:[%s2 + $0x160] sm:$0xff]
  %v301 = vld [vmem:[%s2 + $0x168] sm:$0xff]
  %v302 = vld [vmem:[%s2 + $0x170] sm:$0xff]
  %v303 = vld [vmem:[%s2 + $0x178] sm:$0xff]
  %v304 = vld [vmem:[%s2 + $0x180] sm:$0xff]
  %v305 = vld [vmem:[%s2 + $0x188] sm:$0xff]
  %v306 = vld [vmem:[%s2 + $0x190] sm:$0xff]
  %v307 = vld [vmem:[%s2 + $0x198] sm:$0xff]
  %v308 = vld [vmem:[%s2 + $0x1a0] sm:$0xff]
  %v309 = vld [vmem:[%s2 + $0x1a8] sm:$0xff]
  %v310 = vld [vmem:[%s2 + $0x1b0] sm:$0xff]
  %v311 = vld [vmem:[%s2 + $0x1b8] sm:$0xff]
  %v312 = vld [vmem:[%s2 + $0x1c0] sm:$0xff]
  %v313 = vld [vmem:[%s2 + $0x1c8] sm:$0xff]
  %v314 = vld [vmem:[%s2 + $0x1d0] sm:$0xff]
  %v315 = vld [vmem:[%s2 + $0x1d8] sm:$0xff]
  %v316 = vld [vmem:[%s2 + $0x1e0] sm:$0xff]
  %v317 = vld [vmem:[%s2 + $0x1e8] sm:$0xff]
  %v318 = vld [vmem:[%s2 + $0x1f0] sm:$0xff]
  %v319 = vld [vmem:[%s2 + $0x1f8] sm:$0xff]
  %v320 = vld [vmem:[%s2 + $0x200] sm:$0xff]
  %v321 = vld [vmem:[%s2 + $0x208] sm:$0x1]
  %v322 = vld [vmem:[%s2 + $0x209] sm:$0x1]
  %v323 = vld [vmem:[%s2 + $0x20a] sm:$0x1]
  %v324 = vld [vmem:[%s2 + $0x20b] sm:$0x1]
  %v325 = vld [vmem:[%s2 + $0x20c] sm:$0x1]
  %v326 = vld [vmem:[%s2 + $0x20d] sm:$0x1]
  %v327 = vld [vmem:[%s2 + $0x20e] sm:$0x1]
  %v328 = vld [vmem:[%s2 + $0x20f] sm:$0x1]
  %v329 = vsel %vm175, %v275, 0.0
  %330 = vadd.xlane.f32.xlu0 %v329
  %v331 = vpop.xlane.xlu0 %330
  %v332 = vsel %vm175, %v276, 0.0
  %333 = vadd.xlane.f32.xlu0 %v332
  %v334 = vpop.xlane.xlu0 %333
  %v335 = vsel %vm175, %v277, 0.0
  %336 = vadd.xlane.f32.xlu0 %v335
  %v337 = vpop.xlane.xlu0 %336
  %v338 = vsel %vm175, %v278, 0.0
  %339 = vadd.xlane.f32.xlu0 %v338
  %v340 = vpop.xlane.xlu0 %339
  %v341 = vsel %vm175, %v279, 0.0
  %342 = vadd.xlane.f32.xlu0 %v341
  %v343 = vpop.xlane.xlu0 %342
  %v344 = vsel %vm175, %v280, 0.0
  %345 = vadd.xlane.f32.xlu0 %v344
  %v346 = vpop.xlane.xlu0 %345
  %v347 = vmul.f32 %v331, %v194
  %v348 = vmul.f32 %v334, %v194
  %v349 = vmul.f32 %v337, %v194
  %v350 = vmul.f32 %v340, %v194
  %v351 = vmul.f32 %v343, %v194
  %v352 = vmul.f32 %v346, %v194
  %v353 = vsub.f32 %v275, %v347
  %v354 = vsub.f32 %v276, %v348
  %v355 = vsub.f32 %v277, %v349
  %v356 = vsub.f32 %v278, %v350
  %v357 = vsub.f32 %v279, %v351
  %v358 = vsub.f32 %v280, %v352
  %v359 = vmul.f32 %v353, %v353
  %v360 = vmul.f32 %v354, %v354
  %v361 = vmul.f32 %v355, %v355
  %v362 = vmul.f32 %v356, %v356
  %v363 = vmul.f32 %v357, %v357
  %v364 = vmul.f32 %v358, %v358
  %v365 = vsel %vm175, %v359, 0.0
  %366 = vadd.xlane.f32.xlu0 %v365
  %v367 = vpop.xlane.xlu0 %366
  %v368 = vsel %vm175, %v360, 0.0
  %369 = vadd.xlane.f32.xlu0 %v368
  %v370 = vpop.xlane.xlu0 %369
  %v371 = vsel %vm175, %v361, 0.0
  %372 = vadd.xlane.f32.xlu0 %v371
  %v373 = vpop.xlane.xlu0 %372
  %v374 = vsel %vm175, %v362, 0.0
  %375 = vadd.xlane.f32.xlu0 %v374
  %v376 = vpop.xlane.xlu0 %375
  %v377 = vsel %vm175, %v363, 0.0
  %378 = vadd.xlane.f32.xlu0 %v377
  %v379 = vpop.xlane.xlu0 %378
  %v380 = vsel %vm175, %v364, 0.0
  %381 = vadd.xlane.f32.xlu0 %v380
  %v382 = vpop.xlane.xlu0 %381
  %v383 = vmul.f32 %v367, %v194
  %v384 = vmul.f32 %v370, %v194
  %v385 = vmul.f32 %v373, %v194
  %v386 = vmul.f32 %v376, %v194
  %v387 = vmul.f32 %v379, %v194
  %v388 = vmul.f32 %v382, %v194
  %v389 = vadd.f32 %v383, 1e-05
  %v390 = vadd.f32 %v384, 1e-05
  %v391 = vadd.f32 %v385, 1e-05
  %v392 = vadd.f32 %v386, 1e-05
  %v393 = vadd.f32 %v387, 1e-05
  %v394 = vadd.f32 %v388, 1e-05
  %v395 = vrsqrt.pop %v389
  %v396 = vrsqrt.pop %v390
  %v397 = vrsqrt.pop %v391
  %v398 = vrsqrt.pop %v392
  %v399 = vrsqrt.pop %v393
  %v400 = vrsqrt.pop %v394
  %v401 = vmul.f32 %v353, %v395
  %v402 = vmul.f32 %v354, %v396
  %v403 = vmul.f32 %v355, %v397
  %v404 = vmul.f32 %v356, %v398
  %v405 = vmul.f32 %v357, %v399
  %v406 = vmul.f32 %v358, %v400
  %v407 = vlaneseq
  %v408 = vshrl.u32 %v407, 7
  %v409 = vsub.s32 0, %v408
  %v410 = vrot.slane %v325, %v409
  %v411 = vmul.f32 %v401, %v410
  %v412 = vmul.f32 %v402, %v410
  %v413 = vmul.f32 %v403, %v410
  %v414 = vmul.f32 %v404, %v410
  %v415 = vmul.f32 %v405, %v410
  %v416 = vmul.f32 %v406, %v410
  %v417 = vlaneseq
  %v418 = vshrl.u32 %v417, 7
  %v419 = vsub.s32 0, %v418
  %v420 = vrot.slane %v326, %v419
  %v421 = vadd.f32 %v411, %v420
  %v422 = vadd.f32 %v412, %v420
  %v423 = vadd.f32 %v413, %v420
  %v424 = vadd.f32 %v414, %v420
  %v425 = vadd.f32 %v415, %v420
  %v426 = vadd.f32 %v416, %v420
  %v427 = vlaneseq
  %v428 = vshrl.u32 %v427, 7
  %v429 = vsub.s32 0, %v428
  %v430 = vrot.slane %v321, %v429
  %v432 = vsel %vm175, %v421, 0
  %v435 = vsel %vm175, %v422, 0
  %v438 = vsel %vm175, %v423, 0
  %v441 = vsel %vm175, %v424, 0
  %v444 = vsel %vm175, %v425, 0
  %v447 = vsel %vm175, %v426, 0
  %449 = vmatprep.subr.mxu0 0.0
  %450 = vmatpush1.msra.mxu0 %v293
  %451 = vmatprep.subr.mxu0 0.0
  %452 = vmatpush1.msra.mxu0 %v294
  %453 = vmatprep.subr.mxu0 0.0
  %454 = vmatpush1.msra.mxu0 %v295
  %455 = vmatprep.subr.mxu0 0.0
  %456 = vmatpush1.msra.mxu0 %v296
  %457 = vmatprep.subr.mxu0 0.0
  %458 = vmatpush1.msra.mxu0 0.0
  %459 = vmatprep.subr.mxu0 0.0
  %460 = vmatpush1.msra.mxu0 0.0
  %461 = vmatprep.subr.mxu0 0.0
  %462 = vmatpush1.msra.mxu0 0.0
  %463 = vmatprep.subr.mxu0 0.0
  %464 = vmatpush1.msra.mxu0 0.0
  %465 = vmatprep.subr.mxu0 0.0
  %466 = vmatpush1.msra.mxu0 0.0
  %467 = vmatprep.subr.mxu0 0.0
  %468 = vmatpush1.msra.mxu0 0.0
  %469 = vmatprep.subr.mxu0 0.0
  %470 = vmatpush1.msra.mxu0 0.0
  %471 = vmatprep.subr.mxu0 0.0
  %472 = vmatpush1.msra.mxu0 0.0
  %473 = vmatprep.subr.mxu0 0.0
  %474 = vmatpush1.msra.mxu0 0.0
  %475 = vmatprep.subr.mxu0 0.0
  %476 = vmatpush1.msra.mxu0 0.0
  %477 = vmatprep.subr.mxu0 0.0
  %478 = vmatpush1.msra.mxu0 0.0
  %479 = vmatprep.subr.mxu0 0.0
  %480 = vmatpush1.msra.mxu0 0.0
  %481 = vmatprep.subr.mxu0 0.0
  %482 = vmatpush1.msra.mxu0 0.0
  %483 = vmatprep.subr.mxu0 0.0
  %484 = vmatpush1.msra.mxu0 0.0
  %485 = vmatprep.subr.mxu0 0.0
  %486 = vmatpush1.msra.mxu0 0.0
  %487 = vmatprep.subr.mxu0 0.0
  %488 = vmatpush1.msra.mxu0 0.0
  %489 = vmatprep.subr.mxu0 0.0
  %490 = vmatpush1.msra.mxu0 0.0
  %491 = vmatprep.subr.mxu0 0.0
  %492 = vmatpush1.msra.mxu0 0.0
  %493 = vmatprep.subr.mxu0 0.0
  %494 = vmatpush1.msra.mxu0 0.0
  %495 = vmatprep.subr.mxu0 0.0
  %496 = vmatpush1.msra.mxu0 0.0
  %497 = vmatprep.subr.mxu0 0.0
  %498 = vmatpush1.msra.mxu0 0.0
  %499 = vmatprep.subr.mxu0 0.0
  %500 = vmatpush1.msra.mxu0 0.0
  %501 = vmatprep.subr.mxu0 0.0
  %502 = vmatpush1.msra.mxu0 0.0
  %503 = vmatprep.subr.mxu0 0.0
  %504 = vmatpush1.msra.mxu0 0.0
  %505 = vmatprep.subr.mxu0 0.0
  %506 = vmatpush1.msra.mxu0 0.0
  %507 = vmatprep.subr.mxu0 0.0
  %508 = vmatpush1.msra.mxu0 0.0
  %509 = vmatprep.subr.mxu0 0.0
  %510 = vmatpush1.msra.mxu0 0.0
  %511 = vmatprep.subr.mxu0 0.0
  %512 = vmatpush1.msra.mxu0 0.0
  %513 = vmatprep.mubr.f32.mxu0 0.0
  %514 = vmatmul.mubr.f32.gmra.mrb[0].mxu0 %v432
  %v515 = vpop.f32.mrb[0].mxu0
  %v516 = vadd.f32 %v430, %v515
  %v517 = vpop.f32.mrb[0].mxu0
  %518 = vmatprep.mubr.f32.mxu0 0.0
  %519 = vmatmul.mubr.f32.gmra.mrb[0].mxu0 %v435
  %v520 = vpop.f32.mrb[0].mxu0
  %v521 = vadd.f32 %v430, %v520
  %v522 = vpop.f32.mrb[0].mxu0
  %523 = vmatprep.mubr.f32.mxu0 0.0
  %524 = vmatmul.mubr.f32.gmra.mrb[0].mxu0 %v438
  %v525 = vpop.f32.mrb[0].mxu0
  %v526 = vadd.f32 %v430, %v525
  %v527 = vpop.f32.mrb[0].mxu0
  %528 = vmatprep.mubr.f32.mxu0 0.0
  %529 = vmatmul.mubr.f32.gmra.mrb[0].mxu0 %v441
  %v530 = vpop.f32.mrb[0].mxu0
  %v531 = vadd.f32 %v430, %v530
  %v532 = vpop.f32.mrb[0].mxu0
  %533 = vmatprep.mubr.f32.mxu0 0.0
  %534 = vmatmul.mubr.f32.gmra.mrb[0].mxu0 %v444
  %v535 = vpop.f32.mrb[0].mxu0
  %v536 = vadd.f32 %v430, %v535
  %v537 = vpop.f32.mrb[0].mxu0
  %538 = vmatprep.mubr.f32.mxu0 0.0
  %539 = vmatmul.mubr.f32.gmra.mrb[0].mxu0 %v447
  %v540 = vpop.f32.mrb[0].mxu0
  %v541 = vadd.f32 %v430, %v540
  %v542 = vpop.f32.mrb[0].mxu0
  %543 = vdwg.mxu0
  %568 = vrot.lane.b32.xlu0 %v27, 32
  %v569 = vpop.permute.xlu0 %568
  %570 = vrot.lane.b32.xlu0 %v28, 32
  %v571 = vpop.permute.xlu0 %570
  %572 = vrot.lane.b32.xlu0 %v29, 32
  %v573 = vpop.permute.xlu0 %572
  %574 = vrot.lane.b32.xlu0 %v30, 32
  %v575 = vpop.permute.xlu0 %574
  %576 = vrot.lane.b32.xlu0 %v31, 32
  %v577 = vpop.permute.xlu0 %576
  %578 = vrot.lane.b32.xlu0 %v32, 32
  %v579 = vpop.permute.xlu0 %578
  %580 = vrot.lane.b32.xlu0 %v33, 32
  %v581 = vpop.permute.xlu0 %580
  %582 = vrot.lane.b32.xlu0 %v34, 32
  %v583 = vpop.permute.xlu0 %582
  %584 = vrot.lane.b32.xlu0 %v35, 32
  %v585 = vpop.permute.xlu0 %584
  %586 = vrot.lane.b32.xlu0 %v36, 32
  %v587 = vpop.permute.xlu0 %586
  %588 = vrot.lane.b32.xlu0 %v37, 32
  %v589 = vpop.permute.xlu0 %588
  %590 = vrot.lane.b32.xlu0 %v38, 32
  %v591 = vpop.permute.xlu0 %590
  %592 = vrot.lane.b32.xlu0 %v39, 32
  %v593 = vpop.permute.xlu0 %592
  %594 = vrot.lane.b32.xlu0 %v40, 32
  %v595 = vpop.permute.xlu0 %594
  %596 = vrot.lane.b32.xlu0 %v41, 32
  %v597 = vpop.permute.xlu0 %596
  %598 = vrot.lane.b32.xlu0 %v42, 32
  %v599 = vpop.permute.xlu0 %598
  %600 = vrot.lane.b32.xlu0 %v43, 32
  %v601 = vpop.permute.xlu0 %600
  %602 = vrot.lane.b32.xlu0 %v44, 32
  %v603 = vpop.permute.xlu0 %602
  %604 = vrot.lane.b32.xlu0 %v45, 32
  %v605 = vpop.permute.xlu0 %604
  %606 = vrot.lane.b32.xlu0 %v46, 32
  %v607 = vpop.permute.xlu0 %606
  %608 = vrot.lane.b32.xlu0 %v47, 32
  %v609 = vpop.permute.xlu0 %608
  %610 = vrot.lane.b32.xlu0 %v48, 32
  %v611 = vpop.permute.xlu0 %610
  %612 = vrot.lane.b32.xlu0 %v49, 32
  %v613 = vpop.permute.xlu0 %612
  %614 = vrot.lane.b32.xlu0 %v50, 32
  %v615 = vpop.permute.xlu0 %614
  %v640 = vmul.f32 %v516, %v569
  %v641 = vmul.f32 %v521, %v571
  %v642 = vmul.f32 %v526, %v573
  %v643 = vmul.f32 %v531, %v575
  %v644 = vmul.f32 %v536, %v577
  %v645 = vmul.f32 %v541, %v579
  %v646 = vmul.f32 %v516, %v581
  %v647 = vmul.f32 %v521, %v583
  %v648 = vmul.f32 %v526, %v585
  %v649 = vmul.f32 %v531, %v587
  %v650 = vmul.f32 %v536, %v589
  %v651 = vmul.f32 %v541, %v591
  %v652 = vmul.f32 %v516, %v593
  %v653 = vmul.f32 %v521, %v595
  %v654 = vmul.f32 %v526, %v597
  %v655 = vmul.f32 %v531, %v599
  %v656 = vmul.f32 %v536, %v601
  %v657 = vmul.f32 %v541, %v603
  %v658 = vmul.f32 %v516, %v605
  %v659 = vmul.f32 %v521, %v607
  %v660 = vmul.f32 %v526, %v609
  %v661 = vmul.f32 %v531, %v611
  %v662 = vmul.f32 %v536, %v613
  %v663 = vmul.f32 %v541, %v615
  %664 = vrot.lane.b32.xlu0 %v27, 64
  %v665 = vpop.permute.xlu0 %664
  %666 = vrot.lane.b32.xlu0 %v28, 64
  %v667 = vpop.permute.xlu0 %666
  %668 = vrot.lane.b32.xlu0 %v29, 64
  %v669 = vpop.permute.xlu0 %668
  %670 = vrot.lane.b32.xlu0 %v30, 64
  %v671 = vpop.permute.xlu0 %670
  %672 = vrot.lane.b32.xlu0 %v31, 64
  %v673 = vpop.permute.xlu0 %672
  %674 = vrot.lane.b32.xlu0 %v32, 64
  %v675 = vpop.permute.xlu0 %674
  %676 = vrot.lane.b32.xlu0 %v33, 64
  %v677 = vpop.permute.xlu0 %676
  %678 = vrot.lane.b32.xlu0 %v34, 64
  %v679 = vpop.permute.xlu0 %678
  %680 = vrot.lane.b32.xlu0 %v35, 64
  %v681 = vpop.permute.xlu0 %680
  %682 = vrot.lane.b32.xlu0 %v36, 64
  %v683 = vpop.permute.xlu0 %682
  %684 = vrot.lane.b32.xlu0 %v37, 64
  %v685 = vpop.permute.xlu0 %684
  %686 = vrot.lane.b32.xlu0 %v38, 64
  %v687 = vpop.permute.xlu0 %686
  %688 = vrot.lane.b32.xlu0 %v39, 64
  %v689 = vpop.permute.xlu0 %688
  %690 = vrot.lane.b32.xlu0 %v40, 64
  %v691 = vpop.permute.xlu0 %690
  %692 = vrot.lane.b32.xlu0 %v41, 64
  %v693 = vpop.permute.xlu0 %692
  %694 = vrot.lane.b32.xlu0 %v42, 64
  %v695 = vpop.permute.xlu0 %694
  %696 = vrot.lane.b32.xlu0 %v43, 64
  %v697 = vpop.permute.xlu0 %696
  %698 = vrot.lane.b32.xlu0 %v44, 64
  %v699 = vpop.permute.xlu0 %698
  %700 = vrot.lane.b32.xlu0 %v45, 64
  %v701 = vpop.permute.xlu0 %700
  %702 = vrot.lane.b32.xlu0 %v46, 64
  %v703 = vpop.permute.xlu0 %702
  %704 = vrot.lane.b32.xlu0 %v47, 64
  %v705 = vpop.permute.xlu0 %704
  %706 = vrot.lane.b32.xlu0 %v48, 64
  %v707 = vpop.permute.xlu0 %706
  %708 = vrot.lane.b32.xlu0 %v49, 64
  %v709 = vpop.permute.xlu0 %708
  %710 = vrot.lane.b32.xlu0 %v50, 64
  %v711 = vpop.permute.xlu0 %710
  %v736 = vmul.f32 %v516, %v665
  %v737 = vmul.f32 %v521, %v667
  %v738 = vmul.f32 %v526, %v669
  %v739 = vmul.f32 %v531, %v671
  %v740 = vmul.f32 %v536, %v673
  %v741 = vmul.f32 %v541, %v675
  %v742 = vmul.f32 %v516, %v677
  %v743 = vmul.f32 %v521, %v679
  %v744 = vmul.f32 %v526, %v681
  %v745 = vmul.f32 %v531, %v683
  %v746 = vmul.f32 %v536, %v685
  %v747 = vmul.f32 %v541, %v687
  %v748 = vmul.f32 %v516, %v689
  %v749 = vmul.f32 %v521, %v691
  %v750 = vmul.f32 %v526, %v693
  %v751 = vmul.f32 %v531, %v695
  %v752 = vmul.f32 %v536, %v697
  %v753 = vmul.f32 %v541, %v699
  %v754 = vmul.f32 %v516, %v701
  %v755 = vmul.f32 %v521, %v703
  %v756 = vmul.f32 %v526, %v705
  %v757 = vmul.f32 %v531, %v707
  %v758 = vmul.f32 %v536, %v709
  %v759 = vmul.f32 %v541, %v711
  %784 = vrot.lane.b32.xlu0 %v640, 96
  %v785 = vpop.permute.xlu0 %784
  %786 = vrot.lane.b32.xlu0 %v641, 96
  %v787 = vpop.permute.xlu0 %786
  %788 = vrot.lane.b32.xlu0 %v642, 96
  %v789 = vpop.permute.xlu0 %788
  %790 = vrot.lane.b32.xlu0 %v643, 96
  %v791 = vpop.permute.xlu0 %790
  %792 = vrot.lane.b32.xlu0 %v644, 96
  %v793 = vpop.permute.xlu0 %792
  %794 = vrot.lane.b32.xlu0 %v645, 96
  %v795 = vpop.permute.xlu0 %794
  %796 = vrot.lane.b32.xlu0 %v646, 96
  %v797 = vpop.permute.xlu0 %796
  %798 = vrot.lane.b32.xlu0 %v647, 96
  %v799 = vpop.permute.xlu0 %798
  %800 = vrot.lane.b32.xlu0 %v648, 96
  %v801 = vpop.permute.xlu0 %800
  %802 = vrot.lane.b32.xlu0 %v649, 96
  %v803 = vpop.permute.xlu0 %802
  %804 = vrot.lane.b32.xlu0 %v650, 96
  %v805 = vpop.permute.xlu0 %804
  %806 = vrot.lane.b32.xlu0 %v651, 96
  %v807 = vpop.permute.xlu0 %806
  %808 = vrot.lane.b32.xlu0 %v652, 96
  %v809 = vpop.permute.xlu0 %808
  %810 = vrot.lane.b32.xlu0 %v653, 96
  %v811 = vpop.permute.xlu0 %810
  %812 = vrot.lane.b32.xlu0 %v654, 96
  %v813 = vpop.permute.xlu0 %812
  %814 = vrot.lane.b32.xlu0 %v655, 96
  %v815 = vpop.permute.xlu0 %814
  %816 = vrot.lane.b32.xlu0 %v656, 96
  %v817 = vpop.permute.xlu0 %816
  %818 = vrot.lane.b32.xlu0 %v657, 96
  %v819 = vpop.permute.xlu0 %818
  %820 = vrot.lane.b32.xlu0 %v658, 96
  %v821 = vpop.permute.xlu0 %820
  %822 = vrot.lane.b32.xlu0 %v659, 96
  %v823 = vpop.permute.xlu0 %822
  %824 = vrot.lane.b32.xlu0 %v660, 96
  %v825 = vpop.permute.xlu0 %824
  %826 = vrot.lane.b32.xlu0 %v661, 96
  %v827 = vpop.permute.xlu0 %826
  %828 = vrot.lane.b32.xlu0 %v662, 96
  %v829 = vpop.permute.xlu0 %828
  %830 = vrot.lane.b32.xlu0 %v663, 96
  %v831 = vpop.permute.xlu0 %830
  %v833 = vsel %vm175, %v516, 0
  %v836 = vsel %vm175, %v521, 0
  %v839 = vsel %vm175, %v526, 0
  %v842 = vsel %vm175, %v531, 0
  %v845 = vsel %vm175, %v536, 0
  %v848 = vsel %vm175, %v541, 0
  %v850 = vsel %vm175, %v785, 0
  %v852 = vsel %vm175, %v787, 0
  %v854 = vsel %vm175, %v789, 0
  %v856 = vsel %vm175, %v791, 0
  %v858 = vsel %vm175, %v793, 0
  %v860 = vsel %vm175, %v795, 0
  %v862 = vsel %vm175, %v797, 0
  %v864 = vsel %vm175, %v799, 0
  %v866 = vsel %vm175, %v801, 0
  %v868 = vsel %vm175, %v803, 0
  %v870 = vsel %vm175, %v805, 0
  %v872 = vsel %vm175, %v807, 0
  %v874 = vsel %vm175, %v809, 0
  %v876 = vsel %vm175, %v811, 0
  %v878 = vsel %vm175, %v813, 0
  %v880 = vsel %vm175, %v815, 0
  %v882 = vsel %vm175, %v817, 0
  %v884 = vsel %vm175, %v819, 0
  %v886 = vsel %vm175, %v821, 0
  %v888 = vsel %vm175, %v823, 0
  %v890 = vsel %vm175, %v825, 0
  %v892 = vsel %vm175, %v827, 0
  %v894 = vsel %vm175, %v829, 0
  %v896 = vsel %vm175, %v831, 0
  %898 = vmatprep.subr.mxu0 0.0
  %899 = vmatpush1.xpose.msra.mxu0 %v850
  %900 = vmatprep.subr.mxu0 0.0
  %901 = vmatpush1.xpose.msra.mxu0 %v852
  %902 = vmatprep.subr.mxu0 0.0
  %903 = vmatpush1.xpose.msra.mxu0 %v854
  %904 = vmatprep.subr.mxu0 0.0
  %905 = vmatpush1.xpose.msra.mxu0 %v856
  %906 = vmatprep.subr.mxu0 0.0
  %907 = vmatpush1.xpose.msra.mxu0 %v858
  %908 = vmatprep.subr.mxu0 0.0
  %909 = vmatpush1.xpose.msra.mxu0 %v860
  %910 = vmatprep.subr.mxu0 0.0
  %911 = vmatpush1.xpose.msra.mxu0 %v862
  %912 = vmatprep.subr.mxu0 0.0
  %913 = vmatpush1.xpose.msra.mxu0 %v864
  %914 = vmatprep.subr.mxu0 0.0
  %915 = vmatpush1.xpose.msra.mxu0 %v866
  %916 = vmatprep.subr.mxu0 0.0
  %917 = vmatpush1.xpose.msra.mxu0 %v868
  %918 = vmatprep.subr.mxu0 0.0
  %919 = vmatpush1.xpose.msra.mxu0 %v870
  %920 = vmatprep.subr.mxu0 0.0
  %921 = vmatpush1.xpose.msra.mxu0 %v872
  %922 = vmatprep.subr.mxu0 0.0
  %923 = vmatpush1.xpose.msra.mxu0 %v874
  %924 = vmatprep.subr.mxu0 0.0
  %925 = vmatpush1.xpose.msra.mxu0 %v876
  %926 = vmatprep.subr.mxu0 0.0
  %927 = vmatpush1.xpose.msra.mxu0 %v878
  %928 = vmatprep.subr.mxu0 0.0
  %929 = vmatpush1.xpose.msra.mxu0 %v880
  %930 = vmatprep.subr.mxu0 0.0
  %931 = vmatpush1.xpose.msra.mxu0 %v882
  %932 = vmatprep.subr.mxu0 0.0
  %933 = vmatpush1.xpose.msra.mxu0 %v884
  %934 = vmatprep.subr.mxu0 0.0
  %935 = vmatpush1.xpose.msra.mxu0 %v886
  %936 = vmatprep.subr.mxu0 0.0
  %937 = vmatpush1.xpose.msra.mxu0 %v888
  %938 = vmatprep.subr.mxu0 0.0
  %939 = vmatpush1.xpose.msra.mxu0 %v890
  %940 = vmatprep.subr.mxu0 0.0
  %941 = vmatpush1.xpose.msra.mxu0 %v892
  %942 = vmatprep.subr.mxu0 0.0
  %943 = vmatpush1.xpose.msra.mxu0 %v894
  %944 = vmatprep.subr.mxu0 0.0
  %945 = vmatpush1.xpose.msra.mxu0 %v896
  %946 = vmatprep.subr.mxu0 0.0
  %947 = vmatpush1.xpose.msra.mxu0 0.0
  %948 = vmatprep.subr.mxu0 0.0
  %949 = vmatpush1.xpose.msra.mxu0 0.0
  %950 = vmatprep.subr.mxu0 0.0
  %951 = vmatpush1.xpose.msra.mxu0 0.0
  %952 = vmatprep.subr.mxu0 0.0
  %953 = vmatpush1.xpose.msra.mxu0 0.0
  %954 = vmatprep.subr.mxu0 0.0
  %955 = vmatpush1.xpose.msra.mxu0 0.0
  %956 = vmatprep.subr.mxu0 0.0
  %957 = vmatpush1.xpose.msra.mxu0 0.0
  %958 = vmatprep.subr.mxu0 0.0
  %959 = vmatpush1.xpose.msra.mxu0 0.0
  %960 = vmatprep.subr.mxu0 0.0
  %961 = vmatpush1.xpose.msra.mxu0 0.0
  %962 = vmatprep.mubr.f32.mxu0 0.0
  %963 = vmatmul.mubr.f32.gmra.mrb[0].mxu0 %v833
  %v964 = vpop.f32.mrb[0].mxu0
  %v965 = vadd.f32 0.0, %v964
  %v966 = vpop.f32.mrb[0].mxu0
  %v967 = vadd.f32 0.0, %v966
  %968 = vmatprep.mubr.f32.mxu0 0.0
  %969 = vmatmul.mubr.f32.gmra.mrb[0].mxu0 %v836
  %v970 = vpop.f32.mrb[0].mxu0
  %v971 = vadd.f32 0.0, %v970
  %v972 = vpop.f32.mrb[0].mxu0
  %v973 = vadd.f32 0.0, %v972
  %974 = vmatprep.mubr.f32.mxu0 0.0
  %975 = vmatmul.mubr.f32.gmra.mrb[0].mxu0 %v839
  %v976 = vpop.f32.mrb[0].mxu0
  %v977 = vadd.f32 0.0, %v976
  %v978 = vpop.f32.mrb[0].mxu0
  %v979 = vadd.f32 0.0, %v978
  %980 = vmatprep.mubr.f32.mxu0 0.0
  %981 = vmatmul.mubr.f32.gmra.mrb[0].mxu0 %v842
  %v982 = vpop.f32.mrb[0].mxu0
  %v983 = vadd.f32 0.0, %v982
  %v984 = vpop.f32.mrb[0].mxu0
  %v985 = vadd.f32 0.0, %v984
  %986 = vmatprep.mubr.f32.mxu0 0.0
  %987 = vmatmul.mubr.f32.gmra.mrb[0].mxu0 %v845
  %v988 = vpop.f32.mrb[0].mxu0
  %v989 = vadd.f32 0.0, %v988
  %v990 = vpop.f32.mrb[0].mxu0
  %v991 = vadd.f32 0.0, %v990
  %992 = vmatprep.mubr.f32.mxu0 0.0
  %993 = vmatmul.mubr.f32.gmra.mrb[0].mxu0 %v848
  %v994 = vpop.f32.mrb[0].mxu0
  %v995 = vadd.f32 0.0, %v994
  %v996 = vpop.f32.mrb[0].mxu0
  %v997 = vadd.f32 0.0, %v996
  %998 = vdwg.mxu0
  %v999 = vmul.f32 %v965, 0.35355338
  %v1000 = vmul.f32 %v967, 0.35355338
  %v1001 = vmul.f32 %v971, 0.35355338
  %v1002 = vmul.f32 %v973, 0.35355338
  %v1003 = vmul.f32 %v977, 0.35355338
  %v1004 = vmul.f32 %v979, 0.35355338
  %v1005 = vmul.f32 %v983, 0.35355338
  %v1006 = vmul.f32 %v985, 0.35355338
  %v1007 = vmul.f32 %v989, 0.35355338
  %v1008 = vmul.f32 %v991, 0.35355338
  %v1009 = vmul.f32 %v995, 0.35355338
  %v1010 = vmul.f32 %v997, 0.35355338
  %v1011 = vadd.f32 %v999, %v281
  %v1012 = vadd.f32 %v1000, %v282
  %v1013 = vadd.f32 %v1001, %v283
  %v1014 = vadd.f32 %v1002, %v284
  %v1015 = vadd.f32 %v1003, %v285
  %v1016 = vadd.f32 %v1004, %v286
  %v1017 = vadd.f32 %v1005, %v287
  %v1018 = vadd.f32 %v1006, %v288
  %v1019 = vadd.f32 %v1007, %v289
  %v1020 = vadd.f32 %v1008, %v290
  %v1021 = vadd.f32 %v1009, %v291
  %v1022 = vadd.f32 %v1010, %v292
  %vm1023 = vcmask 523264
  %v1024 = vsel %vm1023, %v1012, -inf
  %v1025 = vmax.f32 %v1011, %v1024
  %1026 = vmax.xlane.f32.xlu0 %v1025
  %v1027 = vpop.xlane.xlu0 %1026
  %v1028 = vsel %vm1023, %v1014, -inf
  %v1029 = vmax.f32 %v1013, %v1028
  %1030 = vmax.xlane.f32.xlu0 %v1029
  %v1031 = vpop.xlane.xlu0 %1030
  %v1032 = vsel %vm1023, %v1016, -inf
  %v1033 = vmax.f32 %v1015, %v1032
  %1034 = vmax.xlane.f32.xlu0 %v1033
  %v1035 = vpop.xlane.xlu0 %1034
  %v1036 = vsel %vm1023, %v1018, -inf
  %v1037 = vmax.f32 %v1017, %v1036
  %1038 = vmax.xlane.f32.xlu0 %v1037
  %v1039 = vpop.xlane.xlu0 %1038
  %v1040 = vsel %vm1023, %v1020, -inf
  %v1041 = vmax.f32 %v1019, %v1040
  %1042 = vmax.xlane.f32.xlu0 %v1041
  %v1043 = vpop.xlane.xlu0 %1042
  %v1044 = vsel %vm1023, %v1022, -inf
  %v1045 = vmax.f32 %v1021, %v1044
  %1046 = vmax.xlane.f32.xlu0 %v1045
  %v1047 = vpop.xlane.xlu0 %1046
  %v1048 = vsub.f32 %v1011, %v1027
  %v1049 = vsub.f32 %v1012, %v1027
  %v1050 = vsub.f32 %v1013, %v1031
  %v1051 = vsub.f32 %v1014, %v1031
  %v1052 = vsub.f32 %v1015, %v1035
  %v1053 = vsub.f32 %v1016, %v1035
  %v1054 = vsub.f32 %v1017, %v1039
  %v1055 = vsub.f32 %v1018, %v1039
  %v1056 = vsub.f32 %v1019, %v1043
  %v1057 = vsub.f32 %v1020, %v1043
  %v1058 = vsub.f32 %v1021, %v1047
  %v1059 = vsub.f32 %v1022, %v1047
  %v1060 = vmul.f32 %v1048, 1.442695
  %v1061 = vpow.pop %v1060
  %v1062 = vmul.f32 %v1049, 1.442695
  %v1063 = vpow.pop %v1062
  %v1064 = vmul.f32 %v1050, 1.442695
  %v1065 = vpow.pop %v1064
  %v1066 = vmul.f32 %v1051, 1.442695
  %v1067 = vpow.pop %v1066
  %v1068 = vmul.f32 %v1052, 1.442695
  %v1069 = vpow.pop %v1068
  %v1070 = vmul.f32 %v1053, 1.442695
  %v1071 = vpow.pop %v1070
  %v1072 = vmul.f32 %v1054, 1.442695
  %v1073 = vpow.pop %v1072
  %v1074 = vmul.f32 %v1055, 1.442695
  %v1075 = vpow.pop %v1074
  %v1076 = vmul.f32 %v1056, 1.442695
  %v1077 = vpow.pop %v1076
  %v1078 = vmul.f32 %v1057, 1.442695
  %v1079 = vpow.pop %v1078
  %v1080 = vmul.f32 %v1058, 1.442695
  %v1081 = vpow.pop %v1080
  %v1082 = vmul.f32 %v1059, 1.442695
  %v1083 = vpow.pop %v1082
  %v1085 = vsel %vm1023, %v1063, 0
  %v1088 = vsel %vm1023, %v1067, 0
  %v1091 = vsel %vm1023, %v1071, 0
  %v1094 = vsel %vm1023, %v1075, 0
  %v1097 = vsel %vm1023, %v1079, 0
  %v1100 = vsel %vm1023, %v1083, 0
  %1102 = vmatprep.subr.mxu0 0.0
  %1103 = vmatpush1.msra.mxu0 %v27
  %1104 = vmatprep.subr.mxu0 0.0
  %1105 = vmatpush1.msra.mxu0 %v28
  %1106 = vmatprep.subr.mxu0 0.0
  %1107 = vmatpush1.msra.mxu0 %v29
  %1108 = vmatprep.subr.mxu0 0.0
  %1109 = vmatpush1.msra.mxu0 %v30
  %1110 = vmatprep.subr.mxu0 0.0
  %1111 = vmatpush1.msra.mxu0 %v31
  %1112 = vmatprep.subr.mxu0 0.0
  %1113 = vmatpush1.msra.mxu0 %v32
  %1114 = vmatprep.subr.mxu0 0.0
  %1115 = vmatpush1.msra.mxu0 %v33
  %1116 = vmatprep.subr.mxu0 0.0
  %1117 = vmatpush1.msra.mxu0 %v34
  %1118 = vmatprep.subr.mxu0 0.0
  %1119 = vmatpush1.msra.mxu0 %v35
  %1120 = vmatprep.subr.mxu0 0.0
  %1121 = vmatpush1.msra.mxu0 %v36
  %1122 = vmatprep.subr.mxu0 0.0
  %1123 = vmatpush1.msra.mxu0 %v37
  %1124 = vmatprep.subr.mxu0 0.0
  %1125 = vmatpush1.msra.mxu0 %v38
  %1126 = vmatprep.subr.mxu0 0.0
  %1127 = vmatpush1.msra.mxu0 %v39
  %1128 = vmatprep.subr.mxu0 0.0
  %1129 = vmatpush1.msra.mxu0 %v40
  %1130 = vmatprep.subr.mxu0 0.0
  %1131 = vmatpush1.msra.mxu0 %v41
  %1132 = vmatprep.subr.mxu0 0.0
  %1133 = vmatpush1.msra.mxu0 %v42
  %1134 = vmatprep.subr.mxu0 0.0
  %1135 = vmatpush1.msra.mxu0 %v43
  %1136 = vmatprep.subr.mxu0 0.0
  %1137 = vmatpush1.msra.mxu0 %v44
  %1138 = vmatprep.subr.mxu0 0.0
  %1139 = vmatpush1.msra.mxu0 %v45
  %1140 = vmatprep.subr.mxu0 0.0
  %1141 = vmatpush1.msra.mxu0 %v46
  %1142 = vmatprep.subr.mxu0 0.0
  %1143 = vmatpush1.msra.mxu0 %v47
  %1144 = vmatprep.subr.mxu0 0.0
  %1145 = vmatpush1.msra.mxu0 %v48
  %1146 = vmatprep.subr.mxu0 0.0
  %1147 = vmatpush1.msra.mxu0 %v49
  %1148 = vmatprep.subr.mxu0 0.0
  %1149 = vmatpush1.msra.mxu0 %v50
  %1150 = vmatprep.subr.mxu0 0.0
  %1151 = vmatpush1.msra.mxu0 0.0
  %1152 = vmatprep.subr.mxu0 0.0
  %1153 = vmatpush1.msra.mxu0 0.0
  %1154 = vmatprep.subr.mxu0 0.0
  %1155 = vmatpush1.msra.mxu0 0.0
  %1156 = vmatprep.subr.mxu0 0.0
  %1157 = vmatpush1.msra.mxu0 0.0
  %1158 = vmatprep.subr.mxu0 0.0
  %1159 = vmatpush1.msra.mxu0 0.0
  %1160 = vmatprep.subr.mxu0 0.0
  %1161 = vmatpush1.msra.mxu0 0.0
  %1162 = vmatprep.subr.mxu0 0.0
  %1163 = vmatpush1.msra.mxu0 0.0
  %1164 = vmatprep.subr.mxu0 0.0
  %1165 = vmatpush1.msra.mxu0 0.0
  %1166 = vmatprep.mubr.f32.mxu0 %v1085
  %1167 = vmatmul.mubr.f32.gmra.mrb[0].mxu0 %v1061
  %v1168 = vpop.f32.mrb[0].mxu0
  %v1169 = vadd.f32 0.0, %v1168
  %v1170 = vpop.f32.mrb[0].mxu0
  %1171 = vmatprep.mubr.f32.mxu0 %v1088
  %1172 = vmatmul.mubr.f32.gmra.mrb[0].mxu0 %v1065
  %v1173 = vpop.f32.mrb[0].mxu0
  %v1174 = vadd.f32 0.0, %v1173
  %v1175 = vpop.f32.mrb[0].mxu0
  %1176 = vmatprep.mubr.f32.mxu0 %v1091
  %1177 = vmatmul.mubr.f32.gmra.mrb[0].mxu0 %v1069
  %v1178 = vpop.f32.mrb[0].mxu0
  %v1179 = vadd.f32 0.0, %v1178
  %v1180 = vpop.f32.mrb[0].mxu0
  %1181 = vmatprep.mubr.f32.mxu0 %v1094
  %1182 = vmatmul.mubr.f32.gmra.mrb[0].mxu0 %v1073
  %v1183 = vpop.f32.mrb[0].mxu0
  %v1184 = vadd.f32 0.0, %v1183
  %v1185 = vpop.f32.mrb[0].mxu0
  %1186 = vmatprep.mubr.f32.mxu0 %v1097
  %1187 = vmatmul.mubr.f32.gmra.mrb[0].mxu0 %v1077
  %v1188 = vpop.f32.mrb[0].mxu0
  %v1189 = vadd.f32 0.0, %v1188
  %v1190 = vpop.f32.mrb[0].mxu0
  %1191 = vmatprep.mubr.f32.mxu0 %v1100
  %1192 = vmatmul.mubr.f32.gmra.mrb[0].mxu0 %v1081
  %v1193 = vpop.f32.mrb[0].mxu0
  %v1194 = vadd.f32 0.0, %v1193
  %v1195 = vpop.f32.mrb[0].mxu0
  %1196 = vdwg.mxu0
  %1221 = vrot.lane.b32.xlu0 %v736, 64
  %v1222 = vpop.permute.xlu0 %1221
  %1223 = vrot.lane.b32.xlu0 %v737, 64
  %v1224 = vpop.permute.xlu0 %1223
  %1225 = vrot.lane.b32.xlu0 %v738, 64
  %v1226 = vpop.permute.xlu0 %1225
  %1227 = vrot.lane.b32.xlu0 %v739, 64
  %v1228 = vpop.permute.xlu0 %1227
  %1229 = vrot.lane.b32.xlu0 %v740, 64
  %v1230 = vpop.permute.xlu0 %1229
  %1231 = vrot.lane.b32.xlu0 %v741, 64
  %v1232 = vpop.permute.xlu0 %1231
  %1233 = vrot.lane.b32.xlu0 %v742, 64
  %v1234 = vpop.permute.xlu0 %1233
  %1235 = vrot.lane.b32.xlu0 %v743, 64
  %v1236 = vpop.permute.xlu0 %1235
  %1237 = vrot.lane.b32.xlu0 %v744, 64
  %v1238 = vpop.permute.xlu0 %1237
  %1239 = vrot.lane.b32.xlu0 %v745, 64
  %v1240 = vpop.permute.xlu0 %1239
  %1241 = vrot.lane.b32.xlu0 %v746, 64
  %v1242 = vpop.permute.xlu0 %1241
  %1243 = vrot.lane.b32.xlu0 %v747, 64
  %v1244 = vpop.permute.xlu0 %1243
  %1245 = vrot.lane.b32.xlu0 %v748, 64
  %v1246 = vpop.permute.xlu0 %1245
  %1247 = vrot.lane.b32.xlu0 %v749, 64
  %v1248 = vpop.permute.xlu0 %1247
  %1249 = vrot.lane.b32.xlu0 %v750, 64
  %v1250 = vpop.permute.xlu0 %1249
  %1251 = vrot.lane.b32.xlu0 %v751, 64
  %v1252 = vpop.permute.xlu0 %1251
  %1253 = vrot.lane.b32.xlu0 %v752, 64
  %v1254 = vpop.permute.xlu0 %1253
  %1255 = vrot.lane.b32.xlu0 %v753, 64
  %v1256 = vpop.permute.xlu0 %1255
  %1257 = vrot.lane.b32.xlu0 %v754, 64
  %v1258 = vpop.permute.xlu0 %1257
  %1259 = vrot.lane.b32.xlu0 %v755, 64
  %v1260 = vpop.permute.xlu0 %1259
  %1261 = vrot.lane.b32.xlu0 %v756, 64
  %v1262 = vpop.permute.xlu0 %1261
  %1263 = vrot.lane.b32.xlu0 %v757, 64
  %v1264 = vpop.permute.xlu0 %1263
  %1265 = vrot.lane.b32.xlu0 %v758, 64
  %v1266 = vpop.permute.xlu0 %1265
  %1267 = vrot.lane.b32.xlu0 %v759, 64
  %v1268 = vpop.permute.xlu0 %1267
  %1293 = vmatprep.subr.mxu0 0.0
  %1294 = vmatpush1.msra.mxu0 %v1222
  %1295 = vmatprep.subr.mxu0 0.0
  %1296 = vmatpush1.msra.mxu0 %v1224
  %1297 = vmatprep.subr.mxu0 0.0
  %1298 = vmatpush1.msra.mxu0 %v1226
  %1299 = vmatprep.subr.mxu0 0.0
  %1300 = vmatpush1.msra.mxu0 %v1228
  %1301 = vmatprep.subr.mxu0 0.0
  %1302 = vmatpush1.msra.mxu0 %v1230
  %1303 = vmatprep.subr.mxu0 0.0
  %1304 = vmatpush1.msra.mxu0 %v1232
  %1305 = vmatprep.subr.mxu0 0.0
  %1306 = vmatpush1.msra.mxu0 %v1234
  %1307 = vmatprep.subr.mxu0 0.0
  %1308 = vmatpush1.msra.mxu0 %v1236
  %1309 = vmatprep.subr.mxu0 0.0
  %1310 = vmatpush1.msra.mxu0 %v1238
  %1311 = vmatprep.subr.mxu0 0.0
  %1312 = vmatpush1.msra.mxu0 %v1240
  %1313 = vmatprep.subr.mxu0 0.0
  %1314 = vmatpush1.msra.mxu0 %v1242
  %1315 = vmatprep.subr.mxu0 0.0
  %1316 = vmatpush1.msra.mxu0 %v1244
  %1317 = vmatprep.subr.mxu0 0.0
  %1318 = vmatpush1.msra.mxu0 %v1246
  %1319 = vmatprep.subr.mxu0 0.0
  %1320 = vmatpush1.msra.mxu0 %v1248
  %1321 = vmatprep.subr.mxu0 0.0
  %1322 = vmatpush1.msra.mxu0 %v1250
  %1323 = vmatprep.subr.mxu0 0.0
  %1324 = vmatpush1.msra.mxu0 %v1252
  %1325 = vmatprep.subr.mxu0 0.0
  %1326 = vmatpush1.msra.mxu0 %v1254
  %1327 = vmatprep.subr.mxu0 0.0
  %1328 = vmatpush1.msra.mxu0 %v1256
  %1329 = vmatprep.subr.mxu0 0.0
  %1330 = vmatpush1.msra.mxu0 %v1258
  %1331 = vmatprep.subr.mxu0 0.0
  %1332 = vmatpush1.msra.mxu0 %v1260
  %1333 = vmatprep.subr.mxu0 0.0
  %1334 = vmatpush1.msra.mxu0 %v1262
  %1335 = vmatprep.subr.mxu0 0.0
  %1336 = vmatpush1.msra.mxu0 %v1264
  %1337 = vmatprep.subr.mxu0 0.0
  %1338 = vmatpush1.msra.mxu0 %v1266
  %1339 = vmatprep.subr.mxu0 0.0
  %1340 = vmatpush1.msra.mxu0 %v1268
  %1341 = vmatprep.subr.mxu0 0.0
  %1342 = vmatpush1.msra.mxu0 0.0
  %1343 = vmatprep.subr.mxu0 0.0
  %1344 = vmatpush1.msra.mxu0 0.0
  %1345 = vmatprep.subr.mxu0 0.0
  %1346 = vmatpush1.msra.mxu0 0.0
  %1347 = vmatprep.subr.mxu0 0.0
  %1348 = vmatpush1.msra.mxu0 0.0
  %1349 = vmatprep.subr.mxu0 0.0
  %1350 = vmatpush1.msra.mxu0 0.0
  %1351 = vmatprep.subr.mxu0 0.0
  %1352 = vmatpush1.msra.mxu0 0.0
  %1353 = vmatprep.subr.mxu0 0.0
  %1354 = vmatpush1.msra.mxu0 0.0
  %1355 = vmatprep.subr.mxu0 0.0
  %1356 = vmatpush1.msra.mxu0 0.0
  %1357 = vmatprep.mubr.f32.mxu0 %v1085
  %1358 = vmatmul.mubr.f32.gmra.mrb[0].mxu0 %v1061
  %v1359 = vpop.f32.mrb[0].mxu0
  %v1360 = vadd.f32 0.0, %v1359
  %v1361 = vpop.f32.mrb[0].mxu0
  %1362 = vmatprep.mubr.f32.mxu0 %v1088
  %1363 = vmatmul.mubr.f32.gmra.mrb[0].mxu0 %v1065
  %v1364 = vpop.f32.mrb[0].mxu0
  %v1365 = vadd.f32 0.0, %v1364
  %v1366 = vpop.f32.mrb[0].mxu0
  %1367 = vmatprep.mubr.f32.mxu0 %v1091
  %1368 = vmatmul.mubr.f32.gmra.mrb[0].mxu0 %v1069
  %v1369 = vpop.f32.mrb[0].mxu0
  %v1370 = vadd.f32 0.0, %v1369
  %v1371 = vpop.f32.mrb[0].mxu0
  %1372 = vmatprep.mubr.f32.mxu0 %v1094
  %1373 = vmatmul.mubr.f32.gmra.mrb[0].mxu0 %v1073
  %v1374 = vpop.f32.mrb[0].mxu0
  %v1375 = vadd.f32 0.0, %v1374
  %v1376 = vpop.f32.mrb[0].mxu0
  %1377 = vmatprep.mubr.f32.mxu0 %v1097
  %1378 = vmatmul.mubr.f32.gmra.mrb[0].mxu0 %v1077
  %v1379 = vpop.f32.mrb[0].mxu0
  %v1380 = vadd.f32 0.0, %v1379
  %v1381 = vpop.f32.mrb[0].mxu0
  %1382 = vmatprep.mubr.f32.mxu0 %v1100
  %1383 = vmatmul.mubr.f32.gmra.mrb[0].mxu0 %v1081
  %v1384 = vpop.f32.mrb[0].mxu0
  %v1385 = vadd.f32 0.0, %v1384
  %v1386 = vpop.f32.mrb[0].mxu0
  %1387 = vdwg.mxu0
  %v1388 = vrcp.pop %v1169
  %v1389 = vrcp.pop %v1174
  %v1390 = vrcp.pop %v1179
  %v1391 = vrcp.pop %v1184
  %v1392 = vrcp.pop %v1189
  %v1393 = vrcp.pop %v1194
  %v1394 = vmul.f32 %v1360, %v1388
  %v1395 = vmul.f32 %v1365, %v1389
  %v1396 = vmul.f32 %v1370, %v1390
  %v1397 = vmul.f32 %v1375, %v1391
  %v1398 = vmul.f32 %v1380, %v1392
  %v1399 = vmul.f32 %v1385, %v1393
  %v1401 = vsel %vm175, %v1394, 0
  %v1404 = vsel %vm175, %v1395, 0
  %v1407 = vsel %vm175, %v1396, 0
  %v1410 = vsel %vm175, %v1397, 0
  %v1413 = vsel %vm175, %v1398, 0
  %v1416 = vsel %vm175, %v1399, 0
  %1418 = vmatprep.subr.mxu0 0.0
  %1419 = vmatpush1.msra.mxu0 %v301
  %1420 = vmatprep.subr.mxu0 0.0
  %1421 = vmatpush1.msra.mxu0 %v302
  %1422 = vmatprep.subr.mxu0 0.0
  %1423 = vmatpush1.msra.mxu0 %v303
  %1424 = vmatprep.subr.mxu0 0.0
  %1425 = vmatpush1.msra.mxu0 %v304
  %1426 = vmatprep.subr.mxu0 0.0
  %1427 = vmatpush1.msra.mxu0 0.0
  %1428 = vmatprep.subr.mxu0 0.0
  %1429 = vmatpush1.msra.mxu0 0.0
  %1430 = vmatprep.subr.mxu0 0.0
  %1431 = vmatpush1.msra.mxu0 0.0
  %1432 = vmatprep.subr.mxu0 0.0
  %1433 = vmatpush1.msra.mxu0 0.0
  %1434 = vmatprep.subr.mxu0 0.0
  %1435 = vmatpush1.msra.mxu0 0.0
  %1436 = vmatprep.subr.mxu0 0.0
  %1437 = vmatpush1.msra.mxu0 0.0
  %1438 = vmatprep.subr.mxu0 0.0
  %1439 = vmatpush1.msra.mxu0 0.0
  %1440 = vmatprep.subr.mxu0 0.0
  %1441 = vmatpush1.msra.mxu0 0.0
  %1442 = vmatprep.subr.mxu0 0.0
  %1443 = vmatpush1.msra.mxu0 0.0
  %1444 = vmatprep.subr.mxu0 0.0
  %1445 = vmatpush1.msra.mxu0 0.0
  %1446 = vmatprep.subr.mxu0 0.0
  %1447 = vmatpush1.msra.mxu0 0.0
  %1448 = vmatprep.subr.mxu0 0.0
  %1449 = vmatpush1.msra.mxu0 0.0
  %1450 = vmatprep.subr.mxu0 0.0
  %1451 = vmatpush1.msra.mxu0 0.0
  %1452 = vmatprep.subr.mxu0 0.0
  %1453 = vmatpush1.msra.mxu0 0.0
  %1454 = vmatprep.subr.mxu0 0.0
  %1455 = vmatpush1.msra.mxu0 0.0
  %1456 = vmatprep.subr.mxu0 0.0
  %1457 = vmatpush1.msra.mxu0 0.0
  %1458 = vmatprep.subr.mxu0 0.0
  %1459 = vmatpush1.msra.mxu0 0.0
  %1460 = vmatprep.subr.mxu0 0.0
  %1461 = vmatpush1.msra.mxu0 0.0
  %1462 = vmatprep.subr.mxu0 0.0
  %1463 = vmatpush1.msra.mxu0 0.0
  %1464 = vmatprep.subr.mxu0 0.0
  %1465 = vmatpush1.msra.mxu0 0.0
  %1466 = vmatprep.subr.mxu0 0.0
  %1467 = vmatpush1.msra.mxu0 0.0
  %1468 = vmatprep.subr.mxu0 0.0
  %1469 = vmatpush1.msra.mxu0 0.0
  %1470 = vmatprep.subr.mxu0 0.0
  %1471 = vmatpush1.msra.mxu0 0.0
  %1472 = vmatprep.subr.mxu0 0.0
  %1473 = vmatpush1.msra.mxu0 0.0
  %1474 = vmatprep.subr.mxu0 0.0
  %1475 = vmatpush1.msra.mxu0 0.0
  %1476 = vmatprep.subr.mxu0 0.0
  %1477 = vmatpush1.msra.mxu0 0.0
  %1478 = vmatprep.subr.mxu0 0.0
  %1479 = vmatpush1.msra.mxu0 0.0
  %1480 = vmatprep.subr.mxu0 0.0
  %1481 = vmatpush1.msra.mxu0 0.0
  %1482 = vmatprep.mubr.f32.mxu0 0.0
  %1483 = vmatmul.mubr.f32.gmra.mrb[0].mxu0 %v1401
  %v1484 = vpop.f32.mrb[0].mxu0
  %v1485 = vadd.f32 0.0, %v1484
  %v1486 = vpop.f32.mrb[0].mxu0
  %1487 = vmatprep.mubr.f32.mxu0 0.0
  %1488 = vmatmul.mubr.f32.gmra.mrb[0].mxu0 %v1404
  %v1489 = vpop.f32.mrb[0].mxu0
  %v1490 = vadd.f32 0.0, %v1489
  %v1491 = vpop.f32.mrb[0].mxu0
  %1492 = vmatprep.mubr.f32.mxu0 0.0
  %1493 = vmatmul.mubr.f32.gmra.mrb[0].mxu0 %v1407
  %v1494 = vpop.f32.mrb[0].mxu0
  %v1495 = vadd.f32 0.0, %v1494
  %v1496 = vpop.f32.mrb[0].mxu0
  %1497 = vmatprep.mubr.f32.mxu0 0.0
  %1498 = vmatmul.mubr.f32.gmra.mrb[0].mxu0 %v1410
  %v1499 = vpop.f32.mrb[0].mxu0
  %v1500 = vadd.f32 0.0, %v1499
  %v1501 = vpop.f32.mrb[0].mxu0
  %1502 = vmatprep.mubr.f32.mxu0 0.0
  %1503 = vmatmul.mubr.f32.gmra.mrb[0].mxu0 %v1413
  %v1504 = vpop.f32.mrb[0].mxu0
  %v1505 = vadd.f32 0.0, %v1504
  %v1506 = vpop.f32.mrb[0].mxu0
  %1507 = vmatprep.mubr.f32.mxu0 0.0
  %1508 = vmatmul.mubr.f32.gmra.mrb[0].mxu0 %v1416
  %v1509 = vpop.f32.mrb[0].mxu0
  %v1510 = vadd.f32 0.0, %v1509
  %v1511 = vpop.f32.mrb[0].mxu0
  %1512 = vdwg.mxu0
  %v1513 = vadd.f32 %v275, %v1485
  %v1514 = vadd.f32 %v276, %v1490
  %v1515 = vadd.f32 %v277, %v1495
  %v1516 = vadd.f32 %v278, %v1500
  %v1517 = vadd.f32 %v279, %v1505
  %v1518 = vadd.f32 %v280, %v1510
  %v1519 = vlaneseq
  %v1520 = vshrl.u32 %v1519, 7
  %v1521 = vsub.s32 0, %v1520
  %v1522 = vrot.slane %v323, %v1521
  %v1523 = vadd.f32 %v1513, %v1522
  %v1524 = vadd.f32 %v1514, %v1522
  %v1525 = vadd.f32 %v1515, %v1522
  %v1526 = vadd.f32 %v1516, %v1522
  %v1527 = vadd.f32 %v1517, %v1522
  %v1528 = vadd.f32 %v1518, %v1522
  %v1529 = vsel %vm175, %v1523, 0.0
  %1530 = vadd.xlane.f32.xlu0 %v1529
  %v1531 = vpop.xlane.xlu0 %1530
  %v1532 = vsel %vm175, %v1524, 0.0
  %1533 = vadd.xlane.f32.xlu0 %v1532
  %v1534 = vpop.xlane.xlu0 %1533
  %v1535 = vsel %vm175, %v1525, 0.0
  %1536 = vadd.xlane.f32.xlu0 %v1535
  %v1537 = vpop.xlane.xlu0 %1536
  %v1538 = vsel %vm175, %v1526, 0.0
  %1539 = vadd.xlane.f32.xlu0 %v1538
  %v1540 = vpop.xlane.xlu0 %1539
  %v1541 = vsel %vm175, %v1527, 0.0
  %1542 = vadd.xlane.f32.xlu0 %v1541
  %v1543 = vpop.xlane.xlu0 %1542
  %v1544 = vsel %vm175, %v1528, 0.0
  %1545 = vadd.xlane.f32.xlu0 %v1544
  %v1546 = vpop.xlane.xlu0 %1545
  %v1547 = vmul.f32 %v1531, %v194
  %v1548 = vmul.f32 %v1534, %v194
  %v1549 = vmul.f32 %v1537, %v194
  %v1550 = vmul.f32 %v1540, %v194
  %v1551 = vmul.f32 %v1543, %v194
  %v1552 = vmul.f32 %v1546, %v194
  %v1553 = vsub.f32 %v1523, %v1547
  %v1554 = vsub.f32 %v1524, %v1548
  %v1555 = vsub.f32 %v1525, %v1549
  %v1556 = vsub.f32 %v1526, %v1550
  %v1557 = vsub.f32 %v1527, %v1551
  %v1558 = vsub.f32 %v1528, %v1552
  %v1559 = vmul.f32 %v1553, %v1553
  %v1560 = vmul.f32 %v1554, %v1554
  %v1561 = vmul.f32 %v1555, %v1555
  %v1562 = vmul.f32 %v1556, %v1556
  %v1563 = vmul.f32 %v1557, %v1557
  %v1564 = vmul.f32 %v1558, %v1558
  %v1565 = vsel %vm175, %v1559, 0.0
  %1566 = vadd.xlane.f32.xlu0 %v1565
  %v1567 = vpop.xlane.xlu0 %1566
  %v1568 = vsel %vm175, %v1560, 0.0
  %1569 = vadd.xlane.f32.xlu0 %v1568
  %v1570 = vpop.xlane.xlu0 %1569
  %v1571 = vsel %vm175, %v1561, 0.0
  %1572 = vadd.xlane.f32.xlu0 %v1571
  %v1573 = vpop.xlane.xlu0 %1572
  %v1574 = vsel %vm175, %v1562, 0.0
  %1575 = vadd.xlane.f32.xlu0 %v1574
  %v1576 = vpop.xlane.xlu0 %1575
  %v1577 = vsel %vm175, %v1563, 0.0
  %1578 = vadd.xlane.f32.xlu0 %v1577
  %v1579 = vpop.xlane.xlu0 %1578
  %v1580 = vsel %vm175, %v1564, 0.0
  %1581 = vadd.xlane.f32.xlu0 %v1580
  %v1582 = vpop.xlane.xlu0 %1581
  %v1583 = vmul.f32 %v1567, %v194
  %v1584 = vmul.f32 %v1570, %v194
  %v1585 = vmul.f32 %v1573, %v194
  %v1586 = vmul.f32 %v1576, %v194
  %v1587 = vmul.f32 %v1579, %v194
  %v1588 = vmul.f32 %v1582, %v194
  %v1589 = vadd.f32 %v1583, 1e-05
  %v1590 = vadd.f32 %v1584, 1e-05
  %v1591 = vadd.f32 %v1585, 1e-05
  %v1592 = vadd.f32 %v1586, 1e-05
  %v1593 = vadd.f32 %v1587, 1e-05
  %v1594 = vadd.f32 %v1588, 1e-05
  %v1595 = vrsqrt.pop %v1589
  %v1596 = vrsqrt.pop %v1590
  %v1597 = vrsqrt.pop %v1591
  %v1598 = vrsqrt.pop %v1592
  %v1599 = vrsqrt.pop %v1593
  %v1600 = vrsqrt.pop %v1594
  %v1601 = vmul.f32 %v1553, %v1595
  %v1602 = vmul.f32 %v1554, %v1596
  %v1603 = vmul.f32 %v1555, %v1597
  %v1604 = vmul.f32 %v1556, %v1598
  %v1605 = vmul.f32 %v1557, %v1599
  %v1606 = vmul.f32 %v1558, %v1600
  %v1607 = vlaneseq
  %v1608 = vshrl.u32 %v1607, 7
  %v1609 = vsub.s32 0, %v1608
  %v1610 = vrot.slane %v327, %v1609
  %v1611 = vmul.f32 %v1601, %v1610
  %v1612 = vmul.f32 %v1602, %v1610
  %v1613 = vmul.f32 %v1603, %v1610
  %v1614 = vmul.f32 %v1604, %v1610
  %v1615 = vmul.f32 %v1605, %v1610
  %v1616 = vmul.f32 %v1606, %v1610
  %v1617 = vlaneseq
  %v1618 = vshrl.u32 %v1617, 7
  %v1619 = vsub.s32 0, %v1618
  %v1620 = vrot.slane %v328, %v1619
  %v1621 = vadd.f32 %v1611, %v1620
  %v1622 = vadd.f32 %v1612, %v1620
  %v1623 = vadd.f32 %v1613, %v1620
  %v1624 = vadd.f32 %v1614, %v1620
  %v1625 = vadd.f32 %v1615, %v1620
  %v1626 = vadd.f32 %v1616, %v1620
  %v1627 = vlaneseq
  %v1628 = vshrl.u32 %v1627, 7
  %v1629 = vsub.s32 0, %v1628
  %v1630 = vrot.slane %v322, %v1629
  %v1632 = vsel %vm175, %v1621, 0
  %v1635 = vsel %vm175, %v1622, 0
  %v1638 = vsel %vm175, %v1623, 0
  %v1641 = vsel %vm175, %v1624, 0
  %v1644 = vsel %vm175, %v1625, 0
  %v1647 = vsel %vm175, %v1626, 0
  %1649 = vmatprep.subr.mxu0 0.0
  %1650 = vmatpush1.msra.mxu0 %v297
  %1651 = vmatprep.subr.mxu0 0.0
  %1652 = vmatpush1.msra.mxu0 %v298
  %1653 = vmatprep.subr.mxu0 0.0
  %1654 = vmatpush1.msra.mxu0 %v299
  %1655 = vmatprep.subr.mxu0 0.0
  %1656 = vmatpush1.msra.mxu0 %v300
  %1657 = vmatprep.subr.mxu0 0.0
  %1658 = vmatpush1.msra.mxu0 0.0
  %1659 = vmatprep.subr.mxu0 0.0
  %1660 = vmatpush1.msra.mxu0 0.0
  %1661 = vmatprep.subr.mxu0 0.0
  %1662 = vmatpush1.msra.mxu0 0.0
  %1663 = vmatprep.subr.mxu0 0.0
  %1664 = vmatpush1.msra.mxu0 0.0
  %1665 = vmatprep.subr.mxu0 0.0
  %1666 = vmatpush1.msra.mxu0 0.0
  %1667 = vmatprep.subr.mxu0 0.0
  %1668 = vmatpush1.msra.mxu0 0.0
  %1669 = vmatprep.subr.mxu0 0.0
  %1670 = vmatpush1.msra.mxu0 0.0
  %1671 = vmatprep.subr.mxu0 0.0
  %1672 = vmatpush1.msra.mxu0 0.0
  %1673 = vmatprep.subr.mxu0 0.0
  %1674 = vmatpush1.msra.mxu0 0.0
  %1675 = vmatprep.subr.mxu0 0.0
  %1676 = vmatpush1.msra.mxu0 0.0
  %1677 = vmatprep.subr.mxu0 0.0
  %1678 = vmatpush1.msra.mxu0 0.0
  %1679 = vmatprep.subr.mxu0 0.0
  %1680 = vmatpush1.msra.mxu0 0.0
  %1681 = vmatprep.subr.mxu0 0.0
  %1682 = vmatpush1.msra.mxu0 0.0
  %1683 = vmatprep.subr.mxu0 0.0
  %1684 = vmatpush1.msra.mxu0 0.0
  %1685 = vmatprep.subr.mxu0 0.0
  %1686 = vmatpush1.msra.mxu0 0.0
  %1687 = vmatprep.subr.mxu0 0.0
  %1688 = vmatpush1.msra.mxu0 0.0
  %1689 = vmatprep.subr.mxu0 0.0
  %1690 = vmatpush1.msra.mxu0 0.0
  %1691 = vmatprep.subr.mxu0 0.0
  %1692 = vmatpush1.msra.mxu0 0.0
  %1693 = vmatprep.subr.mxu0 0.0
  %1694 = vmatpush1.msra.mxu0 0.0
  %1695 = vmatprep.subr.mxu0 0.0
  %1696 = vmatpush1.msra.mxu0 0.0
  %1697 = vmatprep.subr.mxu0 0.0
  %1698 = vmatpush1.msra.mxu0 0.0
  %1699 = vmatprep.subr.mxu0 0.0
  %1700 = vmatpush1.msra.mxu0 0.0
  %1701 = vmatprep.subr.mxu0 0.0
  %1702 = vmatpush1.msra.mxu0 0.0
  %1703 = vmatprep.subr.mxu0 0.0
  %1704 = vmatpush1.msra.mxu0 0.0
  %1705 = vmatprep.subr.mxu0 0.0
  %1706 = vmatpush1.msra.mxu0 0.0
  %1707 = vmatprep.subr.mxu0 0.0
  %1708 = vmatpush1.msra.mxu0 0.0
  %1709 = vmatprep.subr.mxu0 0.0
  %1710 = vmatpush1.msra.mxu0 0.0
  %1711 = vmatprep.subr.mxu0 0.0
  %1712 = vmatpush1.msra.mxu0 0.0
  %1713 = vmatprep.mubr.f32.mxu0 0.0
  %1714 = vmatmul.mubr.f32.gmra.mrb[0].mxu0 %v1632
  %v1715 = vpop.f32.mrb[0].mxu0
  %v1716 = vadd.f32 %v1630, %v1715
  %v1717 = vpop.f32.mrb[0].mxu0
  %1718 = vmatprep.mubr.f32.mxu0 0.0
  %1719 = vmatmul.mubr.f32.gmra.mrb[0].mxu0 %v1635
  %v1720 = vpop.f32.mrb[0].mxu0
  %v1721 = vadd.f32 %v1630, %v1720
  %v1722 = vpop.f32.mrb[0].mxu0
  %1723 = vmatprep.mubr.f32.mxu0 0.0
  %1724 = vmatmul.mubr.f32.gmra.mrb[0].mxu0 %v1638
  %v1725 = vpop.f32.mrb[0].mxu0
  %v1726 = vadd.f32 %v1630, %v1725
  %v1727 = vpop.f32.mrb[0].mxu0
  %1728 = vmatprep.mubr.f32.mxu0 0.0
  %1729 = vmatmul.mubr.f32.gmra.mrb[0].mxu0 %v1641
  %v1730 = vpop.f32.mrb[0].mxu0
  %v1731 = vadd.f32 %v1630, %v1730
  %v1732 = vpop.f32.mrb[0].mxu0
  %1733 = vmatprep.mubr.f32.mxu0 0.0
  %1734 = vmatmul.mubr.f32.gmra.mrb[0].mxu0 %v1644
  %v1735 = vpop.f32.mrb[0].mxu0
  %v1736 = vadd.f32 %v1630, %v1735
  %v1737 = vpop.f32.mrb[0].mxu0
  %1738 = vmatprep.mubr.f32.mxu0 0.0
  %1739 = vmatmul.mubr.f32.gmra.mrb[0].mxu0 %v1647
  %v1740 = vpop.f32.mrb[0].mxu0
  %v1741 = vadd.f32 %v1630, %v1740
  %v1742 = vpop.f32.mrb[0].mxu0
  %1743 = vdwg.mxu0
  %v1744 = vmul.f32 %v1716, 0.5
  %v1745 = vmul.f32 %v1721, 0.5
  %v1746 = vmul.f32 %v1726, 0.5
  %v1747 = vmul.f32 %v1731, 0.5
  %v1748 = vmul.f32 %v1736, 0.5
  %v1749 = vmul.f32 %v1741, 0.5
  %v1750 = vmul.f32 %v1716, %v1716
  %v1751 = vmul.f32 %v1721, %v1721
  %v1752 = vmul.f32 %v1726, %v1726
  %v1753 = vmul.f32 %v1731, %v1731
  %v1754 = vmul.f32 %v1736, %v1736
  %v1755 = vmul.f32 %v1741, %v1741
  %v1756 = vmul.f32 %v1716, %v1750
  %v1757 = vmul.f32 %v1721, %v1751
  %v1758 = vmul.f32 %v1726, %v1752
  %v1759 = vmul.f32 %v1731, %v1753
  %v1760 = vmul.f32 %v1736, %v1754
  %v1761 = vmul.f32 %v1741, %v1755
  %v1762 = vmul.f32 %v1756, 0.044715
  %v1763 = vmul.f32 %v1757, 0.044715
  %v1764 = vmul.f32 %v1758, 0.044715
  %v1765 = vmul.f32 %v1759, 0.044715
  %v1766 = vmul.f32 %v1760, 0.044715
  %v1767 = vmul.f32 %v1761, 0.044715
  %v1768 = vadd.f32 %v1716, %v1762
  %v1769 = vadd.f32 %v1721, %v1763
  %v1770 = vadd.f32 %v1726, %v1764
  %v1771 = vadd.f32 %v1731, %v1765
  %v1772 = vadd.f32 %v1736, %v1766
  %v1773 = vadd.f32 %v1741, %v1767
  %v1774 = vmul.f32 %v1768, 0.7978846
  %v1775 = vmul.f32 %v1769, 0.7978846
  %v1776 = vmul.f32 %v1770, 0.7978846
  %v1777 = vmul.f32 %v1771, 0.7978846
  %v1778 = vmul.f32 %v1772, 0.7978846
  %v1779 = vmul.f32 %v1773, 0.7978846
  %v1780 = vtanh.pop %v1774
  %v1781 = vtanh.pop %v1775
  %v1782 = vtanh.pop %v1776
  %v1783 = vtanh.pop %v1777
  %v1784 = vtanh.pop %v1778
  %v1785 = vtanh.pop %v1779
  %v1786 = vadd.f32 %v1780, 1.0
  %v1787 = vadd.f32 %v1781, 1.0
  %v1788 = vadd.f32 %v1782, 1.0
  %v1789 = vadd.f32 %v1783, 1.0
  %v1790 = vadd.f32 %v1784, 1.0
  %v1791 = vadd.f32 %v1785, 1.0
  %v1792 = vmul.f32 %v1744, %v1786
  %v1793 = vmul.f32 %v1745, %v1787
  %v1794 = vmul.f32 %v1746, %v1788
  %v1795 = vmul.f32 %v1747, %v1789
  %v1796 = vmul.f32 %v1748, %v1790
  %v1797 = vmul.f32 %v1749, %v1791
  %1798 = vmatprep.subr.mxu0 0.0
  %1799 = vmatpush1.msra.mxu0 %v305
  %1800 = vmatprep.subr.mxu0 0.0
  %1801 = vmatpush1.msra.mxu0 %v306
  %1802 = vmatprep.subr.mxu0 0.0
  %1803 = vmatpush1.msra.mxu0 %v307
  %1804 = vmatprep.subr.mxu0 0.0
  %1805 = vmatpush1.msra.mxu0 %v308
  %1806 = vmatprep.subr.mxu0 0.0
  %1807 = vmatpush1.msra.mxu0 %v309
  %1808 = vmatprep.subr.mxu0 0.0
  %1809 = vmatpush1.msra.mxu0 %v310
  %1810 = vmatprep.subr.mxu0 0.0
  %1811 = vmatpush1.msra.mxu0 %v311
  %1812 = vmatprep.subr.mxu0 0.0
  %1813 = vmatpush1.msra.mxu0 %v312
  %1814 = vmatprep.subr.mxu0 0.0
  %1815 = vmatpush1.msra.mxu0 %v313
  %1816 = vmatprep.subr.mxu0 0.0
  %1817 = vmatpush1.msra.mxu0 %v314
  %1818 = vmatprep.subr.mxu0 0.0
  %1819 = vmatpush1.msra.mxu0 %v315
  %1820 = vmatprep.subr.mxu0 0.0
  %1821 = vmatpush1.msra.mxu0 %v316
  %1822 = vmatprep.subr.mxu0 0.0
  %1823 = vmatpush1.msra.mxu0 %v317
  %1824 = vmatprep.subr.mxu0 0.0
  %1825 = vmatpush1.msra.mxu0 %v318
  %1826 = vmatprep.subr.mxu0 0.0
  %1827 = vmatpush1.msra.mxu0 %v319
  %1828 = vmatprep.subr.mxu0 0.0
  %1829 = vmatpush1.msra.mxu0 %v320
  %1830 = vmatprep.subr.mxu0 0.0
  %1831 = vmatpush1.msra.mxu0 0.0
  %1832 = vmatprep.subr.mxu0 0.0
  %1833 = vmatpush1.msra.mxu0 0.0
  %1834 = vmatprep.subr.mxu0 0.0
  %1835 = vmatpush1.msra.mxu0 0.0
  %1836 = vmatprep.subr.mxu0 0.0
  %1837 = vmatpush1.msra.mxu0 0.0
  %1838 = vmatprep.subr.mxu0 0.0
  %1839 = vmatpush1.msra.mxu0 0.0
  %1840 = vmatprep.subr.mxu0 0.0
  %1841 = vmatpush1.msra.mxu0 0.0
  %1842 = vmatprep.subr.mxu0 0.0
  %1843 = vmatpush1.msra.mxu0 0.0
  %1844 = vmatprep.subr.mxu0 0.0
  %1845 = vmatpush1.msra.mxu0 0.0
  %1846 = vmatprep.subr.mxu0 0.0
  %1847 = vmatpush1.msra.mxu0 0.0
  %1848 = vmatprep.subr.mxu0 0.0
  %1849 = vmatpush1.msra.mxu0 0.0
  %1850 = vmatprep.subr.mxu0 0.0
  %1851 = vmatpush1.msra.mxu0 0.0
  %1852 = vmatprep.subr.mxu0 0.0
  %1853 = vmatpush1.msra.mxu0 0.0
  %1854 = vmatprep.subr.mxu0 0.0
  %1855 = vmatpush1.msra.mxu0 0.0
  %1856 = vmatprep.subr.mxu0 0.0
  %1857 = vmatpush1.msra.mxu0 0.0
  %1858 = vmatprep.subr.mxu0 0.0
  %1859 = vmatpush1.msra.mxu0 0.0
  %1860 = vmatprep.subr.mxu0 0.0
  %1861 = vmatpush1.msra.mxu0 0.0
  %1862 = vmatprep.mubr.f32.mxu0 0.0
  %1863 = vmatmul.mubr.f32.gmra.mrb[0].mxu0 %v1792
  %v1864 = vpop.f32.mrb[0].mxu0
  %v1865 = vadd.f32 0.0, %v1864
  %v1866 = vpop.f32.mrb[0].mxu0
  %1867 = vmatprep.mubr.f32.mxu0 0.0
  %1868 = vmatmul.mubr.f32.gmra.mrb[0].mxu0 %v1793
  %v1869 = vpop.f32.mrb[0].mxu0
  %v1870 = vadd.f32 0.0, %v1869
  %v1871 = vpop.f32.mrb[0].mxu0
  %1872 = vmatprep.mubr.f32.mxu0 0.0
  %1873 = vmatmul.mubr.f32.gmra.mrb[0].mxu0 %v1794
  %v1874 = vpop.f32.mrb[0].mxu0
  %v1875 = vadd.f32 0.0, %v1874
  %v1876 = vpop.f32.mrb[0].mxu0
  %1877 = vmatprep.mubr.f32.mxu0 0.0
  %1878 = vmatmul.mubr.f32.gmra.mrb[0].mxu0 %v1795
  %v1879 = vpop.f32.mrb[0].mxu0
  %v1880 = vadd.f32 0.0, %v1879
  %v1881 = vpop.f32.mrb[0].mxu0
  %1882 = vmatprep.mubr.f32.mxu0 0.0
  %1883 = vmatmul.mubr.f32.gmra.mrb[0].mxu0 %v1796
  %v1884 = vpop.f32.mrb[0].mxu0
  %v1885 = vadd.f32 0.0, %v1884
  %v1886 = vpop.f32.mrb[0].mxu0
  %1887 = vmatprep.mubr.f32.mxu0 0.0
  %1888 = vmatmul.mubr.f32.gmra.mrb[0].mxu0 %v1797
  %v1889 = vpop.f32.mrb[0].mxu0
  %v1890 = vadd.f32 0.0, %v1889
  %v1891 = vpop.f32.mrb[0].mxu0
  %1892 = vdwg.mxu0
  %v1893 = vadd.f32 %v1523, %v1865
  %v1894 = vadd.f32 %v1524, %v1870
  %v1895 = vadd.f32 %v1525, %v1875
  %v1896 = vadd.f32 %v1526, %v1880
  %v1897 = vadd.f32 %v1527, %v1885
  %v1898 = vadd.f32 %v1528, %v1890
  %v1899 = vlaneseq
  %v1900 = vshrl.u32 %v1899, 7
  %v1901 = vsub.s32 0, %v1900
  %v1902 = vrot.slane %v324, %v1901
  %v1903 = vadd.f32 %v1893, %v1902
  %v1904 = vadd.f32 %v1894, %v1902
  %v1905 = vadd.f32 %v1895, %v1902
  %v1906 = vadd.f32 %v1896, %v1902
  %v1907 = vadd.f32 %v1897, %v1902
  %v1908 = vadd.f32 %v1898, %v1902
  %v1909 = vld [vmem:[%s2 + $0x210] sm:$0xff]
  %v1910 = vld [vmem:[%s2 + $0x218] sm:$0xff]
  %v1911 = vld [vmem:[%s2 + $0x220] sm:$0xff]
  %v1912 = vld [vmem:[%s2 + $0x228] sm:$0xff]
  %v1913 = vld [vmem:[%s2 + $0x230] sm:$0xff]
  %v1914 = vld [vmem:[%s2 + $0x238] sm:$0xff]
  %v1915 = vld [vmem:[%s2 + $0x240] sm:$0xff]
  %v1916 = vld [vmem:[%s2 + $0x248] sm:$0xff]
  %v1917 = vld [vmem:[%s2 + $0x250] sm:$0xff]
  %v1918 = vld [vmem:[%s2 + $0x258] sm:$0xff]
  %v1919 = vld [vmem:[%s2 + $0x260] sm:$0xff]
  %v1920 = vld [vmem:[%s2 + $0x268] sm:$0xff]
  %v1921 = vld [vmem:[%s2 + $0x270] sm:$0xff]
  %v1922 = vld [vmem:[%s2 + $0x278] sm:$0xff]
  %v1923 = vld [vmem:[%s2 + $0x280] sm:$0xff]
  %v1924 = vld [vmem:[%s2 + $0x288] sm:$0xff]
  %v1925 = vld [vmem:[%s2 + $0x290] sm:$0xff]
  %v1926 = vld [vmem:[%s2 + $0x298] sm:$0xff]
  %v1927 = vld [vmem:[%s2 + $0x2a0] sm:$0xff]
  %v1928 = vld [vmem:[%s2 + $0x2a8] sm:$0xff]
  %v1929 = vld [vmem:[%s2 + $0x2b0] sm:$0xff]
  %v1930 = vld [vmem:[%s2 + $0x2b8] sm:$0xff]
  %v1931 = vld [vmem:[%s2 + $0x2c0] sm:$0xff]
  %v1932 = vld [vmem:[%s2 + $0x2c8] sm:$0xff]
  %v1933 = vld [vmem:[%s2 + $0x2d0] sm:$0xff]
  %v1934 = vld [vmem:[%s2 + $0x2d8] sm:$0xff]
  %v1935 = vld [vmem:[%s2 + $0x2e0] sm:$0xff]
  %v1936 = vld [vmem:[%s2 + $0x2e8] sm:$0xff]
  %v1937 = vld [vmem:[%s2 + $0x2f0] sm:$0x1]
  %v1938 = vld [vmem:[%s2 + $0x2f1] sm:$0x1]
  %v1939 = vld [vmem:[%s2 + $0x2f2] sm:$0x1]
  %v1940 = vld [vmem:[%s2 + $0x2f3] sm:$0x1]
  %v1941 = vld [vmem:[%s2 + $0x2f4] sm:$0x1]
  %v1942 = vld [vmem:[%s2 + $0x2f5] sm:$0x1]
  %v1943 = vld [vmem:[%s2 + $0x2f6] sm:$0x1]
  %v1944 = vld [vmem:[%s2 + $0x2f7] sm:$0x1]
  %v1945 = vsel %vm175, %v1903, 0.0
  %1946 = vadd.xlane.f32.xlu0 %v1945
  %v1947 = vpop.xlane.xlu0 %1946
  %v1948 = vsel %vm175, %v1904, 0.0
  %1949 = vadd.xlane.f32.xlu0 %v1948
  %v1950 = vpop.xlane.xlu0 %1949
  %v1951 = vsel %vm175, %v1905, 0.0
  %1952 = vadd.xlane.f32.xlu0 %v1951
  %v1953 = vpop.xlane.xlu0 %1952
  %v1954 = vsel %vm175, %v1906, 0.0
  %1955 = vadd.xlane.f32.xlu0 %v1954
  %v1956 = vpop.xlane.xlu0 %1955
  %v1957 = vsel %vm175, %v1907, 0.0
  %1958 = vadd.xlane.f32.xlu0 %v1957
  %v1959 = vpop.xlane.xlu0 %1958
  %v1960 = vsel %vm175, %v1908, 0.0
  %1961 = vadd.xlane.f32.xlu0 %v1960
  %v1962 = vpop.xlane.xlu0 %1961
  %v1963 = vmul.f32 %v1947, %v194
  %v1964 = vmul.f32 %v1950, %v194
  %v1965 = vmul.f32 %v1953, %v194
  %v1966 = vmul.f32 %v1956, %v194
  %v1967 = vmul.f32 %v1959, %v194
  %v1968 = vmul.f32 %v1962, %v194
  %v1969 = vsub.f32 %v1903, %v1963
  %v1970 = vsub.f32 %v1904, %v1964
  %v1971 = vsub.f32 %v1905, %v1965
  %v1972 = vsub.f32 %v1906, %v1966
  %v1973 = vsub.f32 %v1907, %v1967
  %v1974 = vsub.f32 %v1908, %v1968
  %v1975 = vmul.f32 %v1969, %v1969
  %v1976 = vmul.f32 %v1970, %v1970
  %v1977 = vmul.f32 %v1971, %v1971
  %v1978 = vmul.f32 %v1972, %v1972
  %v1979 = vmul.f32 %v1973, %v1973
  %v1980 = vmul.f32 %v1974, %v1974
  %v1981 = vsel %vm175, %v1975, 0.0
  %1982 = vadd.xlane.f32.xlu0 %v1981
  %v1983 = vpop.xlane.xlu0 %1982
  %v1984 = vsel %vm175, %v1976, 0.0
  %1985 = vadd.xlane.f32.xlu0 %v1984
  %v1986 = vpop.xlane.xlu0 %1985
  %v1987 = vsel %vm175, %v1977, 0.0
  %1988 = vadd.xlane.f32.xlu0 %v1987
  %v1989 = vpop.xlane.xlu0 %1988
  %v1990 = vsel %vm175, %v1978, 0.0
  %1991 = vadd.xlane.f32.xlu0 %v1990
  %v1992 = vpop.xlane.xlu0 %1991
  %v1993 = vsel %vm175, %v1979, 0.0
  %1994 = vadd.xlane.f32.xlu0 %v1993
  %v1995 = vpop.xlane.xlu0 %1994
  %v1996 = vsel %vm175, %v1980, 0.0
  %1997 = vadd.xlane.f32.xlu0 %v1996
  %v1998 = vpop.xlane.xlu0 %1997
  %v1999 = vmul.f32 %v1983, %v194
  %v2000 = vmul.f32 %v1986, %v194
  %v2001 = vmul.f32 %v1989, %v194
  %v2002 = vmul.f32 %v1992, %v194
  %v2003 = vmul.f32 %v1995, %v194
  %v2004 = vmul.f32 %v1998, %v194
  %v2005 = vadd.f32 %v1999, 1e-05
  %v2006 = vadd.f32 %v2000, 1e-05
  %v2007 = vadd.f32 %v2001, 1e-05
  %v2008 = vadd.f32 %v2002, 1e-05
  %v2009 = vadd.f32 %v2003, 1e-05
  %v2010 = vadd.f32 %v2004, 1e-05
  %v2011 = vrsqrt.pop %v2005
  %v2012 = vrsqrt.pop %v2006
  %v2013 = vrsqrt.pop %v2007
  %v2014 = vrsqrt.pop %v2008
  %v2015 = vrsqrt.pop %v2009
  %v2016 = vrsqrt.pop %v2010
  %v2017 = vmul.f32 %v1969, %v2011
  %v2018 = vmul.f32 %v1970, %v2012
  %v2019 = vmul.f32 %v1971, %v2013
  %v2020 = vmul.f32 %v1972, %v2014
  %v2021 = vmul.f32 %v1973, %v2015
  %v2022 = vmul.f32 %v1974, %v2016
  %v2023 = vlaneseq
  %v2024 = vshrl.u32 %v2023, 7
  %v2025 = vsub.s32 0, %v2024
  %v2026 = vrot.slane %v1941, %v2025
  %v2027 = vmul.f32 %v2017, %v2026
  %v2028 = vmul.f32 %v2018, %v2026
  %v2029 = vmul.f32 %v2019, %v2026
  %v2030 = vmul.f32 %v2020, %v2026
  %v2031 = vmul.f32 %v2021, %v2026
  %v2032 = vmul.f32 %v2022, %v2026
  %v2033 = vlaneseq
  %v2034 = vshrl.u32 %v2033, 7
  %v2035 = vsub.s32 0, %v2034
  %v2036 = vrot.slane %v1942, %v2035
  %v2037 = vadd.f32 %v2027, %v2036
  %v2038 = vadd.f32 %v2028, %v2036
  %v2039 = vadd.f32 %v2029, %v2036
  %v2040 = vadd.f32 %v2030, %v2036
  %v2041 = vadd.f32 %v2031, %v2036
  %v2042 = vadd.f32 %v2032, %v2036
  %v2043 = vlaneseq
  %v2044 = vshrl.u32 %v2043, 7
  %v2045 = vsub.s32 0, %v2044
  %v2046 = vrot.slane %v1937, %v2045
  %v2048 = vsel %vm175, %v2037, 0
  %v2051 = vsel %vm175, %v2038, 0
  %v2054 = vsel %vm175, %v2039, 0
  %v2057 = vsel %vm175, %v2040, 0
  %v2060 = vsel %vm175, %v2041, 0
  %v2063 = vsel %vm175, %v2042, 0
  %2065 = vmatprep.subr.mxu0 0.0
  %2066 = vmatpush1.msra.mxu0 %v1909
  %2067 = vmatprep.subr.mxu0 0.0
  %2068 = vmatpush1.msra.mxu0 %v1910
  %2069 = vmatprep.subr.mxu0 0.0
  %2070 = vmatpush1.msra.mxu0 %v1911
  %2071 = vmatprep.subr.mxu0 0.0
  %2072 = vmatpush1.msra.mxu0 %v1912
  %2073 = vmatprep.subr.mxu0 0.0
  %2074 = vmatpush1.msra.mxu0 0.0
  %2075 = vmatprep.subr.mxu0 0.0
  %2076 = vmatpush1.msra.mxu0 0.0
  %2077 = vmatprep.subr.mxu0 0.0
  %2078 = vmatpush1.msra.mxu0 0.0
  %2079 = vmatprep.subr.mxu0 0.0
  %2080 = vmatpush1.msra.mxu0 0.0
  %2081 = vmatprep.subr.mxu0 0.0
  %2082 = vmatpush1.msra.mxu0 0.0
  %2083 = vmatprep.subr.mxu0 0.0
  %2084 = vmatpush1.msra.mxu0 0.0
  %2085 = vmatprep.subr.mxu0 0.0
  %2086 = vmatpush1.msra.mxu0 0.0
  %2087 = vmatprep.subr.mxu0 0.0
  %2088 = vmatpush1.msra.mxu0 0.0
  %2089 = vmatprep.subr.mxu0 0.0
  %2090 = vmatpush1.msra.mxu0 0.0
  %2091 = vmatprep.subr.mxu0 0.0
  %2092 = vmatpush1.msra.mxu0 0.0
  %2093 = vmatprep.subr.mxu0 0.0
  %2094 = vmatpush1.msra.mxu0 0.0
  %2095 = vmatprep.subr.mxu0 0.0
  %2096 = vmatpush1.msra.mxu0 0.0
  %2097 = vmatprep.subr.mxu0 0.0
  %2098 = vmatpush1.msra.mxu0 0.0
  %2099 = vmatprep.subr.mxu0 0.0
  %2100 = vmatpush1.msra.mxu0 0.0
  %2101 = vmatprep.subr.mxu0 0.0
  %2102 = vmatpush1.msra.mxu0 0.0
  %2103 = vmatprep.subr.mxu0 0.0
  %2104 = vmatpush1.msra.mxu0 0.0
  %2105 = vmatprep.subr.mxu0 0.0
  %2106 = vmatpush1.msra.mxu0 0.0
  %2107 = vmatprep.subr.mxu0 0.0
  %2108 = vmatpush1.msra.mxu0 0.0
  %2109 = vmatprep.subr.mxu0 0.0
  %2110 = vmatpush1.msra.mxu0 0.0
  %2111 = vmatprep.subr.mxu0 0.0
  %2112 = vmatpush1.msra.mxu0 0.0
  %2113 = vmatprep.subr.mxu0 0.0
  %2114 = vmatpush1.msra.mxu0 0.0
  %2115 = vmatprep.subr.mxu0 0.0
  %2116 = vmatpush1.msra.mxu0 0.0
  %2117 = vmatprep.subr.mxu0 0.0
  %2118 = vmatpush1.msra.mxu0 0.0
  %2119 = vmatprep.subr.mxu0 0.0
  %2120 = vmatpush1.msra.mxu0 0.0
  %2121 = vmatprep.subr.mxu0 0.0
  %2122 = vmatpush1.msra.mxu0 0.0
  %2123 = vmatprep.subr.mxu0 0.0
  %2124 = vmatpush1.msra.mxu0 0.0
  %2125 = vmatprep.subr.mxu0 0.0
  %2126 = vmatpush1.msra.mxu0 0.0
  %2127 = vmatprep.subr.mxu0 0.0
  %2128 = vmatpush1.msra.mxu0 0.0
  %2129 = vmatprep.mubr.f32.mxu0 0.0
  %2130 = vmatmul.mubr.f32.gmra.mrb[0].mxu0 %v2048
  %v2131 = vpop.f32.mrb[0].mxu0
  %v2132 = vadd.f32 %v2046, %v2131
  %v2133 = vpop.f32.mrb[0].mxu0
  %2134 = vmatprep.mubr.f32.mxu0 0.0
  %2135 = vmatmul.mubr.f32.gmra.mrb[0].mxu0 %v2051
  %v2136 = vpop.f32.mrb[0].mxu0
  %v2137 = vadd.f32 %v2046, %v2136
  %v2138 = vpop.f32.mrb[0].mxu0
  %2139 = vmatprep.mubr.f32.mxu0 0.0
  %2140 = vmatmul.mubr.f32.gmra.mrb[0].mxu0 %v2054
  %v2141 = vpop.f32.mrb[0].mxu0
  %v2142 = vadd.f32 %v2046, %v2141
  %v2143 = vpop.f32.mrb[0].mxu0
  %2144 = vmatprep.mubr.f32.mxu0 0.0
  %2145 = vmatmul.mubr.f32.gmra.mrb[0].mxu0 %v2057
  %v2146 = vpop.f32.mrb[0].mxu0
  %v2147 = vadd.f32 %v2046, %v2146
  %v2148 = vpop.f32.mrb[0].mxu0
  %2149 = vmatprep.mubr.f32.mxu0 0.0
  %2150 = vmatmul.mubr.f32.gmra.mrb[0].mxu0 %v2060
  %v2151 = vpop.f32.mrb[0].mxu0
  %v2152 = vadd.f32 %v2046, %v2151
  %v2153 = vpop.f32.mrb[0].mxu0
  %2154 = vmatprep.mubr.f32.mxu0 0.0
  %2155 = vmatmul.mubr.f32.gmra.mrb[0].mxu0 %v2063
  %v2156 = vpop.f32.mrb[0].mxu0
  %v2157 = vadd.f32 %v2046, %v2156
  %v2158 = vpop.f32.mrb[0].mxu0
  %2159 = vdwg.mxu0
  %v2160 = vmul.f32 %v2132, %v569
  %v2161 = vmul.f32 %v2137, %v571
  %v2162 = vmul.f32 %v2142, %v573
  %v2163 = vmul.f32 %v2147, %v575
  %v2164 = vmul.f32 %v2152, %v577
  %v2165 = vmul.f32 %v2157, %v579
  %v2166 = vmul.f32 %v2132, %v581
  %v2167 = vmul.f32 %v2137, %v583
  %v2168 = vmul.f32 %v2142, %v585
  %v2169 = vmul.f32 %v2147, %v587
  %v2170 = vmul.f32 %v2152, %v589
  %v2171 = vmul.f32 %v2157, %v591
  %v2172 = vmul.f32 %v2132, %v593
  %v2173 = vmul.f32 %v2137, %v595
  %v2174 = vmul.f32 %v2142, %v597
  %v2175 = vmul.f32 %v2147, %v599
  %v2176 = vmul.f32 %v2152, %v601
  %v2177 = vmul.f32 %v2157, %v603
  %v2178 = vmul.f32 %v2132, %v605
  %v2179 = vmul.f32 %v2137, %v607
  %v2180 = vmul.f32 %v2142, %v609
  %v2181 = vmul.f32 %v2147, %v611
  %v2182 = vmul.f32 %v2152, %v613
  %v2183 = vmul.f32 %v2157, %v615
  %v2184 = vmul.f32 %v2132, %v665
  %v2185 = vmul.f32 %v2137, %v667
  %v2186 = vmul.f32 %v2142, %v669
  %v2187 = vmul.f32 %v2147, %v671
  %v2188 = vmul.f32 %v2152, %v673
  %v2189 = vmul.f32 %v2157, %v675
  %v2190 = vmul.f32 %v2132, %v677
  %v2191 = vmul.f32 %v2137, %v679
  %v2192 = vmul.f32 %v2142, %v681
  %v2193 = vmul.f32 %v2147, %v683
  %v2194 = vmul.f32 %v2152, %v685
  %v2195 = vmul.f32 %v2157, %v687
  %v2196 = vmul.f32 %v2132, %v689
  %v2197 = vmul.f32 %v2137, %v691
  %v2198 = vmul.f32 %v2142, %v693
  %v2199 = vmul.f32 %v2147, %v695
  %v2200 = vmul.f32 %v2152, %v697
  %v2201 = vmul.f32 %v2157, %v699
  %v2202 = vmul.f32 %v2132, %v701
  %v2203 = vmul.f32 %v2137, %v703
  %v2204 = vmul.f32 %v2142, %v705
  %v2205 = vmul.f32 %v2147, %v707
  %v2206 = vmul.f32 %v2152, %v709
  %v2207 = vmul.f32 %v2157, %v711
  %2232 = vrot.lane.b32.xlu0 %v2160, 96
  %v2233 = vpop.permute.xlu0 %2232
  %2234 = vrot.lane.b32.xlu0 %v2161, 96
  %v2235 = vpop.permute.xlu0 %2234
  %2236 = vrot.lane.b32.xlu0 %v2162, 96
  %v2237 = vpop.permute.xlu0 %2236
  %2238 = vrot.lane.b32.xlu0 %v2163, 96
  %v2239 = vpop.permute.xlu0 %2238
  %2240 = vrot.lane.b32.xlu0 %v2164, 96
  %v2241 = vpop.permute.xlu0 %2240
  %2242 = vrot.lane.b32.xlu0 %v2165, 96
  %v2243 = vpop.permute.xlu0 %2242
  %2244 = vrot.lane.b32.xlu0 %v2166, 96
  %v2245 = vpop.permute.xlu0 %2244
  %2246 = vrot.lane.b32.xlu0 %v2167, 96
  %v2247 = vpop.permute.xlu0 %2246
  %2248 = vrot.lane.b32.xlu0 %v2168, 96
  %v2249 = vpop.permute.xlu0 %2248
  %2250 = vrot.lane.b32.xlu0 %v2169, 96
  %v2251 = vpop.permute.xlu0 %2250
  %2252 = vrot.lane.b32.xlu0 %v2170, 96
  %v2253 = vpop.permute.xlu0 %2252
  %2254 = vrot.lane.b32.xlu0 %v2171, 96
  %v2255 = vpop.permute.xlu0 %2254
  %2256 = vrot.lane.b32.xlu0 %v2172, 96
  %v2257 = vpop.permute.xlu0 %2256
  %2258 = vrot.lane.b32.xlu0 %v2173, 96
  %v2259 = vpop.permute.xlu0 %2258
  %2260 = vrot.lane.b32.xlu0 %v2174, 96
  %v2261 = vpop.permute.xlu0 %2260
  %2262 = vrot.lane.b32.xlu0 %v2175, 96
  %v2263 = vpop.permute.xlu0 %2262
  %2264 = vrot.lane.b32.xlu0 %v2176, 96
  %v2265 = vpop.permute.xlu0 %2264
  %2266 = vrot.lane.b32.xlu0 %v2177, 96
  %v2267 = vpop.permute.xlu0 %2266
  %2268 = vrot.lane.b32.xlu0 %v2178, 96
  %v2269 = vpop.permute.xlu0 %2268
  %2270 = vrot.lane.b32.xlu0 %v2179, 96
  %v2271 = vpop.permute.xlu0 %2270
  %2272 = vrot.lane.b32.xlu0 %v2180, 96
  %v2273 = vpop.permute.xlu0 %2272
  %2274 = vrot.lane.b32.xlu0 %v2181, 96
  %v2275 = vpop.permute.xlu0 %2274
  %2276 = vrot.lane.b32.xlu0 %v2182, 96
  %v2277 = vpop.permute.xlu0 %2276
  %2278 = vrot.lane.b32.xlu0 %v2183, 96
  %v2279 = vpop.permute.xlu0 %2278
  %v2281 = vsel %vm175, %v2132, 0
  %v2284 = vsel %vm175, %v2137, 0
  %v2287 = vsel %vm175, %v2142, 0
  %v2290 = vsel %vm175, %v2147, 0
  %v2293 = vsel %vm175, %v2152, 0
  %v2296 = vsel %vm175, %v2157, 0
  %v2298 = vsel %vm175, %v2233, 0
  %v2300 = vsel %vm175, %v2235, 0
  %v2302 = vsel %vm175, %v2237, 0
  %v2304 = vsel %vm175, %v2239, 0
  %v2306 = vsel %vm175, %v2241, 0
  %v2308 = vsel %vm175, %v2243, 0
  %v2310 = vsel %vm175, %v2245, 0
  %v2312 = vsel %vm175, %v2247, 0
  %v2314 = vsel %vm175, %v2249, 0
  %v2316 = vsel %vm175, %v2251, 0
  %v2318 = vsel %vm175, %v2253, 0
  %v2320 = vsel %vm175, %v2255, 0
  %v2322 = vsel %vm175, %v2257, 0
  %v2324 = vsel %vm175, %v2259, 0
  %v2326 = vsel %vm175, %v2261, 0
  %v2328 = vsel %vm175, %v2263, 0
  %v2330 = vsel %vm175, %v2265, 0
  %v2332 = vsel %vm175, %v2267, 0
  %v2334 = vsel %vm175, %v2269, 0
  %v2336 = vsel %vm175, %v2271, 0
  %v2338 = vsel %vm175, %v2273, 0
  %v2340 = vsel %vm175, %v2275, 0
  %v2342 = vsel %vm175, %v2277, 0
  %v2344 = vsel %vm175, %v2279, 0
  %2346 = vmatprep.subr.mxu0 0.0
  %2347 = vmatpush1.xpose.msra.mxu0 %v2298
  %2348 = vmatprep.subr.mxu0 0.0
  %2349 = vmatpush1.xpose.msra.mxu0 %v2300
  %2350 = vmatprep.subr.mxu0 0.0
  %2351 = vmatpush1.xpose.msra.mxu0 %v2302
  %2352 = vmatprep.subr.mxu0 0.0
  %2353 = vmatpush1.xpose.msra.mxu0 %v2304
  %2354 = vmatprep.subr.mxu0 0.0
  %2355 = vmatpush1.xpose.msra.mxu0 %v2306
  %2356 = vmatprep.subr.mxu0 0.0
  %2357 = vmatpush1.xpose.msra.mxu0 %v2308
  %2358 = vmatprep.subr.mxu0 0.0
  %2359 = vmatpush1.xpose.msra.mxu0 %v2310
  %2360 = vmatprep.subr.mxu0 0.0
  %2361 = vmatpush1.xpose.msra.mxu0 %v2312
  %2362 = vmatprep.subr.mxu0 0.0
  %2363 = vmatpush1.xpose.msra.mxu0 %v2314
  %2364 = vmatprep.subr.mxu0 0.0
  %2365 = vmatpush1.xpose.msra.mxu0 %v2316
  %2366 = vmatprep.subr.mxu0 0.0
  %2367 = vmatpush1.xpose.msra.mxu0 %v2318
  %2368 = vmatprep.subr.mxu0 0.0
  %2369 = vmatpush1.xpose.msra.mxu0 %v2320
  %2370 = vmatprep.subr.mxu0 0.0
  %2371 = vmatpush1.xpose.msra.mxu0 %v2322
  %2372 = vmatprep.subr.mxu0 0.0
  %2373 = vmatpush1.xpose.msra.mxu0 %v2324
  %2374 = vmatprep.subr.mxu0 0.0
  %2375 = vmatpush1.xpose.msra.mxu0 %v2326
  %2376 = vmatprep.subr.mxu0 0.0
  %2377 = vmatpush1.xpose.msra.mxu0 %v2328
  %2378 = vmatprep.subr.mxu0 0.0
  %2379 = vmatpush1.xpose.msra.mxu0 %v2330
  %2380 = vmatprep.subr.mxu0 0.0
  %2381 = vmatpush1.xpose.msra.mxu0 %v2332
  %2382 = vmatprep.subr.mxu0 0.0
  %2383 = vmatpush1.xpose.msra.mxu0 %v2334
  %2384 = vmatprep.subr.mxu0 0.0
  %2385 = vmatpush1.xpose.msra.mxu0 %v2336
  %2386 = vmatprep.subr.mxu0 0.0
  %2387 = vmatpush1.xpose.msra.mxu0 %v2338
  %2388 = vmatprep.subr.mxu0 0.0
  %2389 = vmatpush1.xpose.msra.mxu0 %v2340
  %2390 = vmatprep.subr.mxu0 0.0
  %2391 = vmatpush1.xpose.msra.mxu0 %v2342
  %2392 = vmatprep.subr.mxu0 0.0
  %2393 = vmatpush1.xpose.msra.mxu0 %v2344
  %2394 = vmatprep.subr.mxu0 0.0
  %2395 = vmatpush1.xpose.msra.mxu0 0.0
  %2396 = vmatprep.subr.mxu0 0.0
  %2397 = vmatpush1.xpose.msra.mxu0 0.0
  %2398 = vmatprep.subr.mxu0 0.0
  %2399 = vmatpush1.xpose.msra.mxu0 0.0
  %2400 = vmatprep.subr.mxu0 0.0
  %2401 = vmatpush1.xpose.msra.mxu0 0.0
  %2402 = vmatprep.subr.mxu0 0.0
  %2403 = vmatpush1.xpose.msra.mxu0 0.0
  %2404 = vmatprep.subr.mxu0 0.0
  %2405 = vmatpush1.xpose.msra.mxu0 0.0
  %2406 = vmatprep.subr.mxu0 0.0
  %2407 = vmatpush1.xpose.msra.mxu0 0.0
  %2408 = vmatprep.subr.mxu0 0.0
  %2409 = vmatpush1.xpose.msra.mxu0 0.0
  %2410 = vmatprep.mubr.f32.mxu0 0.0
  %2411 = vmatmul.mubr.f32.gmra.mrb[0].mxu0 %v2281
  %v2412 = vpop.f32.mrb[0].mxu0
  %v2413 = vadd.f32 0.0, %v2412
  %v2414 = vpop.f32.mrb[0].mxu0
  %v2415 = vadd.f32 0.0, %v2414
  %2416 = vmatprep.mubr.f32.mxu0 0.0
  %2417 = vmatmul.mubr.f32.gmra.mrb[0].mxu0 %v2284
  %v2418 = vpop.f32.mrb[0].mxu0
  %v2419 = vadd.f32 0.0, %v2418
  %v2420 = vpop.f32.mrb[0].mxu0
  %v2421 = vadd.f32 0.0, %v2420
  %2422 = vmatprep.mubr.f32.mxu0 0.0
  %2423 = vmatmul.mubr.f32.gmra.mrb[0].mxu0 %v2287
  %v2424 = vpop.f32.mrb[0].mxu0
  %v2425 = vadd.f32 0.0, %v2424
  %v2426 = vpop.f32.mrb[0].mxu0
  %v2427 = vadd.f32 0.0, %v2426
  %2428 = vmatprep.mubr.f32.mxu0 0.0
  %2429 = vmatmul.mubr.f32.gmra.mrb[0].mxu0 %v2290
  %v2430 = vpop.f32.mrb[0].mxu0
  %v2431 = vadd.f32 0.0, %v2430
  %v2432 = vpop.f32.mrb[0].mxu0
  %v2433 = vadd.f32 0.0, %v2432
  %2434 = vmatprep.mubr.f32.mxu0 0.0
  %2435 = vmatmul.mubr.f32.gmra.mrb[0].mxu0 %v2293
  %v2436 = vpop.f32.mrb[0].mxu0
  %v2437 = vadd.f32 0.0, %v2436
  %v2438 = vpop.f32.mrb[0].mxu0
  %v2439 = vadd.f32 0.0, %v2438
  %2440 = vmatprep.mubr.f32.mxu0 0.0
  %2441 = vmatmul.mubr.f32.gmra.mrb[0].mxu0 %v2296
  %v2442 = vpop.f32.mrb[0].mxu0
  %v2443 = vadd.f32 0.0, %v2442
  %v2444 = vpop.f32.mrb[0].mxu0
  %v2445 = vadd.f32 0.0, %v2444
  %2446 = vdwg.mxu0
  %v2447 = vmul.f32 %v2413, 0.35355338
  %v2448 = vmul.f32 %v2415, 0.35355338
  %v2449 = vmul.f32 %v2419, 0.35355338
  %v2450 = vmul.f32 %v2421, 0.35355338
  %v2451 = vmul.f32 %v2425, 0.35355338
  %v2452 = vmul.f32 %v2427, 0.35355338
  %v2453 = vmul.f32 %v2431, 0.35355338
  %v2454 = vmul.f32 %v2433, 0.35355338
  %v2455 = vmul.f32 %v2437, 0.35355338
  %v2456 = vmul.f32 %v2439, 0.35355338
  %v2457 = vmul.f32 %v2443, 0.35355338
  %v2458 = vmul.f32 %v2445, 0.35355338
  %v2459 = vadd.f32 %v2447, %v281
  %v2460 = vadd.f32 %v2448, %v282
  %v2461 = vadd.f32 %v2449, %v283
  %v2462 = vadd.f32 %v2450, %v284
  %v2463 = vadd.f32 %v2451, %v285
  %v2464 = vadd.f32 %v2452, %v286
  %v2465 = vadd.f32 %v2453, %v287
  %v2466 = vadd.f32 %v2454, %v288
  %v2467 = vadd.f32 %v2455, %v289
  %v2468 = vadd.f32 %v2456, %v290
  %v2469 = vadd.f32 %v2457, %v291
  %v2470 = vadd.f32 %v2458, %v292
  %v2471 = vsel %vm1023, %v2460, -inf
  %v2472 = vmax.f32 %v2459, %v2471
  %2473 = vmax.xlane.f32.xlu0 %v2472
  %v2474 = vpop.xlane.xlu0 %2473
  %v2475 = vsel %vm1023, %v2462, -inf
  %v2476 = vmax.f32 %v2461, %v2475
  %2477 = vmax.xlane.f32.xlu0 %v2476
  %v2478 = vpop.xlane.xlu0 %2477
  %v2479 = vsel %vm1023, %v2464, -inf
  %v2480 = vmax.f32 %v2463, %v2479
  %2481 = vmax.xlane.f32.xlu0 %v2480
  %v2482 = vpop.xlane.xlu0 %2481
  %v2483 = vsel %vm1023, %v2466, -inf
  %v2484 = vmax.f32 %v2465, %v2483
  %2485 = vmax.xlane.f32.xlu0 %v2484
  %v2486 = vpop.xlane.xlu0 %2485
  %v2487 = vsel %vm1023, %v2468, -inf
  %v2488 = vmax.f32 %v2467, %v2487
  %2489 = vmax.xlane.f32.xlu0 %v2488
  %v2490 = vpop.xlane.xlu0 %2489
  %v2491 = vsel %vm1023, %v2470, -inf
  %v2492 = vmax.f32 %v2469, %v2491
  %2493 = vmax.xlane.f32.xlu0 %v2492
  %v2494 = vpop.xlane.xlu0 %2493
  %v2495 = vsub.f32 %v2459, %v2474
  %v2496 = vsub.f32 %v2460, %v2474
  %v2497 = vsub.f32 %v2461, %v2478
  %v2498 = vsub.f32 %v2462, %v2478
  %v2499 = vsub.f32 %v2463, %v2482
  %v2500 = vsub.f32 %v2464, %v2482
  %v2501 = vsub.f32 %v2465, %v2486
  %v2502 = vsub.f32 %v2466, %v2486
  %v2503 = vsub.f32 %v2467, %v2490
  %v2504 = vsub.f32 %v2468, %v2490
  %v2505 = vsub.f32 %v2469, %v2494
  %v2506 = vsub.f32 %v2470, %v2494
  %v2507 = vmul.f32 %v2495, 1.442695
  %v2508 = vpow.pop %v2507
  %v2509 = vmul.f32 %v2496, 1.442695
  %v2510 = vpow.pop %v2509
  %v2511 = vmul.f32 %v2497, 1.442695
  %v2512 = vpow.pop %v2511
  %v2513 = vmul.f32 %v2498, 1.442695
  %v2514 = vpow.pop %v2513
  %v2515 = vmul.f32 %v2499, 1.442695
  %v2516 = vpow.pop %v2515
  %v2517 = vmul.f32 %v2500, 1.442695
  %v2518 = vpow.pop %v2517
  %v2519 = vmul.f32 %v2501, 1.442695
  %v2520 = vpow.pop %v2519
  %v2521 = vmul.f32 %v2502, 1.442695
  %v2522 = vpow.pop %v2521
  %v2523 = vmul.f32 %v2503, 1.442695
  %v2524 = vpow.pop %v2523
  %v2525 = vmul.f32 %v2504, 1.442695
  %v2526 = vpow.pop %v2525
  %v2527 = vmul.f32 %v2505, 1.442695
  %v2528 = vpow.pop %v2527
  %v2529 = vmul.f32 %v2506, 1.442695
  %v2530 = vpow.pop %v2529
  %v2532 = vsel %vm1023, %v2510, 0
  %v2535 = vsel %vm1023, %v2514, 0
  %v2538 = vsel %vm1023, %v2518, 0
  %v2541 = vsel %vm1023, %v2522, 0
  %v2544 = vsel %vm1023, %v2526, 0
  %v2547 = vsel %vm1023, %v2530, 0
  %2549 = vmatprep.subr.mxu0 0.0
  %2550 = vmatpush1.msra.mxu0 %v27
  %2551 = vmatprep.subr.mxu0 0.0
  %2552 = vmatpush1.msra.mxu0 %v28
  %2553 = vmatprep.subr.mxu0 0.0
  %2554 = vmatpush1.msra.mxu0 %v29
  %2555 = vmatprep.subr.mxu0 0.0
  %2556 = vmatpush1.msra.mxu0 %v30
  %2557 = vmatprep.subr.mxu0 0.0
  %2558 = vmatpush1.msra.mxu0 %v31
  %2559 = vmatprep.subr.mxu0 0.0
  %2560 = vmatpush1.msra.mxu0 %v32
  %2561 = vmatprep.subr.mxu0 0.0
  %2562 = vmatpush1.msra.mxu0 %v33
  %2563 = vmatprep.subr.mxu0 0.0
  %2564 = vmatpush1.msra.mxu0 %v34
  %2565 = vmatprep.subr.mxu0 0.0
  %2566 = vmatpush1.msra.mxu0 %v35
  %2567 = vmatprep.subr.mxu0 0.0
  %2568 = vmatpush1.msra.mxu0 %v36
  %2569 = vmatprep.subr.mxu0 0.0
  %2570 = vmatpush1.msra.mxu0 %v37
  %2571 = vmatprep.subr.mxu0 0.0
  %2572 = vmatpush1.msra.mxu0 %v38
  %2573 = vmatprep.subr.mxu0 0.0
  %2574 = vmatpush1.msra.mxu0 %v39
  %2575 = vmatprep.subr.mxu0 0.0
  %2576 = vmatpush1.msra.mxu0 %v40
  %2577 = vmatprep.subr.mxu0 0.0
  %2578 = vmatpush1.msra.mxu0 %v41
  %2579 = vmatprep.subr.mxu0 0.0
  %2580 = vmatpush1.msra.mxu0 %v42
  %2581 = vmatprep.subr.mxu0 0.0
  %2582 = vmatpush1.msra.mxu0 %v43
  %2583 = vmatprep.subr.mxu0 0.0
  %2584 = vmatpush1.msra.mxu0 %v44
  %2585 = vmatprep.subr.mxu0 0.0
  %2586 = vmatpush1.msra.mxu0 %v45
  %2587 = vmatprep.subr.mxu0 0.0
  %2588 = vmatpush1.msra.mxu0 %v46
  %2589 = vmatprep.subr.mxu0 0.0
  %2590 = vmatpush1.msra.mxu0 %v47
  %2591 = vmatprep.subr.mxu0 0.0
  %2592 = vmatpush1.msra.mxu0 %v48
  %2593 = vmatprep.subr.mxu0 0.0
  %2594 = vmatpush1.msra.mxu0 %v49
  %2595 = vmatprep.subr.mxu0 0.0
  %2596 = vmatpush1.msra.mxu0 %v50
  %2597 = vmatprep.subr.mxu0 0.0
  %2598 = vmatpush1.msra.mxu0 0.0
  %2599 = vmatprep.subr.mxu0 0.0
  %2600 = vmatpush1.msra.mxu0 0.0
  %2601 = vmatprep.subr.mxu0 0.0
  %2602 = vmatpush1.msra.mxu0 0.0
  %2603 = vmatprep.subr.mxu0 0.0
  %2604 = vmatpush1.msra.mxu0 0.0
  %2605 = vmatprep.subr.mxu0 0.0
  %2606 = vmatpush1.msra.mxu0 0.0
  %2607 = vmatprep.subr.mxu0 0.0
  %2608 = vmatpush1.msra.mxu0 0.0
  %2609 = vmatprep.subr.mxu0 0.0
  %2610 = vmatpush1.msra.mxu0 0.0
  %2611 = vmatprep.subr.mxu0 0.0
  %2612 = vmatpush1.msra.mxu0 0.0
  %2613 = vmatprep.mubr.f32.mxu0 %v2532
  %2614 = vmatmul.mubr.f32.gmra.mrb[0].mxu0 %v2508
  %v2615 = vpop.f32.mrb[0].mxu0
  %v2616 = vadd.f32 0.0, %v2615
  %v2617 = vpop.f32.mrb[0].mxu0
  %2618 = vmatprep.mubr.f32.mxu0 %v2535
  %2619 = vmatmul.mubr.f32.gmra.mrb[0].mxu0 %v2512
  %v2620 = vpop.f32.mrb[0].mxu0
  %v2621 = vadd.f32 0.0, %v2620
  %v2622 = vpop.f32.mrb[0].mxu0
  %2623 = vmatprep.mubr.f32.mxu0 %v2538
  %2624 = vmatmul.mubr.f32.gmra.mrb[0].mxu0 %v2516
  %v2625 = vpop.f32.mrb[0].mxu0
  %v2626 = vadd.f32 0.0, %v2625
  %v2627 = vpop.f32.mrb[0].mxu0
  %2628 = vmatprep.mubr.f32.mxu0 %v2541
  %2629 = vmatmul.mubr.f32.gmra.mrb[0].mxu0 %v2520
  %v2630 = vpop.f32.mrb[0].mxu0
  %v2631 = vadd.f32 0.0, %v2630
  %v2632 = vpop.f32.mrb[0].mxu0
  %2633 = vmatprep.mubr.f32.mxu0 %v2544
  %2634 = vmatmul.mubr.f32.gmra.mrb[0].mxu0 %v2524
  %v2635 = vpop.f32.mrb[0].mxu0
  %v2636 = vadd.f32 0.0, %v2635
  %v2637 = vpop.f32.mrb[0].mxu0
  %2638 = vmatprep.mubr.f32.mxu0 %v2547
  %2639 = vmatmul.mubr.f32.gmra.mrb[0].mxu0 %v2528
  %v2640 = vpop.f32.mrb[0].mxu0
  %v2641 = vadd.f32 0.0, %v2640
  %v2642 = vpop.f32.mrb[0].mxu0
  %2643 = vdwg.mxu0
  %2668 = vrot.lane.b32.xlu0 %v2184, 64
  %v2669 = vpop.permute.xlu0 %2668
  %2670 = vrot.lane.b32.xlu0 %v2185, 64
  %v2671 = vpop.permute.xlu0 %2670
  %2672 = vrot.lane.b32.xlu0 %v2186, 64
  %v2673 = vpop.permute.xlu0 %2672
  %2674 = vrot.lane.b32.xlu0 %v2187, 64
  %v2675 = vpop.permute.xlu0 %2674
  %2676 = vrot.lane.b32.xlu0 %v2188, 64
  %v2677 = vpop.permute.xlu0 %2676
  %2678 = vrot.lane.b32.xlu0 %v2189, 64
  %v2679 = vpop.permute.xlu0 %2678
  %2680 = vrot.lane.b32.xlu0 %v2190, 64
  %v2681 = vpop.permute.xlu0 %2680
  %2682 = vrot.lane.b32.xlu0 %v2191, 64
  %v2683 = vpop.permute.xlu0 %2682
  %2684 = vrot.lane.b32.xlu0 %v2192, 64
  %v2685 = vpop.permute.xlu0 %2684
  %2686 = vrot.lane.b32.xlu0 %v2193, 64
  %v2687 = vpop.permute.xlu0 %2686
  %2688 = vrot.lane.b32.xlu0 %v2194, 64
  %v2689 = vpop.permute.xlu0 %2688
  %2690 = vrot.lane.b32.xlu0 %v2195, 64
  %v2691 = vpop.permute.xlu0 %2690
  %2692 = vrot.lane.b32.xlu0 %v2196, 64
  %v2693 = vpop.permute.xlu0 %2692
  %2694 = vrot.lane.b32.xlu0 %v2197, 64
  %v2695 = vpop.permute.xlu0 %2694
  %2696 = vrot.lane.b32.xlu0 %v2198, 64
  %v2697 = vpop.permute.xlu0 %2696
  %2698 = vrot.lane.b32.xlu0 %v2199, 64
  %v2699 = vpop.permute.xlu0 %2698
  %2700 = vrot.lane.b32.xlu0 %v2200, 64
  %v2701 = vpop.permute.xlu0 %2700
  %2702 = vrot.lane.b32.xlu0 %v2201, 64
  %v2703 = vpop.permute.xlu0 %2702
  %2704 = vrot.lane.b32.xlu0 %v2202, 64
  %v2705 = vpop.permute.xlu0 %2704
  %2706 = vrot.lane.b32.xlu0 %v2203, 64
  %v2707 = vpop.permute.xlu0 %2706
  %2708 = vrot.lane.b32.xlu0 %v2204, 64
  %v2709 = vpop.permute.xlu0 %2708
  %2710 = vrot.lane.b32.xlu0 %v2205, 64
  %v2711 = vpop.permute.xlu0 %2710
  %2712 = vrot.lane.b32.xlu0 %v2206, 64
  %v2713 = vpop.permute.xlu0 %2712
  %2714 = vrot.lane.b32.xlu0 %v2207, 64
  %v2715 = vpop.permute.xlu0 %2714
  %2740 = vmatprep.subr.mxu0 0.0
  %2741 = vmatpush1.msra.mxu0 %v2669
  %2742 = vmatprep.subr.mxu0 0.0
  %2743 = vmatpush1.msra.mxu0 %v2671
  %2744 = vmatprep.subr.mxu0 0.0
  %2745 = vmatpush1.msra.mxu0 %v2673
  %2746 = vmatprep.subr.mxu0 0.0
  %2747 = vmatpush1.msra.mxu0 %v2675
  %2748 = vmatprep.subr.mxu0 0.0
  %2749 = vmatpush1.msra.mxu0 %v2677
  %2750 = vmatprep.subr.mxu0 0.0
  %2751 = vmatpush1.msra.mxu0 %v2679
  %2752 = vmatprep.subr.mxu0 0.0
  %2753 = vmatpush1.msra.mxu0 %v2681
  %2754 = vmatprep.subr.mxu0 0.0
  %2755 = vmatpush1.msra.mxu0 %v2683
  %2756 = vmatprep.subr.mxu0 0.0
  %2757 = vmatpush1.msra.mxu0 %v2685
  %2758 = vmatprep.subr.mxu0 0.0
  %2759 = vmatpush1.msra.mxu0 %v2687
  %2760 = vmatprep.subr.mxu0 0.0
  %2761 = vmatpush1.msra.mxu0 %v2689
  %2762 = vmatprep.subr.mxu0 0.0
  %2763 = vmatpush1.msra.mxu0 %v2691
  %2764 = vmatprep.subr.mxu0 0.0
  %2765 = vmatpush1.msra.mxu0 %v2693
  %2766 = vmatprep.subr.mxu0 0.0
  %2767 = vmatpush1.msra.mxu0 %v2695
  %2768 = vmatprep.subr.mxu0 0.0
  %2769 = vmatpush1.msra.mxu0 %v2697
  %2770 = vmatprep.subr.mxu0 0.0
  %2771 = vmatpush1.msra.mxu0 %v2699
  %2772 = vmatprep.subr.mxu0 0.0
  %2773 = vmatpush1.msra.mxu0 %v2701
  %2774 = vmatprep.subr.mxu0 0.0
  %2775 = vmatpush1.msra.mxu0 %v2703
  %2776 = vmatprep.subr.mxu0 0.0
  %2777 = vmatpush1.msra.mxu0 %v2705
  %2778 = vmatprep.subr.mxu0 0.0
  %2779 = vmatpush1.msra.mxu0 %v2707
  %2780 = vmatprep.subr.mxu0 0.0
  %2781 = vmatpush1.msra.mxu0 %v2709
  %2782 = vmatprep.subr.mxu0 0.0
  %2783 = vmatpush1.msra.mxu0 %v2711
  %2784 = vmatprep.subr.mxu0 0.0
  %2785 = vmatpush1.msra.mxu0 %v2713
  %2786 = vmatprep.subr.mxu0 0.0
  %2787 = vmatpush1.msra.mxu0 %v2715
  %2788 = vmatprep.subr.mxu0 0.0
  %2789 = vmatpush1.msra.mxu0 0.0
  %2790 = vmatprep.subr.mxu0 0.0
  %2791 = vmatpush1.msra.mxu0 0.0
  %2792 = vmatprep.subr.mxu0 0.0
  %2793 = vmatpush1.msra.mxu0 0.0
  %2794 = vmatprep.subr.mxu0 0.0
  %2795 = vmatpush1.msra.mxu0 0.0
  %2796 = vmatprep.subr.mxu0 0.0
  %2797 = vmatpush1.msra.mxu0 0.0
  %2798 = vmatprep.subr.mxu0 0.0
  %2799 = vmatpush1.msra.mxu0 0.0
  %2800 = vmatprep.subr.mxu0 0.0
  %2801 = vmatpush1.msra.mxu0 0.0
  %2802 = vmatprep.subr.mxu0 0.0
  %2803 = vmatpush1.msra.mxu0 0.0
  %2804 = vmatprep.mubr.f32.mxu0 %v2532
  %2805 = vmatmul.mubr.f32.gmra.mrb[0].mxu0 %v2508
  %v2806 = vpop.f32.mrb[0].mxu0
  %v2807 = vadd.f32 0.0, %v2806
  %v2808 = vpop.f32.mrb[0].mxu0
  %2809 = vmatprep.mubr.f32.mxu0 %v2535
  %2810 = vmatmul.mubr.f32.gmra.mrb[0].mxu0 %v2512
  %v2811 = vpop.f32.mrb[0].mxu0
  %v2812 = vadd.f32 0.0, %v2811
  %v2813 = vpop.f32.mrb[0].mxu0
  %2814 = vmatprep.mubr.f32.mxu0 %v2538
  %2815 = vmatmul.mubr.f32.gmra.mrb[0].mxu0 %v2516
  %v2816 = vpop.f32.mrb[0].mxu0
  %v2817 = vadd.f32 0.0, %v2816
  %v2818 = vpop.f32.mrb[0].mxu0
  %2819 = vmatprep.mubr.f32.mxu0 %v2541
  %2820 = vmatmul.mubr.f32.gmra.mrb[0].mxu0 %v2520
  %v2821 = vpop.f32.mrb[0].mxu0
  %v2822 = vadd.f32 0.0, %v2821
  %v2823 = vpop.f32.mrb[0].mxu0
  %2824 = vmatprep.mubr.f32.mxu0 %v2544
  %2825 = vmatmul.mubr.f32.gmra.mrb[0].mxu0 %v2524
  %v2826 = vpop.f32.mrb[0].mxu0
  %v2827 = vadd.f32 0.0, %v2826
  %v2828 = vpop.f32.mrb[0].mxu0
  %2829 = vmatprep.mubr.f32.mxu0 %v2547
  %2830 = vmatmul.mubr.f32.gmra.mrb[0].mxu0 %v2528
  %v2831 = vpop.f32.mrb[0].mxu0
  %v2832 = vadd.f32 0.0, %v2831
  %v2833 = vpop.f32.mrb[0].mxu0
  %2834 = vdwg.mxu0
  %v2835 = vrcp.pop %v2616
  %v2836 = vrcp.pop %v2621
  %v2837 = vrcp.pop %v2626
  %v2838 = vrcp.pop %v2631
  %v2839 = vrcp.pop %v2636
  %v2840 = vrcp.pop %v2641
  %v2841 = vmul.f32 %v2807, %v2835
  %v2842 = vmul.f32 %v2812, %v2836
  %v2843 = vmul.f32 %v2817, %v2837
  %v2844 = vmul.f32 %v2822, %v2838
  %v2845 = vmul.f32 %v2827, %v2839
  %v2846 = vmul.f32 %v2832, %v2840
  %v2848 = vsel %vm175, %v2841, 0
  %v2851 = vsel %vm175, %v2842, 0
  %v2854 = vsel %vm175, %v2843, 0
  %v2857 = vsel %vm175, %v2844, 0
  %v2860 = vsel %vm175, %v2845, 0
  %v2863 = vsel %vm175, %v2846, 0
  %2865 = vmatprep.subr.mxu0 0.0
  %2866 = vmatpush1.msra.mxu0 %v1917
  %2867 = vmatprep.subr.mxu0 0.0
  %2868 = vmatpush1.msra.mxu0 %v1918
  %2869 = vmatprep.subr.mxu0 0.0
  %2870 = vmatpush1.msra.mxu0 %v1919
  %2871 = vmatprep.subr.mxu0 0.0
  %2872 = vmatpush1.msra.mxu0 %v1920
  %2873 = vmatprep.subr.mxu0 0.0
  %2874 = vmatpush1.msra.mxu0 0.0
  %2875 = vmatprep.subr.mxu0 0.0
  %2876 = vmatpush1.msra.mxu0 0.0
  %2877 = vmatprep.subr.mxu0 0.0
  %2878 = vmatpush1.msra.mxu0 0.0
  %2879 = vmatprep.subr.mxu0 0.0
  %2880 = vmatpush1.msra.mxu0 0.0
  %2881 = vmatprep.subr.mxu0 0.0
  %2882 = vmatpush1.msra.mxu0 0.0
  %2883 = vmatprep.subr.mxu0 0.0
  %2884 = vmatpush1.msra.mxu0 0.0
  %2885 = vmatprep.subr.mxu0 0.0
  %2886 = vmatpush1.msra.mxu0 0.0
  %2887 = vmatprep.subr.mxu0 0.0
  %2888 = vmatpush1.msra.mxu0 0.0
  %2889 = vmatprep.subr.mxu0 0.0
  %2890 = vmatpush1.msra.mxu0 0.0
  %2891 = vmatprep.subr.mxu0 0.0
  %2892 = vmatpush1.msra.mxu0 0.0
  %2893 = vmatprep.subr.mxu0 0.0
  %2894 = vmatpush1.msra.mxu0 0.0
  %2895 = vmatprep.subr.mxu0 0.0
  %2896 = vmatpush1.msra.mxu0 0.0
  %2897 = vmatprep.subr.mxu0 0.0
  %2898 = vmatpush1.msra.mxu0 0.0
  %2899 = vmatprep.subr.mxu0 0.0
  %2900 = vmatpush1.msra.mxu0 0.0
  %2901 = vmatprep.subr.mxu0 0.0
  %2902 = vmatpush1.msra.mxu0 0.0
  %2903 = vmatprep.subr.mxu0 0.0
  %2904 = vmatpush1.msra.mxu0 0.0
  %2905 = vmatprep.subr.mxu0 0.0
  %2906 = vmatpush1.msra.mxu0 0.0
  %2907 = vmatprep.subr.mxu0 0.0
  %2908 = vmatpush1.msra.mxu0 0.0
  %2909 = vmatprep.subr.mxu0 0.0
  %2910 = vmatpush1.msra.mxu0 0.0
  %2911 = vmatprep.subr.mxu0 0.0
  %2912 = vmatpush1.msra.mxu0 0.0
  %2913 = vmatprep.subr.mxu0 0.0
  %2914 = vmatpush1.msra.mxu0 0.0
  %2915 = vmatprep.subr.mxu0 0.0
  %2916 = vmatpush1.msra.mxu0 0.0
  %2917 = vmatprep.subr.mxu0 0.0
  %2918 = vmatpush1.msra.mxu0 0.0
  %2919 = vmatprep.subr.mxu0 0.0
  %2920 = vmatpush1.msra.mxu0 0.0
  %2921 = vmatprep.subr.mxu0 0.0
  %2922 = vmatpush1.msra.mxu0 0.0
  %2923 = vmatprep.subr.mxu0 0.0
  %2924 = vmatpush1.msra.mxu0 0.0
  %2925 = vmatprep.subr.mxu0 0.0
  %2926 = vmatpush1.msra.mxu0 0.0
  %2927 = vmatprep.subr.mxu0 0.0
  %2928 = vmatpush1.msra.mxu0 0.0
  %2929 = vmatprep.mubr.f32.mxu0 0.0
  %2930 = vmatmul.mubr.f32.gmra.mrb[0].mxu0 %v2848
  %v2931 = vpop.f32.mrb[0].mxu0
  %v2932 = vadd.f32 0.0, %v2931
  %v2933 = vpop.f32.mrb[0].mxu0
  %2934 = vmatprep.mubr.f32.mxu0 0.0
  %2935 = vmatmul.mubr.f32.gmra.mrb[0].mxu0 %v2851
  %v2936 = vpop.f32.mrb[0].mxu0
  %v2937 = vadd.f32 0.0, %v2936
  %v2938 = vpop.f32.mrb[0].mxu0
  %2939 = vmatprep.mubr.f32.mxu0 0.0
  %2940 = vmatmul.mubr.f32.gmra.mrb[0].mxu0 %v2854
  %v2941 = vpop.f32.mrb[0].mxu0
  %v2942 = vadd.f32 0.0, %v2941
  %v2943 = vpop.f32.mrb[0].mxu0
  %2944 = vmatprep.mubr.f32.mxu0 0.0
  %2945 = vmatmul.mubr.f32.gmra.mrb[0].mxu0 %v2857
  %v2946 = vpop.f32.mrb[0].mxu0
  %v2947 = vadd.f32 0.0, %v2946
  %v2948 = vpop.f32.mrb[0].mxu0
  %2949 = vmatprep.mubr.f32.mxu0 0.0
  %2950 = vmatmul.mubr.f32.gmra.mrb[0].mxu0 %v2860
  %v2951 = vpop.f32.mrb[0].mxu0
  %v2952 = vadd.f32 0.0, %v2951
  %v2953 = vpop.f32.mrb[0].mxu0
  %2954 = vmatprep.mubr.f32.mxu0 0.0
  %2955 = vmatmul.mubr.f32.gmra.mrb[0].mxu0 %v2863
  %v2956 = vpop.f32.mrb[0].mxu0
  %v2957 = vadd.f32 0.0, %v2956
  %v2958 = vpop.f32.mrb[0].mxu0
  %2959 = vdwg.mxu0
  %v2960 = vadd.f32 %v1903, %v2932
  %v2961 = vadd.f32 %v1904, %v2937
  %v2962 = vadd.f32 %v1905, %v2942
  %v2963 = vadd.f32 %v1906, %v2947
  %v2964 = vadd.f32 %v1907, %v2952
  %v2965 = vadd.f32 %v1908, %v2957
  %v2966 = vlaneseq
  %v2967 = vshrl.u32 %v2966, 7
  %v2968 = vsub.s32 0, %v2967
  %v2969 = vrot.slane %v1939, %v2968
  %v2970 = vadd.f32 %v2960, %v2969
  %v2971 = vadd.f32 %v2961, %v2969
  %v2972 = vadd.f32 %v2962, %v2969
  %v2973 = vadd.f32 %v2963, %v2969
  %v2974 = vadd.f32 %v2964, %v2969
  %v2975 = vadd.f32 %v2965, %v2969
  %v2976 = vsel %vm175, %v2970, 0.0
  %2977 = vadd.xlane.f32.xlu0 %v2976
  %v2978 = vpop.xlane.xlu0 %2977
  %v2979 = vsel %vm175, %v2971, 0.0
  %2980 = vadd.xlane.f32.xlu0 %v2979
  %v2981 = vpop.xlane.xlu0 %2980
  %v2982 = vsel %vm175, %v2972, 0.0
  %2983 = vadd.xlane.f32.xlu0 %v2982
  %v2984 = vpop.xlane.xlu0 %2983
  %v2985 = vsel %vm175, %v2973, 0.0
  %2986 = vadd.xlane.f32.xlu0 %v2985
  %v2987 = vpop.xlane.xlu0 %2986
  %v2988 = vsel %vm175, %v2974, 0.0
  %2989 = vadd.xlane.f32.xlu0 %v2988
  %v2990 = vpop.xlane.xlu0 %2989
  %v2991 = vsel %vm175, %v2975, 0.0
  %2992 = vadd.xlane.f32.xlu0 %v2991
  %v2993 = vpop.xlane.xlu0 %2992
  %v2994 = vmul.f32 %v2978, %v194
  %v2995 = vmul.f32 %v2981, %v194
  %v2996 = vmul.f32 %v2984, %v194
  %v2997 = vmul.f32 %v2987, %v194
  %v2998 = vmul.f32 %v2990, %v194
  %v2999 = vmul.f32 %v2993, %v194
  %v3000 = vsub.f32 %v2970, %v2994
  %v3001 = vsub.f32 %v2971, %v2995
  %v3002 = vsub.f32 %v2972, %v2996
  %v3003 = vsub.f32 %v2973, %v2997
  %v3004 = vsub.f32 %v2974, %v2998
  %v3005 = vsub.f32 %v2975, %v2999
  %v3006 = vmul.f32 %v3000, %v3000
  %v3007 = vmul.f32 %v3001, %v3001
  %v3008 = vmul.f32 %v3002, %v3002
  %v3009 = vmul.f32 %v3003, %v3003
  %v3010 = vmul.f32 %v3004, %v3004
  %v3011 = vmul.f32 %v3005, %v3005
  %v3012 = vsel %vm175, %v3006, 0.0
  %3013 = vadd.xlane.f32.xlu0 %v3012
  %v3014 = vpop.xlane.xlu0 %3013
  %v3015 = vsel %vm175, %v3007, 0.0
  %3016 = vadd.xlane.f32.xlu0 %v3015
  %v3017 = vpop.xlane.xlu0 %3016
  %v3018 = vsel %vm175, %v3008, 0.0
  %3019 = vadd.xlane.f32.xlu0 %v3018
  %v3020 = vpop.xlane.xlu0 %3019
  %v3021 = vsel %vm175, %v3009, 0.0
  %3022 = vadd.xlane.f32.xlu0 %v3021
  %v3023 = vpop.xlane.xlu0 %3022
  %v3024 = vsel %vm175, %v3010, 0.0
  %3025 = vadd.xlane.f32.xlu0 %v3024
  %v3026 = vpop.xlane.xlu0 %3025
  %v3027 = vsel %vm175, %v3011, 0.0
  %3028 = vadd.xlane.f32.xlu0 %v3027
  %v3029 = vpop.xlane.xlu0 %3028
  %v3030 = vmul.f32 %v3014, %v194
  %v3031 = vmul.f32 %v3017, %v194
  %v3032 = vmul.f32 %v3020, %v194
  %v3033 = vmul.f32 %v3023, %v194
  %v3034 = vmul.f32 %v3026, %v194
  %v3035 = vmul.f32 %v3029, %v194
  %v3036 = vadd.f32 %v3030, 1e-05
  %v3037 = vadd.f32 %v3031, 1e-05
  %v3038 = vadd.f32 %v3032, 1e-05
  %v3039 = vadd.f32 %v3033, 1e-05
  %v3040 = vadd.f32 %v3034, 1e-05
  %v3041 = vadd.f32 %v3035, 1e-05
  %v3042 = vrsqrt.pop %v3036
  %v3043 = vrsqrt.pop %v3037
  %v3044 = vrsqrt.pop %v3038
  %v3045 = vrsqrt.pop %v3039
  %v3046 = vrsqrt.pop %v3040
  %v3047 = vrsqrt.pop %v3041
  %v3048 = vmul.f32 %v3000, %v3042
  %v3049 = vmul.f32 %v3001, %v3043
  %v3050 = vmul.f32 %v3002, %v3044
  %v3051 = vmul.f32 %v3003, %v3045
  %v3052 = vmul.f32 %v3004, %v3046
  %v3053 = vmul.f32 %v3005, %v3047
  %v3054 = vlaneseq
  %v3055 = vshrl.u32 %v3054, 7
  %v3056 = vsub.s32 0, %v3055
  %v3057 = vrot.slane %v1943, %v3056
  %v3058 = vmul.f32 %v3048, %v3057
  %v3059 = vmul.f32 %v3049, %v3057
  %v3060 = vmul.f32 %v3050, %v3057
  %v3061 = vmul.f32 %v3051, %v3057
  %v3062 = vmul.f32 %v3052, %v3057
  %v3063 = vmul.f32 %v3053, %v3057
  %v3064 = vlaneseq
  %v3065 = vshrl.u32 %v3064, 7
  %v3066 = vsub.s32 0, %v3065
  %v3067 = vrot.slane %v1944, %v3066
  %v3068 = vadd.f32 %v3058, %v3067
  %v3069 = vadd.f32 %v3059, %v3067
  %v3070 = vadd.f32 %v3060, %v3067
  %v3071 = vadd.f32 %v3061, %v3067
  %v3072 = vadd.f32 %v3062, %v3067
  %v3073 = vadd.f32 %v3063, %v3067
  %v3074 = vlaneseq
  %v3075 = vshrl.u32 %v3074, 7
  %v3076 = vsub.s32 0, %v3075
  %v3077 = vrot.slane %v1938, %v3076
  %v3079 = vsel %vm175, %v3068, 0
  %v3082 = vsel %vm175, %v3069, 0
  %v3085 = vsel %vm175, %v3070, 0
  %v3088 = vsel %vm175, %v3071, 0
  %v3091 = vsel %vm175, %v3072, 0
  %v3094 = vsel %vm175, %v3073, 0
  %3096 = vmatprep.subr.mxu0 0.0
  %3097 = vmatpush1.msra.mxu0 %v1913
  %3098 = vmatprep.subr.mxu0 0.0
  %3099 = vmatpush1.msra.mxu0 %v1914
  %3100 = vmatprep.subr.mxu0 0.0
  %3101 = vmatpush1.msra.mxu0 %v1915
  %3102 = vmatprep.subr.mxu0 0.0
  %3103 = vmatpush1.msra.mxu0 %v1916
  %3104 = vmatprep.subr.mxu0 0.0
  %3105 = vmatpush1.msra.mxu0 0.0
  %3106 = vmatprep.subr.mxu0 0.0
  %3107 = vmatpush1.msra.mxu0 0.0
  %3108 = vmatprep.subr.mxu0 0.0
  %3109 = vmatpush1.msra.mxu0 0.0
  %3110 = vmatprep.subr.mxu0 0.0
  %3111 = vmatpush1.msra.mxu0 0.0
  %3112 = vmatprep.subr.mxu0 0.0
  %3113 = vmatpush1.msra.mxu0 0.0
  %3114 = vmatprep.subr.mxu0 0.0
  %3115 = vmatpush1.msra.mxu0 0.0
  %3116 = vmatprep.subr.mxu0 0.0
  %3117 = vmatpush1.msra.mxu0 0.0
  %3118 = vmatprep.subr.mxu0 0.0
  %3119 = vmatpush1.msra.mxu0 0.0
  %3120 = vmatprep.subr.mxu0 0.0
  %3121 = vmatpush1.msra.mxu0 0.0
  %3122 = vmatprep.subr.mxu0 0.0
  %3123 = vmatpush1.msra.mxu0 0.0
  %3124 = vmatprep.subr.mxu0 0.0
  %3125 = vmatpush1.msra.mxu0 0.0
  %3126 = vmatprep.subr.mxu0 0.0
  %3127 = vmatpush1.msra.mxu0 0.0
  %3128 = vmatprep.subr.mxu0 0.0
  %3129 = vmatpush1.msra.mxu0 0.0
  %3130 = vmatprep.subr.mxu0 0.0
  %3131 = vmatpush1.msra.mxu0 0.0
  %3132 = vmatprep.subr.mxu0 0.0
  %3133 = vmatpush1.msra.mxu0 0.0
  %3134 = vmatprep.subr.mxu0 0.0
  %3135 = vmatpush1.msra.mxu0 0.0
  %3136 = vmatprep.subr.mxu0 0.0
  %3137 = vmatpush1.msra.mxu0 0.0
  %3138 = vmatprep.subr.mxu0 0.0
  %3139 = vmatpush1.msra.mxu0 0.0
  %3140 = vmatprep.subr.mxu0 0.0
  %3141 = vmatpush1.msra.mxu0 0.0
  %3142 = vmatprep.subr.mxu0 0.0
  %3143 = vmatpush1.msra.mxu0 0.0
  %3144 = vmatprep.subr.mxu0 0.0
  %3145 = vmatpush1.msra.mxu0 0.0
  %3146 = vmatprep.subr.mxu0 0.0
  %3147 = vmatpush1.msra.mxu0 0.0
  %3148 = vmatprep.subr.mxu0 0.0
  %3149 = vmatpush1.msra.mxu0 0.0
  %3150 = vmatprep.subr.mxu0 0.0
  %3151 = vmatpush1.msra.mxu0 0.0
  %3152 = vmatprep.subr.mxu0 0.0
  %3153 = vmatpush1.msra.mxu0 0.0
  %3154 = vmatprep.subr.mxu0 0.0
  %3155 = vmatpush1.msra.mxu0 0.0
  %3156 = vmatprep.subr.mxu0 0.0
  %3157 = vmatpush1.msra.mxu0 0.0
  %3158 = vmatprep.subr.mxu0 0.0
  %3159 = vmatpush1.msra.mxu0 0.0
  %3160 = vmatprep.mubr.f32.mxu0 0.0
  %3161 = vmatmul.mubr.f32.gmra.mrb[0].mxu0 %v3079
  %v3162 = vpop.f32.mrb[0].mxu0
  %v3163 = vadd.f32 %v3077, %v3162
  %v3164 = vpop.f32.mrb[0].mxu0
  %3165 = vmatprep.mubr.f32.mxu0 0.0
  %3166 = vmatmul.mubr.f32.gmra.mrb[0].mxu0 %v3082
  %v3167 = vpop.f32.mrb[0].mxu0
  %v3168 = vadd.f32 %v3077, %v3167
  %v3169 = vpop.f32.mrb[0].mxu0
  %3170 = vmatprep.mubr.f32.mxu0 0.0
  %3171 = vmatmul.mubr.f32.gmra.mrb[0].mxu0 %v3085
  %v3172 = vpop.f32.mrb[0].mxu0
  %v3173 = vadd.f32 %v3077, %v3172
  %v3174 = vpop.f32.mrb[0].mxu0
  %3175 = vmatprep.mubr.f32.mxu0 0.0
  %3176 = vmatmul.mubr.f32.gmra.mrb[0].mxu0 %v3088
  %v3177 = vpop.f32.mrb[0].mxu0
  %v3178 = vadd.f32 %v3077, %v3177
  %v3179 = vpop.f32.mrb[0].mxu0
  %3180 = vmatprep.mubr.f32.mxu0 0.0
  %3181 = vmatmul.mubr.f32.gmra.mrb[0].mxu0 %v3091
  %v3182 = vpop.f32.mrb[0].mxu0
  %v3183 = vadd.f32 %v3077, %v3182
  %v3184 = vpop.f32.mrb[0].mxu0
  %3185 = vmatprep.mubr.f32.mxu0 0.0
  %3186 = vmatmul.mubr.f32.gmra.mrb[0].mxu0 %v3094
  %v3187 = vpop.f32.mrb[0].mxu0
  %v3188 = vadd.f32 %v3077, %v3187
  %v3189 = vpop.f32.mrb[0].mxu0
  %3190 = vdwg.mxu0
  %v3191 = vmul.f32 %v3163, 0.5
  %v3192 = vmul.f32 %v3168, 0.5
  %v3193 = vmul.f32 %v3173, 0.5
  %v3194 = vmul.f32 %v3178, 0.5
  %v3195 = vmul.f32 %v3183, 0.5
  %v3196 = vmul.f32 %v3188, 0.5
  %v3197 = vmul.f32 %v3163, %v3163
  %v3198 = vmul.f32 %v3168, %v3168
  %v3199 = vmul.f32 %v3173, %v3173
  %v3200 = vmul.f32 %v3178, %v3178
  %v3201 = vmul.f32 %v3183, %v3183
  %v3202 = vmul.f32 %v3188, %v3188
  %v3203 = vmul.f32 %v3163, %v3197
  %v3204 = vmul.f32 %v3168, %v3198
  %v3205 = vmul.f32 %v3173, %v3199
  %v3206 = vmul.f32 %v3178, %v3200
  %v3207 = vmul.f32 %v3183, %v3201
  %v3208 = vmul.f32 %v3188, %v3202
  %v3209 = vmul.f32 %v3203, 0.044715
  %v3210 = vmul.f32 %v3204, 0.044715
  %v3211 = vmul.f32 %v3205, 0.044715
  %v3212 = vmul.f32 %v3206, 0.044715
  %v3213 = vmul.f32 %v3207, 0.044715
  %v3214 = vmul.f32 %v3208, 0.044715
  %v3215 = vadd.f32 %v3163, %v3209
  %v3216 = vadd.f32 %v3168, %v3210
  %v3217 = vadd.f32 %v3173, %v3211
  %v3218 = vadd.f32 %v3178, %v3212
  %v3219 = vadd.f32 %v3183, %v3213
  %v3220 = vadd.f32 %v3188, %v3214
  %v3221 = vmul.f32 %v3215, 0.7978846
  %v3222 = vmul.f32 %v3216, 0.7978846
  %v3223 = vmul.f32 %v3217, 0.7978846
  %v3224 = vmul.f32 %v3218, 0.7978846
  %v3225 = vmul.f32 %v3219, 0.7978846
  %v3226 = vmul.f32 %v3220, 0.7978846
  %v3227 = vtanh.pop %v3221
  %v3228 = vtanh.pop %v3222
  %v3229 = vtanh.pop %v3223
  %v3230 = vtanh.pop %v3224
  %v3231 = vtanh.pop %v3225
  %v3232 = vtanh.pop %v3226
  %v3233 = vadd.f32 %v3227, 1.0
  %v3234 = vadd.f32 %v3228, 1.0
  %v3235 = vadd.f32 %v3229, 1.0
  %v3236 = vadd.f32 %v3230, 1.0
  %v3237 = vadd.f32 %v3231, 1.0
  %v3238 = vadd.f32 %v3232, 1.0
  %v3239 = vmul.f32 %v3191, %v3233
  %v3240 = vmul.f32 %v3192, %v3234
  %v3241 = vmul.f32 %v3193, %v3235
  %v3242 = vmul.f32 %v3194, %v3236
  %v3243 = vmul.f32 %v3195, %v3237
  %v3244 = vmul.f32 %v3196, %v3238
  %3245 = vmatprep.subr.mxu0 0.0
  %3246 = vmatpush1.msra.mxu0 %v1921
  %3247 = vmatprep.subr.mxu0 0.0
  %3248 = vmatpush1.msra.mxu0 %v1922
  %3249 = vmatprep.subr.mxu0 0.0
  %3250 = vmatpush1.msra.mxu0 %v1923
  %3251 = vmatprep.subr.mxu0 0.0
  %3252 = vmatpush1.msra.mxu0 %v1924
  %3253 = vmatprep.subr.mxu0 0.0
  %3254 = vmatpush1.msra.mxu0 %v1925
  %3255 = vmatprep.subr.mxu0 0.0
  %3256 = vmatpush1.msra.mxu0 %v1926
  %3257 = vmatprep.subr.mxu0 0.0
  %3258 = vmatpush1.msra.mxu0 %v1927
  %3259 = vmatprep.subr.mxu0 0.0
  %3260 = vmatpush1.msra.mxu0 %v1928
  %3261 = vmatprep.subr.mxu0 0.0
  %3262 = vmatpush1.msra.mxu0 %v1929
  %3263 = vmatprep.subr.mxu0 0.0
  %3264 = vmatpush1.msra.mxu0 %v1930
  %3265 = vmatprep.subr.mxu0 0.0
  %3266 = vmatpush1.msra.mxu0 %v1931
  %3267 = vmatprep.subr.mxu0 0.0
  %3268 = vmatpush1.msra.mxu0 %v1932
  %3269 = vmatprep.subr.mxu0 0.0
  %3270 = vmatpush1.msra.mxu0 %v1933
  %3271 = vmatprep.subr.mxu0 0.0
  %3272 = vmatpush1.msra.mxu0 %v1934
  %3273 = vmatprep.subr.mxu0 0.0
  %3274 = vmatpush1.msra.mxu0 %v1935
  %3275 = vmatprep.subr.mxu0 0.0
  %3276 = vmatpush1.msra.mxu0 %v1936
  %3277 = vmatprep.subr.mxu0 0.0
  %3278 = vmatpush1.msra.mxu0 0.0
  %3279 = vmatprep.subr.mxu0 0.0
  %3280 = vmatpush1.msra.mxu0 0.0
  %3281 = vmatprep.subr.mxu0 0.0
  %3282 = vmatpush1.msra.mxu0 0.0
  %3283 = vmatprep.subr.mxu0 0.0
  %3284 = vmatpush1.msra.mxu0 0.0
  %3285 = vmatprep.subr.mxu0 0.0
  %3286 = vmatpush1.msra.mxu0 0.0
  %3287 = vmatprep.subr.mxu0 0.0
  %3288 = vmatpush1.msra.mxu0 0.0
  %3289 = vmatprep.subr.mxu0 0.0
  %3290 = vmatpush1.msra.mxu0 0.0
  %3291 = vmatprep.subr.mxu0 0.0
  %3292 = vmatpush1.msra.mxu0 0.0
  %3293 = vmatprep.subr.mxu0 0.0
  %3294 = vmatpush1.msra.mxu0 0.0
  %3295 = vmatprep.subr.mxu0 0.0
  %3296 = vmatpush1.msra.mxu0 0.0
  %3297 = vmatprep.subr.mxu0 0.0
  %3298 = vmatpush1.msra.mxu0 0.0
  %3299 = vmatprep.subr.mxu0 0.0
  %3300 = vmatpush1.msra.mxu0 0.0
  %3301 = vmatprep.subr.mxu0 0.0
  %3302 = vmatpush1.msra.mxu0 0.0
  %3303 = vmatprep.subr.mxu0 0.0
  %3304 = vmatpush1.msra.mxu0 0.0
  %3305 = vmatprep.subr.mxu0 0.0
  %3306 = vmatpush1.msra.mxu0 0.0
  %3307 = vmatprep.subr.mxu0 0.0
  %3308 = vmatpush1.msra.mxu0 0.0
  %3309 = vmatprep.mubr.f32.mxu0 0.0
  %3310 = vmatmul.mubr.f32.gmra.mrb[0].mxu0 %v3239
  %v3311 = vpop.f32.mrb[0].mxu0
  %v3312 = vpop.f32.mrb[0].mxu0
  %3313 = vmatprep.mubr.f32.mxu0 0.0
  %3314 = vmatmul.mubr.f32.gmra.mrb[0].mxu0 %v3240
  %v3315 = vpop.f32.mrb[0].mxu0
  %v3316 = vadd.f32 0.0, %v3315
  %v3317 = vpop.f32.mrb[0].mxu0
  %3318 = vmatprep.mubr.f32.mxu0 0.0
  %3319 = vmatmul.mubr.f32.gmra.mrb[0].mxu0 %v3241
  %v3320 = vpop.f32.mrb[0].mxu0
  %v3321 = vadd.f32 0.0, %v3320
  %v3322 = vpop.f32.mrb[0].mxu0
  %3323 = vmatprep.mubr.f32.mxu0 0.0
  %3324 = vmatmul.mubr.f32.gmra.mrb[0].mxu0 %v3242
  %v3325 = vpop.f32.mrb[0].mxu0
  %v3326 = vpop.f32.mrb[0].mxu0
  %3327 = vmatprep.mubr.f32.mxu0 0.0
  %3328 = vmatmul.mubr.f32.gmra.mrb[0].mxu0 %v3243
  %v3329 = vpop.f32.mrb[0].mxu0
  %v3330 = vadd.f32 0.0, %v3329
  %v3331 = vpop.f32.mrb[0].mxu0
  %3332 = vmatprep.mubr.f32.mxu0 0.0
  %3333 = vmatmul.mubr.f32.gmra.mrb[0].mxu0 %v3244
  %v3334 = vpop.f32.mrb[0].mxu0
  %v3335 = vadd.f32 0.0, %v3334
  %v3336 = vpop.f32.mrb[0].mxu0
  %3337 = vdwg.mxu0
  %v3338 = vadd.f32 %v2971, %v3316
  %v3339 = vadd.f32 %v2972, %v3321
  %v3340 = vadd.f32 %v2974, %v3330
  %v3341 = vadd.f32 %v2975, %v3335
  %v3342 = vlaneseq
  %v3343 = vshrl.u32 %v3342, 7
  %v3344 = vsub.s32 0, %v3343
  %v3345 = vrot.slane %v1940, %v3344
  %v3346 = vadd.f32 %v3338, %v3345
  %v3347 = vadd.f32 %v3339, %v3345
  %v3348 = vadd.f32 %v3340, %v3345
  %v3349 = vadd.f32 %v3341, %v3345
  %v3350 = vsel %vm175, %v3346, 0.0
  %3351 = vadd.xlane.f32.xlu0 %v3350
  %v3352 = vpop.xlane.xlu0 %3351
  %v3353 = vsel %vm175, %v3347, 0.0
  %3354 = vadd.xlane.f32.xlu0 %v3353
  %v3355 = vpop.xlane.xlu0 %3354
  %v3356 = vsel %vm175, %v3348, 0.0
  %3357 = vadd.xlane.f32.xlu0 %v3356
  %v3358 = vpop.xlane.xlu0 %3357
  %v3359 = vsel %vm175, %v3349, 0.0
  %3360 = vadd.xlane.f32.xlu0 %v3359
  %v3361 = vpop.xlane.xlu0 %3360
  %v3362 = vmul.f32 %v3352, %v194
  %v3363 = vmul.f32 %v3355, %v194
  %v3364 = vmul.f32 %v3358, %v194
  %v3365 = vmul.f32 %v3361, %v194
  %v3366 = vsub.f32 %v3346, %v3362
  %v3367 = vsub.f32 %v3347, %v3363
  %v3368 = vsub.f32 %v3348, %v3364
  %v3369 = vsub.f32 %v3349, %v3365
  %v3370 = vmul.f32 %v3366, %v3366
  %v3371 = vmul.f32 %v3367, %v3367
  %v3372 = vmul.f32 %v3368, %v3368
  %v3373 = vmul.f32 %v3369, %v3369
  %v3374 = vsel %vm175, %v3370, 0.0
  %3375 = vadd.xlane.f32.xlu0 %v3374
  %v3376 = vpop.xlane.xlu0 %3375
  %v3377 = vsel %vm175, %v3371, 0.0
  %3378 = vadd.xlane.f32.xlu0 %v3377
  %v3379 = vpop.xlane.xlu0 %3378
  %v3380 = vsel %vm175, %v3372, 0.0
  %3381 = vadd.xlane.f32.xlu0 %v3380
  %v3382 = vpop.xlane.xlu0 %3381
  %v3383 = vsel %vm175, %v3373, 0.0
  %3384 = vadd.xlane.f32.xlu0 %v3383
  %v3385 = vpop.xlane.xlu0 %3384
  %v3386 = vmul.f32 %v3376, %v194
  %v3387 = vmul.f32 %v3379, %v194
  %v3388 = vmul.f32 %v3382, %v194
  %v3389 = vmul.f32 %v3385, %v194
  %v3390 = vadd.f32 %v3386, 1e-05
  %v3391 = vadd.f32 %v3387, 1e-05
  %v3392 = vadd.f32 %v3388, 1e-05
  %v3393 = vadd.f32 %v3389, 1e-05
  %v3394 = vrsqrt.pop %v3390
  %v3395 = vrsqrt.pop %v3391
  %v3396 = vrsqrt.pop %v3392
  %v3397 = vrsqrt.pop %v3393
  %v3398 = vmul.f32 %v3366, %v3394
  %v3399 = vmul.f32 %v3367, %v3395
  %v3400 = vmul.f32 %v3368, %v3396
  %v3401 = vmul.f32 %v3369, %v3397
  %v3402 = vlaneseq
  %v3403 = vshrl.u32 %v3402, 7
  %v3404 = vsub.s32 0, %v3403
  %v3405 = vrot.slane %v53, %v3404
  %v3406 = vmul.f32 %v3398, %v3405
  %v3407 = vmul.f32 %v3399, %v3405
  %v3408 = vmul.f32 %v3400, %v3405
  %v3409 = vmul.f32 %v3401, %v3405
  %v3410 = vlaneseq
  %v3411 = vshrl.u32 %v3410, 7
  %v3412 = vsub.s32 0, %v3411
  %v3413 = vrot.slane %v54, %v3412
  %v3414 = vadd.f32 %v3406, %v3413
  %v3415 = vadd.f32 %v3407, %v3413
  %v3416 = vadd.f32 %v3408, %v3413
  %v3417 = vadd.f32 %v3409, %v3413
  %v3418 = vld [vmem:[%s2 + $0x2f8] sm:$0xff]
  %v3419 = vld [vmem:[%s2 + $0x300] sm:$0xff]
  %v3420 = vld [vmem:[%s2 + $0x308] sm:$0xff]
  %v3421 = vld [vmem:[%s2 + $0x310] sm:$0xff]
  %v3422 = vld [vmem:[%s2 + $0x318] sm:$0xff]
  %v3423 = vld [vmem:[%s2 + $0x320] sm:$0xff]
  %v3424 = vld [vmem:[%s2 + $0x328] sm:$0xff]
  %v3425 = vld [vmem:[%s2 + $0x330] sm:$0xff]
  %v3426 = vld [vmem:[%s2 + $0x33c] sm:$0x1]
  %v3427 = vld [vmem:[%s2 + $0x33d] sm:$0x1]
  %v3428 = vlaneseq
  %v3429 = vshrl.u32 %v3428, 7
  %v3430 = vsub.s32 0, %v3429
  %v3431 = vrot.slane %v3426, %v3430
  %v3433 = vsel %vm175, %v3415, 0
  %v3436 = vsel %vm175, %v3417, 0
  %3438 = vmatprep.subr.mxu0 0.0
  %3439 = vmatpush1.msra.mxu0 %v3418
  %3440 = vmatprep.subr.mxu0 0.0
  %3441 = vmatpush1.msra.mxu0 %v3419
  %3442 = vmatprep.subr.mxu0 0.0
  %3443 = vmatpush1.msra.mxu0 %v3420
  %3444 = vmatprep.subr.mxu0 0.0
  %3445 = vmatpush1.msra.mxu0 %v3421
  %3446 = vmatprep.subr.mxu0 0.0
  %3447 = vmatpush1.msra.mxu0 0.0
  %3448 = vmatprep.subr.mxu0 0.0
  %3449 = vmatpush1.msra.mxu0 0.0
  %3450 = vmatprep.subr.mxu0 0.0
  %3451 = vmatpush1.msra.mxu0 0.0
  %3452 = vmatprep.subr.mxu0 0.0
  %3453 = vmatpush1.msra.mxu0 0.0
  %3454 = vmatprep.subr.mxu0 0.0
  %3455 = vmatpush1.msra.mxu0 0.0
  %3456 = vmatprep.subr.mxu0 0.0
  %3457 = vmatpush1.msra.mxu0 0.0
  %3458 = vmatprep.subr.mxu0 0.0
  %3459 = vmatpush1.msra.mxu0 0.0
  %3460 = vmatprep.subr.mxu0 0.0
  %3461 = vmatpush1.msra.mxu0 0.0
  %3462 = vmatprep.subr.mxu0 0.0
  %3463 = vmatpush1.msra.mxu0 0.0
  %3464 = vmatprep.subr.mxu0 0.0
  %3465 = vmatpush1.msra.mxu0 0.0
  %3466 = vmatprep.subr.mxu0 0.0
  %3467 = vmatpush1.msra.mxu0 0.0
  %3468 = vmatprep.subr.mxu0 0.0
  %3469 = vmatpush1.msra.mxu0 0.0
  %3470 = vmatprep.subr.mxu0 0.0
  %3471 = vmatpush1.msra.mxu0 0.0
  %3472 = vmatprep.subr.mxu0 0.0
  %3473 = vmatpush1.msra.mxu0 0.0
  %3474 = vmatprep.subr.mxu0 0.0
  %3475 = vmatpush1.msra.mxu0 0.0
  %3476 = vmatprep.subr.mxu0 0.0
  %3477 = vmatpush1.msra.mxu0 0.0
  %3478 = vmatprep.subr.mxu0 0.0
  %3479 = vmatpush1.msra.mxu0 0.0
  %3480 = vmatprep.subr.mxu0 0.0
  %3481 = vmatpush1.msra.mxu0 0.0
  %3482 = vmatprep.subr.mxu0 0.0
  %3483 = vmatpush1.msra.mxu0 0.0
  %3484 = vmatprep.subr.mxu0 0.0
  %3485 = vmatpush1.msra.mxu0 0.0
  %3486 = vmatprep.subr.mxu0 0.0
  %3487 = vmatpush1.msra.mxu0 0.0
  %3488 = vmatprep.subr.mxu0 0.0
  %3489 = vmatpush1.msra.mxu0 0.0
  %3490 = vmatprep.subr.mxu0 0.0
  %3491 = vmatpush1.msra.mxu0 0.0
  %3492 = vmatprep.subr.mxu0 0.0
  %3493 = vmatpush1.msra.mxu0 0.0
  %3494 = vmatprep.subr.mxu0 0.0
  %3495 = vmatpush1.msra.mxu0 0.0
  %3496 = vmatprep.subr.mxu0 0.0
  %3497 = vmatpush1.msra.mxu0 0.0
  %3498 = vmatprep.subr.mxu0 0.0
  %3499 = vmatpush1.msra.mxu0 0.0
  %3500 = vmatprep.subr.mxu0 0.0
  %3501 = vmatpush1.msra.mxu0 0.0
  %3502 = vmatprep.mubr.f32.mxu0 0.0
  %3503 = vmatmul.mubr.f32.gmra.mrb[0].mxu0 %v3433
  %v3504 = vpop.f32.mrb[0].mxu0
  %v3505 = vadd.f32 %v3431, %v3504
  %v3506 = vpop.f32.mrb[0].mxu0
  %3507 = vmatprep.mubr.f32.mxu0 0.0
  %3508 = vmatmul.mubr.f32.gmra.mrb[0].mxu0 %v3436
  %v3509 = vpop.f32.mrb[0].mxu0
  %v3510 = vadd.f32 %v3431, %v3509
  %v3511 = vpop.f32.mrb[0].mxu0
  %3512 = vdwg.mxu0
  %v3513 = vlaneseq
  %v3514 = vshrl.u32 %v3513, 7
  %v3515 = vsub.s32 0, %v3514
  %v3516 = vrot.slane %v3427, %v3515
  %v3518 = vsel %vm175, %v3414, 0
  %v3521 = vsel %vm175, %v3416, 0
  %3523 = vmatprep.subr.mxu0 0.0
  %3524 = vmatpush1.msra.mxu0 %v3422
  %3525 = vmatprep.subr.mxu0 0.0
  %3526 = vmatpush1.msra.mxu0 %v3423
  %3527 = vmatprep.subr.mxu0 0.0
  %3528 = vmatpush1.msra.mxu0 %v3424
  %3529 = vmatprep.subr.mxu0 0.0
  %3530 = vmatpush1.msra.mxu0 %v3425
  %3531 = vmatprep.subr.mxu0 0.0
  %3532 = vmatpush1.msra.mxu0 0.0
  %3533 = vmatprep.subr.mxu0 0.0
  %3534 = vmatpush1.msra.mxu0 0.0
  %3535 = vmatprep.subr.mxu0 0.0
  %3536 = vmatpush1.msra.mxu0 0.0
  %3537 = vmatprep.subr.mxu0 0.0
  %3538 = vmatpush1.msra.mxu0 0.0
  %3539 = vmatprep.subr.mxu0 0.0
  %3540 = vmatpush1.msra.mxu0 0.0
  %3541 = vmatprep.subr.mxu0 0.0
  %3542 = vmatpush1.msra.mxu0 0.0
  %3543 = vmatprep.subr.mxu0 0.0
  %3544 = vmatpush1.msra.mxu0 0.0
  %3545 = vmatprep.subr.mxu0 0.0
  %3546 = vmatpush1.msra.mxu0 0.0
  %3547 = vmatprep.subr.mxu0 0.0
  %3548 = vmatpush1.msra.mxu0 0.0
  %3549 = vmatprep.subr.mxu0 0.0
  %3550 = vmatpush1.msra.mxu0 0.0
  %3551 = vmatprep.subr.mxu0 0.0
  %3552 = vmatpush1.msra.mxu0 0.0
  %3553 = vmatprep.subr.mxu0 0.0
  %3554 = vmatpush1.msra.mxu0 0.0
  %3555 = vmatprep.subr.mxu0 0.0
  %3556 = vmatpush1.msra.mxu0 0.0
  %3557 = vmatprep.subr.mxu0 0.0
  %3558 = vmatpush1.msra.mxu0 0.0
  %3559 = vmatprep.subr.mxu0 0.0
  %3560 = vmatpush1.msra.mxu0 0.0
  %3561 = vmatprep.subr.mxu0 0.0
  %3562 = vmatpush1.msra.mxu0 0.0
  %3563 = vmatprep.subr.mxu0 0.0
  %3564 = vmatpush1.msra.mxu0 0.0
  %3565 = vmatprep.subr.mxu0 0.0
  %3566 = vmatpush1.msra.mxu0 0.0
  %3567 = vmatprep.subr.mxu0 0.0
  %3568 = vmatpush1.msra.mxu0 0.0
  %3569 = vmatprep.subr.mxu0 0.0
  %3570 = vmatpush1.msra.mxu0 0.0
  %3571 = vmatprep.subr.mxu0 0.0
  %3572 = vmatpush1.msra.mxu0 0.0
  %3573 = vmatprep.subr.mxu0 0.0
  %3574 = vmatpush1.msra.mxu0 0.0
  %3575 = vmatprep.subr.mxu0 0.0
  %3576 = vmatpush1.msra.mxu0 0.0
  %3577 = vmatprep.subr.mxu0 0.0
  %3578 = vmatpush1.msra.mxu0 0.0
  %3579 = vmatprep.subr.mxu0 0.0
  %3580 = vmatpush1.msra.mxu0 0.0
  %3581 = vmatprep.subr.mxu0 0.0
  %3582 = vmatpush1.msra.mxu0 0.0
  %3583 = vmatprep.subr.mxu0 0.0
  %3584 = vmatpush1.msra.mxu0 0.0
  %3585 = vmatprep.subr.mxu0 0.0
  %3586 = vmatpush1.msra.mxu0 0.0
  %3587 = vmatprep.mubr.f32.mxu0 0.0
  %3588 = vmatmul.mubr.f32.gmra.mrb[0].mxu0 %v3518
  %v3589 = vpop.f32.mrb[0].mxu0
  %v3590 = vadd.f32 %v3516, %v3589
  %v3591 = vpop.f32.mrb[0].mxu0
  %3592 = vmatprep.mubr.f32.mxu0 0.0
  %3593 = vmatmul.mubr.f32.gmra.mrb[0].mxu0 %v3521
  %v3594 = vpop.f32.mrb[0].mxu0
  %v3595 = vadd.f32 %v3516, %v3594
  %v3596 = vpop.f32.mrb[0].mxu0
  %3597 = vdwg.mxu0
  %v3598 = vtanh.pop %v3590
  %v3599 = vtanh.pop %v3595
  %v3600 = vadd.f32 %v3505, %v3598
  %v3601 = vadd.f32 %v3510, %v3599
  %3602 = vst [vmem:[%s3] sm:$0xff] %v3600
  %3603 = vst [vmem:[%s3 + $0x8] sm:$0xff] %v3601
  // Predicated region
  $region14: #{forward.1} parent=0 // pred_check
    _
  $region15: #{forward.1} parent=0 // pred_check_branch
    %3605 = sbr.rel (0) target = $region17
  $region16: #{forward.1} parent=0 // pred_region
    _
  $region17: #{forward.1} parent=0 // pred_fallthru
    _
  // Predicated region
  $region18: #{forward.1} parent=0 // pred_check
    _
  $region19: #{forward.1} parent=0 // pred_check_branch
    %3607 = sbr.rel (0) target = $region21
  $region20: #{forward.1} parent=0 // pred_region
    _
  $region21: #{forward.1} parent=0 // pred_fallthru
    _

</llo_original>
